<compile_context>
chip_gen: v5e
topology: v5e:2x2
jax: 0.10.0
libtpu: 0.0.40
codegen_flags: <defaults>
</compile_context>

<pallas_src>
import functools

import jax
import jax.numpy as jnp
from jax.experimental import pallas as pl
from jax.experimental.pallas import tpu as pltpu

# Large-but-finite additive mask value (flash-attention convention); keeps the
# softmax numerically safe even for heavily masked rows, stats stay in f32.
MASK_VALUE = -0.7 * float(jnp.finfo(jnp.float32).max)


# --------------------------------------------------------------------------- tiling helper

def _tile(dim, target, aligns):
    """Largest divisor of `dim` that is <= target, preferring larger alignments
    (256 first for full MXU passes, then 128 lanes / 8 sublanes).  Falls back
    to the full dim (always divides).  Note: awkward dims with no aligned
    divisor fall back to a single full-size block."""
    if dim <= target:
        return dim
    for a in aligns:
        t = (target // a) * a
        while t >= a:
            if dim % t == 0:
                return t
            t -= a
    return dim


# --------------------------------------------------------------------------- dense (tiled matmul + optional activation)

def _dense_kernel(x_ref, w_ref, b_ref, o_ref, acc_ref, *, activation):
    @pl.when(pl.program_id(2) == 0)
    def _init():
        acc_ref[...] = jnp.zeros_like(acc_ref)

    acc_ref[...] += jnp.dot(x_ref[...], w_ref[...],
                            preferred_element_type=jnp.float32)

    @pl.when(pl.program_id(2) == pl.num_programs(2) - 1)
    def _epilogue():
        y = acc_ref[...] + b_ref[...].astype(jnp.float32)
        if activation == "gelu":
            # tanh-approx gelu: EUP slot, avoids erf polynomial in the epilogue.
            y = jax.nn.gelu(y, approximate=True)
        elif activation == "tanh":
            y = jnp.tanh(y)
        o_ref[...] = y.astype(o_ref.dtype)


def dense(x, w, b, activation=None, out_dtype=jnp.bfloat16,
          tm=512, tn=1536, tk=None):
    M, K = x.shape
    N = w.shape[1]
    tm = _tile(M, tm, (256, 8))            # sublane dim of x / out
    tn = _tile(N, tn, (256, 128))          # lane dim of w / out (v7x-safe cap)
    tk = _tile(K, tk if tk is not None else 2048, (256, 128))
    grid = (M // tm, N // tn, K // tk)
    return pl.pallas_call(
        functools.partial(_dense_kernel, activation=activation),
        out_shape=jax.ShapeDtypeStruct((M, N), out_dtype),
        grid=grid,
        in_specs=[
            pl.BlockSpec((tm, tk), lambda i, j, k: (i, k)),
            pl.BlockSpec((tk, tn), lambda i, j, k: (k, j)),
            pl.BlockSpec((1, tn), lambda i, j, k: (0, j)),
        ],
        out_specs=pl.BlockSpec((tm, tn), lambda i, j, k: (i, j)),
        scratch_shapes=[pltpu.VMEM((tm, tn), jnp.float32)],
        compiler_params=pltpu.CompilerParams(
            dimension_semantics=("parallel", "parallel", "arbitrary")),
    )(x, w, b)


# --------------------------------------------------------------------------- dense + residual add + LayerNorm (fused epilogue)

def _dense_add_ln_kernel(x_ref, w_ref, b_ref, r_ref, g_ref, bb_ref, o_ref,
                         acc_ref, *, eps):
    @pl.when(pl.program_id(1) == 0)
    def _init():
        acc_ref[...] = jnp.zeros_like(acc_ref)

    acc_ref[...] += jnp.dot(x_ref[...], w_ref[...],
                            preferred_element_type=jnp.float32)

    @pl.when(pl.program_id(1) == pl.num_programs(1) - 1)
    def _epilogue():
        # bias + residual + LayerNorm, all statistics in f32.
        y = (acc_ref[...] + b_ref[...].astype(jnp.float32)
             + r_ref[...].astype(jnp.float32))
        mu = jnp.mean(y, axis=-1, keepdims=True)
        var = jnp.mean(jnp.square(y - mu), axis=-1, keepdims=True)
        y = (y - mu) * jax.lax.rsqrt(var + eps)
        o_ref[...] = (y * g_ref[...].astype(jnp.float32)
                      + bb_ref[...].astype(jnp.float32)).astype(o_ref.dtype)


def dense_add_layernorm(x, w, b, residual, gamma, beta, eps=1e-12,
                        out_dtype=jnp.bfloat16, tm=512, tk=None):
    # N (= hidden) is kept un-tiled because the LayerNorm needs the full row.
    # Residual / gamma / beta are only read in the k==last epilogue; their
    # index_map is constant in k so they are DMA'd once per row block.
    M, K = x.shape
    N = w.shape[1]
    tm = _tile(M, tm, (256, 8))
    tk = _tile(K, tk if tk is not None else 2048, (256, 128))
    grid = (M // tm, K // tk)
    return pl.pallas_call(
        functools.partial(_dense_add_ln_kernel, eps=eps),
        out_shape=jax.ShapeDtypeStruct((M, N), out_dtype),
        grid=grid,
        in_specs=[
            pl.BlockSpec((tm, tk), lambda i, k: (i, k)),
            pl.BlockSpec((tk, N), lambda i, k: (k, 0)),
            pl.BlockSpec((1, N), lambda i, k: (0, 0)),
            pl.BlockSpec((tm, N), lambda i, k: (i, 0)),
            pl.BlockSpec((1, N), lambda i, k: (0, 0)),
            pl.BlockSpec((1, N), lambda i, k: (0, 0)),
        ],
        out_specs=pl.BlockSpec((tm, N), lambda i, k: (i, 0)),
        scratch_shapes=[pltpu.VMEM((tm, N), jnp.float32)],
        compiler_params=pltpu.CompilerParams(
            dimension_semantics=("parallel", "arbitrary")),
    )(x, w, b, residual, gamma, beta)


# --------------------------------------------------------------------------- LayerNorm only (embeddings), row-tiled

def _ln_kernel(x_ref, g_ref, b_ref, o_ref, *, eps):
    x = x_ref[...].astype(jnp.float32)
    mu = jnp.mean(x, axis=-1, keepdims=True)
    var = jnp.mean(jnp.square(x - mu), axis=-1, keepdims=True)
    y = (x - mu) * jax.lax.rsqrt(var + eps)
    o_ref[...] = (y * g_ref[...].astype(jnp.float32)
                  + b_ref[...].astype(jnp.float32)).astype(o_ref.dtype)


def layernorm(x, gamma, beta, eps=1e-12, out_dtype=jnp.bfloat16, tm=1024):
    M, H = x.shape
    tm = _tile(M, tm, (256, 8))
    return pl.pallas_call(
        functools.partial(_ln_kernel, eps=eps),
        out_shape=jax.ShapeDtypeStruct((M, H), out_dtype),
        grid=(M // tm,),
        in_specs=[
            pl.BlockSpec((tm, H), lambda i: (i, 0)),
            pl.BlockSpec((1, H), lambda i: (0, 0)),
            pl.BlockSpec((1, H), lambda i: (0, 0)),
        ],
        out_specs=pl.BlockSpec((tm, H), lambda i: (i, 0)),
        compiler_params=pltpu.CompilerParams(
            dimension_semantics=("parallel",)),
    )(x, gamma, beta)


# --------------------------------------------------------------------------- attention (lane-dense I/O, heads split in-kernel)

def _attn_kernel(qkv_ref, m_ref, o_ref, *, num_heads, head_dim, scale):
    qkv = qkv_ref[0]                               # [S, 3H] bf16
    mask = m_ref[0].astype(jnp.float32)            # [1, S] additive
    H = num_heads * head_dim

    outs = []
    for h in range(num_heads):                     # static unrolled head loop
        q = qkv[:, h * head_dim:(h + 1) * head_dim] * scale        # [S, dh]
        k = qkv[:, H + h * head_dim:H + (h + 1) * head_dim]        # [S, dh]
        v = qkv[:, 2 * H + h * head_dim:2 * H + (h + 1) * head_dim]

        # scores in f32; one head at a time (no [nh, S, S] tensor).
        s = jnp.einsum("qd,kd->qk", q, k,
                       preferred_element_type=jnp.float32)
        s = s + mask                               # broadcast over query rows
        s = s - jnp.max(s, axis=-1, keepdims=True)
        p = jnp.exp(s)
        denom = jnp.sum(p, axis=-1, keepdims=True)
        ctx = jnp.einsum("qk,kd->qd", p.astype(v.dtype), v,
                         preferred_element_type=jnp.float32)
        # normalize the [S, dh] context instead of the [S, S] probabilities.
        ctx = ctx * pl.reciprocal(denom, approx=True)
        outs.append(ctx.astype(o_ref.dtype))

    # single lane-dense [S, H] store (unmasked vst).
    o_ref[0] = jnp.concatenate(outs, axis=-1)


def attention(qkv, addmask, *, num_heads):
    # qkv: [B, S, 3H] bf16 (direct reshape of the fused QKV dense output)
    # addmask: [B, 1, S] f32 additive mask
    B, S, threeH = qkv.shape
    H = threeH // 3
    dh = H // num_heads
    scale = 1.0 / (dh ** 0.5)
    return pl.pallas_call(
        functools.partial(_attn_kernel, num_heads=num_heads,
                          head_dim=dh, scale=scale),
        out_shape=jax.ShapeDtypeStruct((B, S, H), jnp.bfloat16),
        grid=(B,),
        in_specs=[
            pl.BlockSpec((1, S, threeH), lambda b: (b, 0, 0)),
            pl.BlockSpec((1, 1, S), lambda b: (b, 0, 0)),
        ],
        out_specs=pl.BlockSpec((1, S, H), lambda b: (b, 0, 0)),
        compiler_params=pltpu.CompilerParams(
            dimension_semantics=("parallel",)),
    )(qkv, addmask)


# --------------------------------------------------------------------------- fused pooler + classifier (single tiny kernel)

def _pooler_cls_kernel(x_ref, pw_ref, pb_ref, cw_ref, cb_ref, o_ref):
    pooled = jnp.dot(x_ref[...], pw_ref[...],
                     preferred_element_type=jnp.float32)
    pooled = jnp.tanh(pooled + pb_ref[...].astype(jnp.float32))
    logits = jnp.dot(pooled.astype(cw_ref.dtype), cw_ref[...],
                     preferred_element_type=jnp.float32)
    o_ref[...] = (logits + cb_ref[...].astype(jnp.float32)).astype(o_ref.dtype)


def pooler_classifier(cls_tokens, pool_w, pool_b, cls_w, cls_b):
    B, H = cls_tokens.shape
    C = cls_w.shape[1]
    return pl.pallas_call(
        _pooler_cls_kernel,
        out_shape=jax.ShapeDtypeStruct((B, C), jnp.float32),
        grid=(1,),
        in_specs=[
            pl.BlockSpec((B, H), lambda i: (0, 0)),
            pl.BlockSpec((H, H), lambda i: (0, 0)),
            pl.BlockSpec((1, H), lambda i: (0, 0)),
            pl.BlockSpec((H, C), lambda i: (0, 0)),
            pl.BlockSpec((1, C), lambda i: (0, 0)),
        ],
        out_specs=pl.BlockSpec((B, C), lambda i: (0, 0)),
    )(cls_tokens, pool_w, pool_b, cls_w, cls_b)


# --------------------------------------------------------------------------- params

def init_params(key, *, vocab_size, hidden, num_layers, intermediate,
                num_classes, max_pos=512):
    keys = iter(jax.random.split(key, 8 + 4 * num_layers))

    def nrm(shape, dtype=jnp.bfloat16):
        return (0.02 * jax.random.normal(next(keys), shape, jnp.float32)
                ).astype(dtype)

    params = {
        "word_emb": nrm((vocab_size, hidden), jnp.float32),
        "pos_emb": nrm((max_pos, hidden), jnp.float32),
        "tok_emb": nrm((2, hidden), jnp.float32),
        "emb_ln_g": jnp.ones((1, hidden), jnp.float32),
        "emb_ln_b": jnp.zeros((1, hidden), jnp.float32),
        "layers": [],
        "pool_w": nrm((hidden, hidden)),
        "pool_b": jnp.zeros((1, hidden), jnp.float32),
        "cls_w": nrm((hidden, num_classes)),
        "cls_b": jnp.zeros((1, num_classes), jnp.float32),
    }
    for _ in range(num_layers):
        params["layers"].append({
            # fused Q/K/V projection: [H, 3H]
            "wqkv": nrm((hidden, 3 * hidden)),
            "bqkv": jnp.zeros((1, 3 * hidden), jnp.float32),
            "wo": nrm((hidden, hidden)),
            "bo": jnp.zeros((1, hidden), jnp.float32),
            "ln1_g": jnp.ones((1, hidden), jnp.float32),
            "ln1_b": jnp.zeros((1, hidden), jnp.float32),
            "wi": nrm((hidden, intermediate)),
            "bi": jnp.zeros((1, intermediate), jnp.float32),
            "wf": nrm((intermediate, hidden)),
            "bf": jnp.zeros((1, hidden), jnp.float32),
            "ln2_g": jnp.ones((1, hidden), jnp.float32),
            "ln2_b": jnp.zeros((1, hidden), jnp.float32),
        })
    return params


# --------------------------------------------------------------------------- forward

def kmer_bert_forward(params, input_ids, attention_mask, *, num_heads):
    B, S = input_ids.shape
    H = params["word_emb"].shape[1]

    # BertEmbeddings (token_type_ids default to 0); gather is plain-JAX glue.
    emb = (params["word_emb"][input_ids]
           + params["pos_emb"][:S][None, :, :]
           + params["tok_emb"][0][None, None, :])
    x = layernorm(emb.reshape(B * S, H), params["emb_ln_g"], params["emb_ln_b"])

    # HF extended attention mask: additive, f32, broadcast over heads/rows.
    addmask = ((1.0 - attention_mask.astype(jnp.float32)) * MASK_VALUE
               ).reshape(B, 1, S)

    for layer in params["layers"]:
        h_in = x
        # fused QKV projection; [B*S, 3H] -> [B, S, 3H] is a free reshape
        # (no split / head transpose HBM round trips).
        qkv = dense(h_in, layer["wqkv"], layer["bqkv"])
        ctx = attention(qkv.reshape(B, S, 3 * H), addmask,
                        num_heads=num_heads)
        ctx = ctx.reshape(B * S, H)
        # attention output proj + residual + LayerNorm (fused epilogue)
        x = dense_add_layernorm(ctx, layer["wo"], layer["bo"],
                                h_in, layer["ln1_g"], layer["ln1_b"])
        # FFN
        inter = dense(x, layer["wi"], layer["bi"], activation="gelu")
        x = dense_add_layernorm(inter, layer["wf"], layer["bf"],
                                x, layer["ln2_g"], layer["ln2_b"])

    # BertPooler + classifier head fused into one tiny kernel (M=B, N=classes).
    # TODO(synk): CLS-row gather could be folded into a BlockSpec index_map.
    cls = x.reshape(B, S, H)[:, 0, :]
    logits = pooler_classifier(cls, params["pool_w"], params["pool_b"],
                               params["cls_w"], params["cls_b"])
    return logits


# --------------------------------------------------------------------------- main

if __name__ == "__main__":
    # Small synthetic config (num_attention_heads=12 as in the module; hidden % 12 == 0).
    VOCAB = 32
    HIDDEN = 96
    NUM_LAYERS = 2
    NUM_HEADS = 12
    INTERMEDIATE = 4 * HIDDEN   # BertConfig default is 3072; scaled with hidden here
    NUM_CLASSES = 2
    B, S = 2, 8

    key = jax.random.PRNGKey(0)
    pkey, ikey = jax.random.split(key)
    params = init_params(pkey, vocab_size=VOCAB, hidden=HIDDEN,
                         num_layers=NUM_LAYERS, intermediate=INTERMEDIATE,
                         num_classes=NUM_CLASSES)

    input_ids = jax.random.randint(ikey, (B, S), 0, VOCAB, dtype=jnp.int32)
    attention_mask = jnp.ones((B, S), dtype=jnp.int32)

    fwd = jax.jit(functools.partial(kmer_bert_forward, num_heads=NUM_HEADS))
    logits = fwd(params, input_ids, attention_mask)
    jax.block_until_ready(logits)

    assert logits.shape == (B, NUM_CLASSES)
    assert bool(jnp.all(jnp.isfinite(logits)))
    print("KERNEL_OK")
</pallas_src>

<mosaic_0001>
module attributes {stable_mosaic.version = 11 : i64} {
  func.func @_dense_kernel(%arg0: i32, %arg1: i32, %arg2: i32, %arg3: memref<16x96xbf16, #tpu.memory_space<vmem>>, %arg4: memref<96x288xbf16, #tpu.memory_space<vmem>>, %arg5: memref<1x288xf32, #tpu.memory_space<vmem>>, %arg6: memref<16x288xbf16, #tpu.memory_space<vmem>>, %arg7: memref<16x288xf32, #tpu.memory_space<vmem>>) attributes {dimension_semantics = [#tpu.dimension_semantics<parallel>, #tpu.dimension_semantics<parallel>, #tpu.dimension_semantics<arbitrary>], iteration_bounds = array<i64: 1, 1, 1>, scalar_prefetch = 0 : i64, scratch_operands = 1 : i64, tpu.core_type = #tpu.core_type<tc>, window_params = [{transform_indices = @transform_0, window_bounds = array<i64: 16, 96>}, {transform_indices = @transform_1, window_bounds = array<i64: 96, 288>}, {transform_indices = @transform_2, window_bounds = array<i64: 1, 288>}, {transform_indices = @transform_3, window_bounds = array<i64: 16, 288>}]} {
    %c0_i32 = arith.constant 0 : i32
    %0 = arith.cmpi eq, %arg2, %c0_i32 : i32
    %1 = arith.extui %0 : i1 to i32
    %c0_i32_0 = arith.constant 0 : i32
    %2 = arith.cmpi ne, %1, %c0_i32_0 : i32
    scf.if %2 {
      %cst_10 = arith.constant 0.000000e+00 : f32
      %12 = vector.broadcast %cst_10 : f32 to vector<16x288xf32>
      %c0_11 = arith.constant 0 : index
      %c0_12 = arith.constant 0 : index
      %13 = vector.load %arg7[%c0_11, %c0_12] : memref<16x288xf32, #tpu.memory_space<vmem>>, vector<16x288xf32>
      tpu.vector_store %arg7[%c0_11, %c0_12], %12 {strides = array<i32>} : memref<16x288xf32, #tpu.memory_space<vmem>>, vector<16x288xf32>,
    } else {
    }
    %c0 = arith.constant 0 : index
    %c0_1 = arith.constant 0 : index
    %3 = vector.load %arg7[%c0, %c0_1] : memref<16x288xf32, #tpu.memory_space<vmem>>, vector<16x288xf32>
    %c0_2 = arith.constant 0 : index
    %c0_3 = arith.constant 0 : index
    %4 = vector.load %arg3[%c0_2, %c0_3] : memref<16x96xbf16, #tpu.memory_space<vmem>>, vector<16x96xbf16>
    %c0_4 = arith.constant 0 : index
    %c0_5 = arith.constant 0 : index
    %5 = vector.load %arg4[%c0_4, %c0_5] : memref<96x288xbf16, #tpu.memory_space<vmem>>, vector<96x288xbf16>
    %cst = arith.constant dense<0.000000e+00> : vector<16x288xf32>
    %6 = tpu.matmul %4, %5, %cst {dimension_numbers = #tpu.dot_dimension_numbers<[1], [0], [0], [1], [0, 0, 1, 1], [], []>} : vector<16x96xbf16>, vector<96x288xbf16>, vector<16x288xf32> -> vector<16x288xf32>
    %7 = arith.addf %3, %6 : vector<16x288xf32>
    %c0_6 = arith.constant 0 : index
    %c0_7 = arith.constant 0 : index
    %8 = vector.load %arg7[%c0_6, %c0_7] : memref<16x288xf32, #tpu.memory_space<vmem>>, vector<16x288xf32>
    tpu.vector_store %arg7[%c0_6, %c0_7], %7 {strides = array<i32>} : memref<16x288xf32, #tpu.memory_space<vmem>>, vector<16x288xf32>,
    %c0_i32_8 = arith.constant 0 : i32
    %9 = arith.cmpi eq, %arg2, %c0_i32_8 : i32
    %10 = arith.extui %9 : i1 to i32
    %c0_i32_9 = arith.constant 0 : i32
    %11 = arith.cmpi ne, %10, %c0_i32_9 : i32
    scf.if %11 {
      %c0_10 = arith.constant 0 : index
      %c0_11 = arith.constant 0 : index
      %12 = vector.load %arg7[%c0_10, %c0_11] : memref<16x288xf32, #tpu.memory_space<vmem>>, vector<16x288xf32>
      %c0_12 = arith.constant 0 : index
      %c0_13 = arith.constant 0 : index
      %13 = vector.load %arg5[%c0_12, %c0_13] : memref<1x288xf32, #tpu.memory_space<vmem>>, vector<1x288xf32>
      %14 = vector.broadcast %13 : vector<1x288xf32> to vector<16x288xf32>
      %15 = arith.addf %12, %14 : vector<16x288xf32>
      %16 = arith.truncf %15 : vector<16x288xf32> to vector<16x288xbf16>
      %c0_14 = arith.constant 0 : index
      %c0_15 = arith.constant 0 : index
      %17 = vector.load %arg6[%c0_14, %c0_15] : memref<16x288xbf16, #tpu.memory_space<vmem>>, vector<16x288xbf16>
      tpu.vector_store %arg6[%c0_14, %c0_15], %16 {strides = array<i32>} : memref<16x288xbf16, #tpu.memory_space<vmem>>, vector<16x288xbf16>,
    } else {
    }
    return
  }
  func.func @transform_0(%arg0: i32, %arg1: i32, %arg2: i32) -> (i32, i32) {
    %c0_i32 = arith.constant 0 : i32
    return %arg0, %arg2 : i32, i32
  }
  func.func @transform_1(%arg0: i32, %arg1: i32, %arg2: i32) -> (i32, i32) {
    %c0_i32 = arith.constant 0 : i32
    return %arg2, %arg1 : i32, i32
  }
  func.func @transform_2(%arg0: i32, %arg1: i32, %arg2: i32) -> (i32, i32) {
    %c0_i32 = arith.constant 0 : i32
    %c0_i32_0 = arith.constant 0 : i32
    return %c0_i32, %arg1 : i32, i32
  }
  func.func @transform_3(%arg0: i32, %arg1: i32, %arg2: i32) -> (i32, i32) {
    %c0_i32 = arith.constant 0 : i32
    return %arg0, %arg1 : i32, i32
  }
}

module attributes {stable_mosaic.version = 11 : i64} {
  func.func @_ln_kernel(%arg0: i32, %arg1: memref<16x96xf32, #tpu.memory_space<vmem>>, %arg2: memref<1x96xf32, #tpu.memory_space<vmem>>, %arg3: memref<1x96xf32, #tpu.memory_space<vmem>>, %arg4: memref<16x96xbf16, #tpu.memory_space<vmem>>) attributes {dimension_semantics = [#tpu.dimension_semantics<parallel>], iteration_bounds = array<i64: 1>, scalar_prefetch = 0 : i64, scratch_operands = 0 : i64, tpu.core_type = #tpu.core_type<tc>, window_params = [{transform_indices = @transform_0, window_bounds = array<i64: 16, 96>}, {pipeline_mode = #tpu.pipeline_mode<synchronous>, transform_indices = @transform_1, window_bounds = array<i64: 1, 96>}, {pipeline_mode = #tpu.pipeline_mode<synchronous>, transform_indices = @transform_2, window_bounds = array<i64: 1, 96>}, {transform_indices = @transform_3, window_bounds = array<i64: 16, 96>}]} {
    %c0 = arith.constant 0 : index
    %c0_0 = arith.constant 0 : index
    %0 = vector.load %arg1[%c0, %c0_0] : memref<16x96xf32, #tpu.memory_space<vmem>>, vector<16x96xf32>
    %cst = arith.constant dense<0.000000e+00> : vector<16xf32>
    %1 = vector.multi_reduction <add>, %0, %cst [1] : vector<16x96xf32> to vector<16xf32>
    %2 = vector.shape_cast %1 : vector<16xf32> to vector<16x1xf32>
    %cst_1 = arith.constant 9.600000e+01 : f32
    %3 = vector.broadcast %cst_1 : f32 to vector<16x1xf32>
    %4 = arith.divf %2, %3 : vector<16x1xf32>
    %5 = vector.broadcast %4 : vector<16x1xf32> to vector<16x96xf32>
    %6 = arith.subf %0, %5 : vector<16x96xf32>
    %7 = arith.mulf %6, %6 : vector<16x96xf32>
    %cst_2 = arith.constant dense<0.000000e+00> : vector<16xf32>
    %8 = vector.multi_reduction <add>, %7, %cst_2 [1] : vector<16x96xf32> to vector<16xf32>
    %9 = vector.shape_cast %8 : vector<16xf32> to vector<16x1xf32>
    %cst_3 = arith.constant 9.600000e+01 : f32
    %10 = vector.broadcast %cst_3 : f32 to vector<16x1xf32>
    %11 = arith.divf %9, %10 : vector<16x1xf32>
    %12 = vector.broadcast %4 : vector<16x1xf32> to vector<16x96xf32>
    %13 = arith.subf %0, %12 : vector<16x96xf32>
    %cst_4 = arith.constant 9.99999996E-13 : f32
    %14 = vector.broadcast %cst_4 : f32 to vector<16x1xf32>
    %15 = arith.addf %11, %14 : vector<16x1xf32>
    %16 = math.rsqrt %15 : vector<16x1xf32>
    %17 = vector.broadcast %16 : vector<16x1xf32> to vector<16x96xf32>
    %18 = arith.mulf %13, %17 : vector<16x96xf32>
    %c0_5 = arith.constant 0 : index
    %c0_6 = arith.constant 0 : index
    %19 = vector.load %arg2[%c0_5, %c0_6] : memref<1x96xf32, #tpu.memory_space<vmem>>, vector<1x96xf32>
    %20 = vector.broadcast %19 : vector<1x96xf32> to vector<16x96xf32>
    %21 = arith.mulf %18, %20 : vector<16x96xf32>
    %c0_7 = arith.constant 0 : index
    %c0_8 = arith.constant 0 : index
    %22 = vector.load %arg3[%c0_7, %c0_8] : memref<1x96xf32, #tpu.memory_space<vmem>>, vector<1x96xf32>
    %23 = vector.broadcast %22 : vector<1x96xf32> to vector<16x96xf32>
    %24 = arith.addf %21, %23 : vector<16x96xf32>
    %25 = arith.truncf %24 : vector<16x96xf32> to vector<16x96xbf16>
    %c0_9 = arith.constant 0 : index
    %c0_10 = arith.constant 0 : index
    %26 = vector.load %arg4[%c0_9, %c0_10] : memref<16x96xbf16, #tpu.memory_space<vmem>>, vector<16x96xbf16>
    tpu.vector_store %arg4[%c0_9, %c0_10], %25 {strides = array<i32>} : memref<16x96xbf16, #tpu.memory_space<vmem>>, vector<16x96xbf16>,
    return
  }
  func.func @transform_0(%arg0: i32) -> (i32, i32) {
    %c0_i32 = arith.constant 0 : i32
    %c0_i32_0 = arith.constant 0 : i32
    return %arg0, %c0_i32 : i32, i32
  }
  func.func @transform_1(%arg0: i32) -> (i32, i32) {
    %c0_i32 = arith.constant 0 : i32
    %c0_i32_0 = arith.constant 0 : i32
    %c0_i32_1 = arith.constant 0 : i32
    return %c0_i32, %c0_i32_0 : i32, i32
  }
  func.func @transform_2(%arg0: i32) -> (i32, i32) {
    %c0_i32 = arith.constant 0 : i32
    %c0_i32_0 = arith.constant 0 : i32
    %c0_i32_1 = arith.constant 0 : i32
    return %c0_i32, %c0_i32_0 : i32, i32
  }
  func.func @transform_3(%arg0: i32) -> (i32, i32) {
    %c0_i32 = arith.constant 0 : i32
    %c0_i32_0 = arith.constant 0 : i32
    return %arg0, %c0_i32 : i32, i32
  }
}

module attributes {stable_mosaic.version = 11 : i64} {
  func.func @_dense_add_ln_kernel(%arg0: i32, %arg1: i32, %arg2: memref<16x96xbf16, #tpu.memory_space<vmem>>, %arg3: memref<96x96xbf16, #tpu.memory_space<vmem>>, %arg4: memref<1x96xf32, #tpu.memory_space<vmem>>, %arg5: memref<16x96xbf16, #tpu.memory_space<vmem>>, %arg6: memref<1x96xf32, #tpu.memory_space<vmem>>, %arg7: memref<1x96xf32, #tpu.memory_space<vmem>>, %arg8: memref<16x96xbf16, #tpu.memory_space<vmem>>, %arg9: memref<16x96xf32, #tpu.memory_space<vmem>>) attributes {dimension_semantics = [#tpu.dimension_semantics<parallel>, #tpu.dimension_semantics<arbitrary>], iteration_bounds = array<i64: 1, 1>, scalar_prefetch = 0 : i64, scratch_operands = 1 : i64, tpu.core_type = #tpu.core_type<tc>, window_params = [{transform_indices = @transform_0, window_bounds = array<i64: 16, 96>}, {transform_indices = @transform_1, window_bounds = array<i64: 96, 96>}, {pipeline_mode = #tpu.pipeline_mode<synchronous>, transform_indices = @transform_2, window_bounds = array<i64: 1, 96>}, {transform_indices = @transform_3, window_bounds = array<i64: 16, 96>}, {pipeline_mode = #tpu.pipeline_mode<synchronous>, transform_indices = @transform_4, window_bounds = array<i64: 1, 96>}, {pipeline_mode = #tpu.pipeline_mode<synchronous>, transform_indices = @transform_5, window_bounds = array<i64: 1, 96>}, {transform_indices = @transform_6, window_bounds = array<i64: 16, 96>}]} {
    %c0_i32 = arith.constant 0 : i32
    %0 = arith.cmpi eq, %arg1, %c0_i32 : i32
    %1 = arith.extui %0 : i1 to i32
    %c0_i32_0 = arith.constant 0 : i32
    %2 = arith.cmpi ne, %1, %c0_i32_0 : i32
    scf.if %2 {
      %cst_10 = arith.constant 0.000000e+00 : f32
      %12 = vector.broadcast %cst_10 : f32 to vector<16x96xf32>
      %c0_11 = arith.constant 0 : index
      %c0_12 = arith.constant 0 : index
      %13 = vector.load %arg9[%c0_11, %c0_12] : memref<16x96xf32, #tpu.memory_space<vmem>>, vector<16x96xf32>
      tpu.vector_store %arg9[%c0_11, %c0_12], %12 {strides = array<i32>} : memref<16x96xf32, #tpu.memory_space<vmem>>, vector<16x96xf32>,
    } else {
    }
    %c0 = arith.constant 0 : index
    %c0_1 = arith.constant 0 : index
    %3 = vector.load %arg9[%c0, %c0_1] : memref<16x96xf32, #tpu.memory_space<vmem>>, vector<16x96xf32>
    %c0_2 = arith.constant 0 : index
    %c0_3 = arith.constant 0 : index
    %4 = vector.load %arg2[%c0_2, %c0_3] : memref<16x96xbf16, #tpu.memory_space<vmem>>, vector<16x96xbf16>
    %c0_4 = arith.constant 0 : index
    %c0_5 = arith.constant 0 : index
    %5 = vector.load %arg3[%c0_4, %c0_5] : memref<96x96xbf16, #tpu.memory_space<vmem>>, vector<96x96xbf16>
    %cst = arith.constant dense<0.000000e+00> : vector<16x96xf32>
    %6 = tpu.matmul %4, %5, %cst {dimension_numbers = #tpu.dot_dimension_numbers<[1], [0], [0], [1], [0, 0, 1, 1], [], []>} : vector<16x96xbf16>, vector<96x96xbf16>, vector<16x96xf32> -> vector<16x96xf32>
    %7 = arith.addf %3, %6 : vector<16x96xf32>
    %c0_6 = arith.constant 0 : index
    %c0_7 = arith.constant 0 : index
    %8 = vector.load %arg9[%c0_6, %c0_7] : memref<16x96xf32, #tpu.memory_space<vmem>>, vector<16x96xf32>
    tpu.vector_store %arg9[%c0_6, %c0_7], %7 {strides = array<i32>} : memref<16x96xf32, #tpu.memory_space<vmem>>, vector<16x96xf32>,
    %c0_i32_8 = arith.constant 0 : i32
    %9 = arith.cmpi eq, %arg1, %c0_i32_8 : i32
    %10 = arith.extui %9 : i1 to i32
    %c0_i32_9 = arith.constant 0 : i32
    %11 = arith.cmpi ne, %10, %c0_i32_9 : i32
    scf.if %11 {
      %c0_10 = arith.constant 0 : index
      %c0_11 = arith.constant 0 : index
      %12 = vector.load %arg9[%c0_10, %c0_11] : memref<16x96xf32, #tpu.memory_space<vmem>>, vector<16x96xf32>
      %c0_12 = arith.constant 0 : index
      %c0_13 = arith.constant 0 : index
      %13 = vector.load %arg4[%c0_12, %c0_13] : memref<1x96xf32, #tpu.memory_space<vmem>>, vector<1x96xf32>
      %14 = vector.broadcast %13 : vector<1x96xf32> to vector<16x96xf32>
      %15 = arith.addf %12, %14 : vector<16x96xf32>
      %c0_14 = arith.constant 0 : index
      %c0_15 = arith.constant 0 : index
      %16 = vector.load %arg5[%c0_14, %c0_15] : memref<16x96xbf16, #tpu.memory_space<vmem>>, vector<16x96xbf16>
      %17 = arith.extf %16 : vector<16x96xbf16> to vector<16x96xf32>
      %18 = arith.addf %15, %17 : vector<16x96xf32>
      %cst_16 = arith.constant dense<0.000000e+00> : vector<16xf32>
      %19 = vector.multi_reduction <add>, %18, %cst_16 [1] : vector<16x96xf32> to vector<16xf32>
      %20 = vector.shape_cast %19 : vector<16xf32> to vector<16x1xf32>
      %cst_17 = arith.constant 9.600000e+01 : f32
      %21 = vector.broadcast %cst_17 : f32 to vector<16x1xf32>
      %22 = arith.divf %20, %21 : vector<16x1xf32>
      %23 = vector.broadcast %22 : vector<16x1xf32> to vector<16x96xf32>
      %24 = arith.subf %18, %23 : vector<16x96xf32>
      %25 = arith.mulf %24, %24 : vector<16x96xf32>
      %cst_18 = arith.constant dense<0.000000e+00> : vector<16xf32>
      %26 = vector.multi_reduction <add>, %25, %cst_18 [1] : vector<16x96xf32> to vector<16xf32>
      %27 = vector.shape_cast %26 : vector<16xf32> to vector<16x1xf32>
      %cst_19 = arith.constant 9.600000e+01 : f32
      %28 = vector.broadcast %cst_19 : f32 to vector<16x1xf32>
      %29 = arith.divf %27, %28 : vector<16x1xf32>
      %30 = vector.broadcast %22 : vector<16x1xf32> to vector<16x96xf32>
      %31 = arith.subf %18, %30 : vector<16x96xf32>
      %cst_20 = arith.constant 9.99999996E-13 : f32
      %32 = vector.broadcast %cst_20 : f32 to vector<16x1xf32>
      %33 = arith.addf %29, %32 : vector<16x1xf32>
      %34 = math.rsqrt %33 : vector<16x1xf32>
      %35 = vector.broadcast %34 : vector<16x1xf32> to vector<16x96xf32>
      %36 = arith.mulf %31, %35 : vector<16x96xf32>
      %c0_21 = arith.constant 0 : index
      %c0_22 = arith.constant 0 : index
      %37 = vector.load %arg6[%c0_21, %c0_22] : memref<1x96xf32, #tpu.memory_space<vmem>>, vector<1x96xf32>
      %38 = vector.broadcast %37 : vector<1x96xf32> to vector<16x96xf32>
      %39 = arith.mulf %36, %38 : vector<16x96xf32>
      %c0_23 = arith.constant 0 : index
      %c0_24 = arith.constant 0 : index
      %40 = vector.load %arg7[%c0_23, %c0_24] : memref<1x96xf32, #tpu.memory_space<vmem>>, vector<1x96xf32>
      %41 = vector.broadcast %40 : vector<1x96xf32> to vector<16x96xf32>
      %42 = arith.addf %39, %41 : vector<16x96xf32>
      %43 = arith.truncf %42 : vector<16x96xf32> to vector<16x96xbf16>
      %c0_25 = arith.constant 0 : index
      %c0_26 = arith.constant 0 : index
      %44 = vector.load %arg8[%c0_25, %c0_26] : memref<16x96xbf16, #tpu.memory_space<vmem>>, vector<16x96xbf16>
      tpu.vector_store %arg8[%c0_25, %c0_26], %43 {strides = array<i32>} : memref<16x96xbf16, #tpu.memory_space<vmem>>, vector<16x96xbf16>,
    } else {
    }
    return
  }
  func.func @transform_0(%arg0: i32, %arg1: i32) -> (i32, i32) {
    %c0_i32 = arith.constant 0 : i32
    return %arg0, %arg1 : i32, i32
  }
  func.func @transform_1(%arg0: i32, %arg1: i32) -> (i32, i32) {
    %c0_i32 = arith.constant 0 : i32
    %c0_i32_0 = arith.constant 0 : i32
    return %arg1, %c0_i32 : i32, i32
  }
  func.func @transform_2(%arg0: i32, %arg1: i32) -> (i32, i32) {
    %c0_i32 = arith.constant 0 : i32
    %c0_i32_0 = arith.constant 0 : i32
    %c0_i32_1 = arith.constant 0 : i32
    return %c0_i32, %c0_i32_0 : i32, i32
  }
  func.func @transform_3(%arg0: i32, %arg1: i32) -> (i32, i32) {
    %c0_i32 = arith.constant 0 : i32
    %c0_i32_0 = arith.constant 0 : i32
    return %arg0, %c0_i32 : i32, i32
  }
  func.func @transform_4(%arg0: i32, %arg1: i32) -> (i32, i32) {
    %c0_i32 = arith.constant 0 : i32
    %c0_i32_0 = arith.constant 0 : i32
    %c0_i32_1 = arith.constant 0 : i32
    return %c0_i32, %c0_i32_0 : i32, i32
  }
  func.func @transform_5(%arg0: i32, %arg1: i32) -> (i32, i32) {
    %c0_i32 = arith.constant 0 : i32
    %c0_i32_0 = arith.constant 0 : i32
    %c0_i32_1 = arith.constant 0 : i32
    return %c0_i32, %c0_i32_0 : i32, i32
  }
  func.func @transform_6(%arg0: i32, %arg1: i32) -> (i32, i32) {
    %c0_i32 = arith.constant 0 : i32
    %c0_i32_0 = arith.constant 0 : i32
    return %arg0, %c0_i32 : i32, i32
  }
}

module attributes {stable_mosaic.version = 11 : i64} {
  func.func @_attn_kernel(%arg0: i32, %arg1: memref<1x8x288xbf16, #tpu.memory_space<vmem>>, %arg2: memref<1x1x8xf32, #tpu.memory_space<vmem>>, %arg3: memref<1x8x96xbf16, #tpu.memory_space<vmem>>) attributes {dimension_semantics = [#tpu.dimension_semantics<parallel>], iteration_bounds = array<i64: 2>, scalar_prefetch = 0 : i64, scratch_operands = 0 : i64, tpu.core_type = #tpu.core_type<tc>, window_params = [{transform_indices = @transform_0, window_bounds = array<i64: 1, 8, 288>}, {transform_indices = @transform_1, window_bounds = array<i64: 1, 1, 8>}, {transform_indices = @transform_2, window_bounds = array<i64: 1, 8, 96>}]} {
    %c0 = arith.constant 0 : index
    %c0_0 = arith.constant 0 : index
    %c0_1 = arith.constant 0 : index
    %0 = vector.load %arg1[%c0, %c0_0, %c0_1] : memref<1x8x288xbf16, #tpu.memory_space<vmem>>, vector<1x8x288xbf16>
    %1 = vector.shape_cast %0 : vector<1x8x288xbf16> to vector<8x288xbf16>
    %c0_2 = arith.constant 0 : index
    %c0_3 = arith.constant 0 : index
    %c0_4 = arith.constant 0 : index
    %2 = vector.load %arg2[%c0_2, %c0_3, %c0_4] : memref<1x1x8xf32, #tpu.memory_space<vmem>>, vector<1x1x8xf32>
    %3 = vector.shape_cast %2 : vector<1x1x8xf32> to vector<1x8xf32>
    %4 = vector.extract_strided_slice %1 {offsets = [0, 0], sizes = [8, 8], strides = [1, 1]} : vector<8x288xbf16> to vector<8x8xbf16>
    %cst = arith.constant 3.535160e-01 : bf16
    %5 = vector.broadcast %cst : bf16 to vector<8x8xbf16>
    %6 = arith.mulf %4, %5 : vector<8x8xbf16>
    %7 = vector.extract_strided_slice %1 {offsets = [0, 96], sizes = [8, 8], strides = [1, 1]} : vector<8x288xbf16> to vector<8x8xbf16>
    %8 = vector.extract_strided_slice %1 {offsets = [0, 192], sizes = [8, 8], strides = [1, 1]} : vector<8x288xbf16> to vector<8x8xbf16>
    "tpu.trace_start"() <{level = 10 : i32, message = "qd,kd->qk"}> : () -> ()
    %cst_5 = arith.constant dense<0.000000e+00> : vector<8x8xf32>
    %9 = tpu.matmul %6, %7, %cst_5 {dimension_numbers = #tpu.dot_dimension_numbers<[1], [1], [0], [0], [0, 0, 1, 0], [], []>} : vector<8x8xbf16>, vector<8x8xbf16>, vector<8x8xf32> -> vector<8x8xf32>
    "tpu.trace_stop"() : () -> ()
    %10 = vector.broadcast %3 : vector<1x8xf32> to vector<8x8xf32>
    %11 = arith.addf %9, %10 : vector<8x8xf32>
    %cst_6 = arith.constant dense<0xFF800000> : vector<8xf32>
    %12 = vector.multi_reduction <maximumf>, %11, %cst_6 [1] : vector<8x8xf32> to vector<8xf32>
    %13 = vector.shape_cast %12 : vector<8xf32> to vector<8x1xf32>
    %14 = vector.broadcast %13 : vector<8x1xf32> to vector<8x8xf32>
    %15 = arith.subf %11, %14 : vector<8x8xf32>
    %16 = math.exp %15 : vector<8x8xf32>
    %cst_7 = arith.constant dense<0.000000e+00> : vector<8xf32>
    %17 = vector.multi_reduction <add>, %16, %cst_7 [1] : vector<8x8xf32> to vector<8xf32>
    %18 = vector.shape_cast %17 : vector<8xf32> to vector<8x1xf32>
    %19 = arith.truncf %16 : vector<8x8xf32> to vector<8x8xbf16>
    "tpu.trace_start"() <{level = 10 : i32, message = "qk,kd->qd"}> : () -> ()
    %cst_8 = arith.constant dense<0.000000e+00> : vector<8x8xf32>
    %20 = tpu.matmul %19, %8, %cst_8 {dimension_numbers = #tpu.dot_dimension_numbers<[1], [0], [0], [1], [0, 0, 1, 1], [], []>} : vector<8x8xbf16>, vector<8x8xbf16>, vector<8x8xf32> -> vector<8x8xf32>
    "tpu.trace_stop"() : () -> ()
    %21 = tpu.reciprocal %18 {approx = true} : vector<8x1xf32> -> vector<8x1xf32>
    %22 = vector.broadcast %21 : vector<8x1xf32> to vector<8x8xf32>
    %23 = arith.mulf %20, %22 : vector<8x8xf32>
    %24 = arith.truncf %23 : vector<8x8xf32> to vector<8x8xbf16>
    %25 = vector.extract_strided_slice %1 {offsets = [0, 8], sizes = [8, 8], strides = [1, 1]} : vector<8x288xbf16> to vector<8x8xbf16>
    %cst_9 = arith.constant 3.535160e-01 : bf16
    %26 = vector.broadcast %cst_9 : bf16 to vector<8x8xbf16>
    %27 = arith.mulf %25, %26 : vector<8x8xbf16>
    %28 = vector.extract_strided_slice %1 {offsets = [0, 104], sizes = [8, 8], strides = [1, 1]} : vector<8x288xbf16> to vector<8x8xbf16>
    %29 = vector.extract_strided_slice %1 {offsets = [0, 200], sizes = [8, 8], strides = [1, 1]} : vector<8x288xbf16> to vector<8x8xbf16>
    "tpu.trace_start"() <{level = 10 : i32, message = "qd,kd->qk"}> : () -> ()
    %cst_10 = arith.constant dense<0.000000e+00> : vector<8x8xf32>
    %30 = tpu.matmul %27, %28, %cst_10 {dimension_numbers = #tpu.dot_dimension_numbers<[1], [1], [0], [0], [0, 0, 1, 0], [], []>} : vector<8x8xbf16>, vector<8x8xbf16>, vector<8x8xf32> -> vector<8x8xf32>
    "tpu.trace_stop"() : () -> ()
    %31 = vector.broadcast %3 : vector<1x8xf32> to vector<8x8xf32>
    %32 = arith.addf %30, %31 : vector<8x8xf32>
    %cst_11 = arith.constant dense<0xFF800000> : vector<8xf32>
    %33 = vector.multi_reduction <maximumf>, %32, %cst_11 [1] : vector<8x8xf32> to vector<8xf32>
    %34 = vector.shape_cast %33 : vector<8xf32> to vector<8x1xf32>
    %35 = vector.broadcast %34 : vector<8x1xf32> to vector<8x8xf32>
    %36 = arith.subf %32, %35 : vector<8x8xf32>
    %37 = math.exp %36 : vector<8x8xf32>
    %cst_12 = arith.constant dense<0.000000e+00> : vector<8xf32>
    %38 = vector.multi_reduction <add>, %37, %cst_12 [1] : vector<8x8xf32> to vector<8xf32>
    %39 = vector.shape_cast %38 : vector<8xf32> to vector<8x1xf32>
    %40 = arith.truncf %37 : vector<8x8xf32> to vector<8x8xbf16>
    "tpu.trace_start"() <{level = 10 : i32, message = "qk,kd->qd"}> : () -> ()
    %cst_13 = arith.constant dense<0.000000e+00> : vector<8x8xf32>
    %41 = tpu.matmul %40, %29, %cst_13 {dimension_numbers = #tpu.dot_dimension_numbers<[1], [0], [0], [1], [0, 0, 1, 1], [], []>} : vector<8x8xbf16>, vector<8x8xbf16>, vector<8x8xf32> -> vector<8x8xf32>
    "tpu.trace_stop"() : () -> ()
    %42 = tpu.reciprocal %39 {approx = true} : vector<8x1xf32> -> vector<8x1xf32>
    %43 = vector.broadcast %42 : vector<8x1xf32> to vector<8x8xf32>
    %44 = arith.mulf %41, %43 : vector<8x8xf32>
    %45 = arith.truncf %44 : vector<8x8xf32> to vector<8x8xbf16>
    %46 = vector.extract_strided_slice %1 {offsets = [0, 16], sizes = [8, 8], strides = [1, 1]} : vector<8x288xbf16> to vector<8x8xbf16>
    %cst_14 = arith.constant 3.535160e-01 : bf16
    %47 = vector.broadcast %cst_14 : bf16 to vector<8x8xbf16>
    %48 = arith.mulf %46, %47 : vector<8x8xbf16>
    %49 = vector.extract_strided_slice %1 {offsets = [0, 112], sizes = [8, 8], strides = [1, 1]} : vector<8x288xbf16> to vector<8x8xbf16>
    %50 = vector.extract_strided_slice %1 {offsets = [0, 208], sizes = [8, 8], strides = [1, 1]} : vector<8x288xbf16> to vector<8x8xbf16>
    "tpu.trace_start"() <{level = 10 : i32, message = "qd,kd->qk"}> : () -> ()
    %cst_15 = arith.constant dense<0.000000e+00> : vector<8x8xf32>
    %51 = tpu.matmul %48, %49, %cst_15 {dimension_numbers = #tpu.dot_dimension_numbers<[1], [1], [0], [0], [0, 0, 1, 0], [], []>} : vector<8x8xbf16>, vector<8x8xbf16>, vector<8x8xf32> -> vector<8x8xf32>
    "tpu.trace_stop"() : () -> ()
    %52 = vector.broadcast %3 : vector<1x8xf32> to vector<8x8xf32>
    %53 = arith.addf %51, %52 : vector<8x8xf32>
    %cst_16 = arith.constant dense<0xFF800000> : vector<8xf32>
    %54 = vector.multi_reduction <maximumf>, %53, %cst_16 [1] : vector<8x8xf32> to vector<8xf32>
    %55 = vector.shape_cast %54 : vector<8xf32> to vector<8x1xf32>
    %56 = vector.broadcast %55 : vector<8x1xf32> to vector<8x8xf32>
    %57 = arith.subf %53, %56 : vector<8x8xf32>
    %58 = math.exp %57 : vector<8x8xf32>
    %cst_17 = arith.constant dense<0.000000e+00> : vector<8xf32>
    %59 = vector.multi_reduction <add>, %58, %cst_17 [1] : vector<8x8xf32> to vector<8xf32>
    %60 = vector.shape_cast %59 : vector<8xf32> to vector<8x1xf32>
    %61 = arith.truncf %58 : vector<8x8xf32> to vector<8x8xbf16>
    "tpu.trace_start"() <{level = 10 : i32, message = "qk,kd->qd"}> : () -> ()
    %cst_18 = arith.constant dense<0.000000e+00> : vector<8x8xf32>
    %62 = tpu.matmul %61, %50, %cst_18 {dimension_numbers = #tpu.dot_dimension_numbers<[1], [0], [0], [1], [0, 0, 1, 1], [], []>} : vector<8x8xbf16>, vector<8x8xbf16>, vector<8x8xf32> -> vector<8x8xf32>
    "tpu.trace_stop"() : () -> ()
    %63 = tpu.reciprocal %60 {approx = true} : vector<8x1xf32> -> vector<8x1xf32>
    %64 = vector.broadcast %63 : vector<8x1xf32> to vector<8x8xf32>
    %65 = arith.mulf %62, %64 : vector<8x8xf32>
    %66 = arith.truncf %65 : vector<8x8xf32> to vector<8x8xbf16>
    %67 = vector.extract_strided_slice %1 {offsets = [0, 24], sizes = [8, 8], strides = [1, 1]} : vector<8x288xbf16> to vector<8x8xbf16>
    %cst_19 = arith.constant 3.535160e-01 : bf16
    %68 = vector.broadcast %cst_19 : bf16 to vector<8x8xbf16>
    %69 = arith.mulf %67, %68 : vector<8x8xbf16>
    %70 = vector.extract_strided_slice %1 {offsets = [0, 120], sizes = [8, 8], strides = [1, 1]} : vector<8x288xbf16> to vector<8x8xbf16>
    %71 = vector.extract_strided_slice %1 {offsets = [0, 216], sizes = [8, 8], strides = [1, 1]} : vector<8x288xbf16> to vector<8x8xbf16>
    "tpu.trace_start"() <{level = 10 : i32, message = "qd,kd->qk"}> : () -> ()
    %cst_20 = arith.constant dense<0.000000e+00> : vector<8x8xf32>
    %72 = tpu.matmul %69, %70, %cst_20 {dimension_numbers = #tpu.dot_dimension_numbers<[1], [1], [0], [0], [0, 0, 1, 0], [], []>} : vector<8x8xbf16>, vector<8x8xbf16>, vector<8x8xf32> -> vector<8x8xf32>
    "tpu.trace_stop"() : () -> ()
    %73 = vector.broadcast %3 : vector<1x8xf32> to vector<8x8xf32>
    %74 = arith.addf %72, %73 : vector<8x8xf32>
    %cst_21 = arith.constant dense<0xFF800000> : vector<8xf32>
    %75 = vector.multi_reduction <maximumf>, %74, %cst_21 [1] : vector<8x8xf32> to vector<8xf32>
    %76 = vector.shape_cast %75 : vector<8xf32> to vector<8x1xf32>
    %77 = vector.broadcast %76 : vector<8x1xf32> to vector<8x8xf32>
    %78 = arith.subf %74, %77 : vector<8x8xf32>
    %79 = math.exp %78 : vector<8x8xf32>
    %cst_22 = arith.constant dense<0.000000e+00> : vector<8xf32>
    %80 = vector.multi_reduction <add>, %79, %cst_22 [1] : vector<8x8xf32> to vector<8xf32>
    %81 = vector.shape_cast %80 : vector<8xf32> to vector<8x1xf32>
    %82 = arith.truncf %79 : vector<8x8xf32> to vector<8x8xbf16>
    "tpu.trace_start"() <{level = 10 : i32, message = "qk,kd->qd"}> : () -> ()
    %cst_23 = arith.constant dense<0.000000e+00> : vector<8x8xf32>
    %83 = tpu.matmul %82, %71, %cst_23 {dimension_numbers = #tpu.dot_dimension_numbers<[1], [0], [0], [1], [0, 0, 1, 1], [], []>} : vector<8x8xbf16>, vector<8x8xbf16>, vector<8x8xf32> -> vector<8x8xf32>
    "tpu.trace_stop"() : () -> ()
    %84 = tpu.reciprocal %81 {approx = true} : vector<8x1xf32> -> vector<8x1xf32>
    %85 = vector.broadcast %84 : vector<8x1xf32> to vector<8x8xf32>
    %86 = arith.mulf %83, %85 : vector<8x8xf32>
    %87 = arith.truncf %86 : vector<8x8xf32> to vector<8x8xbf16>
    %88 = vector.extract_strided_slice %1 {offsets = [0, 32], sizes = [8, 8], strides = [1, 1]} : vector<8x288xbf16> to vector<8x8xbf16>
    %cst_24 = arith.constant 3.535160e-01 : bf16
    %89 = vector.broadcast %cst_24 : bf16 to vector<8x8xbf16>
    %90 = arith.mulf %88, %89 : vector<8x8xbf16>
    %91 = vector.extract_strided_slice %1 {offsets = [0, 128], sizes = [8, 8], strides = [1, 1]} : vector<8x288xbf16> to vector<8x8xbf16>
    %92 = vector.extract_strided_slice %1 {offsets = [0, 224], sizes = [8, 8], strides = [1, 1]} : vector<8x288xbf16> to vector<8x8xbf16>
    "tpu.trace_start"() <{level = 10 : i32, message = "qd,kd->qk"}> : () -> ()
    %cst_25 = arith.constant dense<0.000000e+00> : vector<8x8xf32>
    %93 = tpu.matmul %90, %91, %cst_25 {dimension_numbers = #tpu.dot_dimension_numbers<[1], [1], [0], [0], [0, 0, 1, 0], [], []>} : vector<8x8xbf16>, vector<8x8xbf16>, vector<8x8xf32> -> vector<8x8xf32>
    "tpu.trace_stop"() : () -> ()
    %94 = vector.broadcast %3 : vector<1x8xf32> to vector<8x8xf32>
    %95 = arith.addf %93, %94 : vector<8x8xf32>
    %cst_26 = arith.constant dense<0xFF800000> : vector<8xf32>
    %96 = vector.multi_reduction <maximumf>, %95, %cst_26 [1] : vector<8x8xf32> to vector<8xf32>
    %97 = vector.shape_cast %96 : vector<8xf32> to vector<8x1xf32>
    %98 = vector.broadcast %97 : vector<8x1xf32> to vector<8x8xf32>
    %99 = arith.subf %95, %98 : vector<8x8xf32>
    %100 = math.exp %99 : vector<8x8xf32>
    %cst_27 = arith.constant dense<0.000000e+00> : vector<8xf32>
    %101 = vector.multi_reduction <add>, %100, %cst_27 [1] : vector<8x8xf32> to vector<8xf32>
    %102 = vector.shape_cast %101 : vector<8xf32> to vector<8x1xf32>
    %103 = arith.truncf %100 : vector<8x8xf32> to vector<8x8xbf16>
    "tpu.trace_start"() <{level = 10 : i32, message = "qk,kd->qd"}> : () -> ()
    %cst_28 = arith.constant dense<0.000000e+00> : vector<8x8xf32>
    %104 = tpu.matmul %103, %92, %cst_28 {dimension_numbers = #tpu.dot_dimension_numbers<[1], [0], [0], [1], [0, 0, 1, 1], [], []>} : vector<8x8xbf16>, vector<8x8xbf16>, vector<8x8xf32> -> vector<8x8xf32>
    "tpu.trace_stop"() : () -> ()
    %105 = tpu.reciprocal %102 {approx = true} : vector<8x1xf32> -> vector<8x1xf32>
    %106 = vector.broadcast %105 : vector<8x1xf32> to vector<8x8xf32>
    %107 = arith.mulf %104, %106 : vector<8x8xf32>
    %108 = arith.truncf %107 : vector<8x8xf32> to vector<8x8xbf16>
    %109 = vector.extract_strided_slice %1 {offsets = [0, 40], sizes = [8, 8], strides = [1, 1]} : vector<8x288xbf16> to vector<8x8xbf16>
    %cst_29 = arith.constant 3.535160e-01 : bf16
    %110 = vector.broadcast %cst_29 : bf16 to vector<8x8xbf16>
    %111 = arith.mulf %109, %110 : vector<8x8xbf16>
    %112 = vector.extract_strided_slice %1 {offsets = [0, 136], sizes = [8, 8], strides = [1, 1]} : vector<8x288xbf16> to vector<8x8xbf16>
    %113 = vector.extract_strided_slice %1 {offsets = [0, 232], sizes = [8, 8], strides = [1, 1]} : vector<8x288xbf16> to vector<8x8xbf16>
    "tpu.trace_start"() <{level = 10 : i32, message = "qd,kd->qk"}> : () -> ()
    %cst_30 = arith.constant dense<0.000000e+00> : vector<8x8xf32>
    %114 = tpu.matmul %111, %112, %cst_30 {dimension_numbers = #tpu.dot_dimension_numbers<[1], [1], [0], [0], [0, 0, 1, 0], [], []>} : vector<8x8xbf16>, vector<8x8xbf16>, vector<8x8xf32> -> vector<8x8xf32>
    "tpu.trace_stop"() : () -> ()
    %115 = vector.broadcast %3 : vector<1x8xf32> to vector<8x8xf32>
    %116 = arith.addf %114, %115 : vector<8x8xf32>
    %cst_31 = arith.constant dense<0xFF800000> : vector<8xf32>
    %117 = vector.multi_reduction <maximumf>, %116, %cst_31 [1] : vector<8x8xf32> to vector<8xf32>
    %118 = vector.shape_cast %117 : vector<8xf32> to vector<8x1xf32>
    %119 = vector.broadcast %118 : vector<8x1xf32> to vector<8x8xf32>
    %120 = arith.subf %116, %119 : vector<8x8xf32>
    %121 = math.exp %120 : vector<8x8xf32>
    %cst_32 = arith.constant dense<0.000000e+00> : vector<8xf32>
    %122 = vector.multi_reduction <add>, %121, %cst_32 [1] : vector<8x8xf32> to vector<8xf32>
    %123 = vector.shape_cast %122 : vector<8xf32> to vector<8x1xf32>
    %124 = arith.truncf %121 : vector<8x8xf32> to vector<8x8xbf16>
    "tpu.trace_start"() <{level = 10 : i32, message = "qk,kd->qd"}> : () -> ()
    %cst_33 = arith.constant dense<0.000000e+00> : vector<8x8xf32>
    %125 = tpu.matmul %124, %113, %cst_33 {dimension_numbers = #tpu.dot_dimension_numbers<[1], [0], [0], [1], [0, 0, 1, 1], [], []>} : vector<8x8xbf16>, vector<8x8xbf16>, vector<8x8xf32> -> vector<8x8xf32>
    "tpu.trace_stop"() : () -> ()
    %126 = tpu.reciprocal %123 {approx = true} : vector<8x1xf32> -> vector<8x1xf32>
    %127 = vector.broadcast %126 : vector<8x1xf32> to vector<8x8xf32>
    %128 = arith.mulf %125, %127 : vector<8x8xf32>
    %129 = arith.truncf %128 : vector<8x8xf32> to vector<8x8xbf16>
    %130 = vector.extract_strided_slice %1 {offsets = [0, 48], sizes = [8, 8], strides = [1, 1]} : vector<8x288xbf16> to vector<8x8xbf16>
    %cst_34 = arith.constant 3.535160e-01 : bf16
    %131 = vector.broadcast %cst_34 : bf16 to vector<8x8xbf16>
    %132 = arith.mulf %130, %131 : vector<8x8xbf16>
    %133 = vector.extract_strided_slice %1 {offsets = [0, 144], sizes = [8, 8], strides = [1, 1]} : vector<8x288xbf16> to vector<8x8xbf16>
    %134 = vector.extract_strided_slice %1 {offsets = [0, 240], sizes = [8, 8], strides = [1, 1]} : vector<8x288xbf16> to vector<8x8xbf16>
    "tpu.trace_start"() <{level = 10 : i32, message = "qd,kd->qk"}> : () -> ()
    %cst_35 = arith.constant dense<0.000000e+00> : vector<8x8xf32>
    %135 = tpu.matmul %132, %133, %cst_35 {dimension_numbers = #tpu.dot_dimension_numbers<[1], [1], [0], [0], [0, 0, 1, 0], [], []>} : vector<8x8xbf16>, vector<8x8xbf16>, vector<8x8xf32> -> vector<8x8xf32>
    "tpu.trace_stop"() : () -> ()
    %136 = vector.broadcast %3 : vector<1x8xf32> to vector<8x8xf32>
    %137 = arith.addf %135, %136 : vector<8x8xf32>
    %cst_36 = arith.constant dense<0xFF800000> : vector<8xf32>
    %138 = vector.multi_reduction <maximumf>, %137, %cst_36 [1] : vector<8x8xf32> to vector<8xf32>
    %139 = vector.shape_cast %138 : vector<8xf32> to vector<8x1xf32>
    %140 = vector.broadcast %139 : vector<8x1xf32> to vector<8x8xf32>
    %141 = arith.subf %137, %140 : vector<8x8xf32>
    %142 = math.exp %141 : vector<8x8xf32>
    %cst_37 = arith.constant dense<0.000000e+00> : vector<8xf32>
    %143 = vector.multi_reduction <add>, %142, %cst_37 [1] : vector<8x8xf32> to vector<8xf32>
    %144 = vector.shape_cast %143 : vector<8xf32> to vector<8x1xf32>
    %145 = arith.truncf %142 : vector<8x8xf32> to vector<8x8xbf16>
    "tpu.trace_start"() <{level = 10 : i32, message = "qk,kd->qd"}> : () -> ()
    %cst_38 = arith.constant dense<0.000000e+00> : vector<8x8xf32>
    %146 = tpu.matmul %145, %134, %cst_38 {dimension_numbers = #tpu.dot_dimension_numbers<[1], [0], [0], [1], [0, 0, 1, 1], [], []>} : vector<8x8xbf16>, vector<8x8xbf16>, vector<8x8xf32> -> vector<8x8xf32>
    "tpu.trace_stop"() : () -> ()
    %147 = tpu.reciprocal %144 {approx = true} : vector<8x1xf32> -> vector<8x1xf32>
    %148 = vector.broadcast %147 : vector<8x1xf32> to vector<8x8xf32>
    %149 = arith.mulf %146, %148 : vector<8x8xf32>
    %150 = arith.truncf %149 : vector<8x8xf32> to vector<8x8xbf16>
    %151 = vector.extract_strided_slice %1 {offsets = [0, 56], sizes = [8, 8], strides = [1, 1]} : vector<8x288xbf16> to vector<8x8xbf16>
    %cst_39 = arith.constant 3.535160e-01 : bf16
    %152 = vector.broadcast %cst_39 : bf16 to vector<8x8xbf16>
    %153 = arith.mulf %151, %152 : vector<8x8xbf16>
    %154 = vector.extract_strided_slice %1 {offsets = [0, 152], sizes = [8, 8], strides = [1, 1]} : vector<8x288xbf16> to vector<8x8xbf16>
    %155 = vector.extract_strided_slice %1 {offsets = [0, 248], sizes = [8, 8], strides = [1, 1]} : vector<8x288xbf16> to vector<8x8xbf16>
    "tpu.trace_start"() <{level = 10 : i32, message = "qd,kd->qk"}> : () -> ()
    %cst_40 = arith.constant dense<0.000000e+00> : vector<8x8xf32>
    %156 = tpu.matmul %153, %154, %cst_40 {dimension_numbers = #tpu.dot_dimension_numbers<[1], [1], [0], [0], [0, 0, 1, 0], [], []>} : vector<8x8xbf16>, vector<8x8xbf16>, vector<8x8xf32> -> vector<8x8xf32>
    "tpu.trace_stop"() : () -> ()
    %157 = vector.broadcast %3 : vector<1x8xf32> to vector<8x8xf32>
    %158 = arith.addf %156, %157 : vector<8x8xf32>
    %cst_41 = arith.constant dense<0xFF800000> : vector<8xf32>
    %159 = vector.multi_reduction <maximumf>, %158, %cst_41 [1] : vector<8x8xf32> to vector<8xf32>
    %160 = vector.shape_cast %159 : vector<8xf32> to vector<8x1xf32>
    %161 = vector.broadcast %160 : vector<8x1xf32> to vector<8x8xf32>
    %162 = arith.subf %158, %161 : vector<8x8xf32>
    %163 = math.exp %162 : vector<8x8xf32>
    %cst_42 = arith.constant dense<0.000000e+00> : vector<8xf32>
    %164 = vector.multi_reduction <add>, %163, %cst_42 [1] : vector<8x8xf32> to vector<8xf32>
    %165 = vector.shape_cast %164 : vector<8xf32> to vector<8x1xf32>
    %166 = arith.truncf %163 : vector<8x8xf32> to vector<8x8xbf16>
    "tpu.trace_start"() <{level = 10 : i32, message = "qk,kd->qd"}> : () -> ()
    %cst_43 = arith.constant dense<0.000000e+00> : vector<8x8xf32>
    %167 = tpu.matmul %166, %155, %cst_43 {dimension_numbers = #tpu.dot_dimension_numbers<[1], [0], [0], [1], [0, 0, 1, 1], [], []>} : vector<8x8xbf16>, vector<8x8xbf16>, vector<8x8xf32> -> vector<8x8xf32>
    "tpu.trace_stop"() : () -> ()
    %168 = tpu.reciprocal %165 {approx = true} : vector<8x1xf32> -> vector<8x1xf32>
    %169 = vector.broadcast %168 : vector<8x1xf32> to vector<8x8xf32>
    %170 = arith.mulf %167, %169 : vector<8x8xf32>
    %171 = arith.truncf %170 : vector<8x8xf32> to vector<8x8xbf16>
    %172 = vector.extract_strided_slice %1 {offsets = [0, 64], sizes = [8, 8], strides = [1, 1]} : vector<8x288xbf16> to vector<8x8xbf16>
    %cst_44 = arith.constant 3.535160e-01 : bf16
    %173 = vector.broadcast %cst_44 : bf16 to vector<8x8xbf16>
    %174 = arith.mulf %172, %173 : vector<8x8xbf16>
    %175 = vector.extract_strided_slice %1 {offsets = [0, 160], sizes = [8, 8], strides = [1, 1]} : vector<8x288xbf16> to vector<8x8xbf16>
    %176 = vector.extract_strided_slice %1 {offsets = [0, 256], sizes = [8, 8], strides = [1, 1]} : vector<8x288xbf16> to vector<8x8xbf16>
    "tpu.trace_start"() <{level = 10 : i32, message = "qd,kd->qk"}> : () -> ()
    %cst_45 = arith.constant dense<0.000000e+00> : vector<8x8xf32>
    %177 = tpu.matmul %174, %175, %cst_45 {dimension_numbers = #tpu.dot_dimension_numbers<[1], [1], [0], [0], [0, 0, 1, 0], [], []>} : vector<8x8xbf16>, vector<8x8xbf16>, vector<8x8xf32> -> vector<8x8xf32>
    "tpu.trace_stop"() : () -> ()
    %178 = vector.broadcast %3 : vector<1x8xf32> to vector<8x8xf32>
    %179 = arith.addf %177, %178 : vector<8x8xf32>
    %cst_46 = arith.constant dense<0xFF800000> : vector<8xf32>
    %180 = vector.multi_reduction <maximumf>, %179, %cst_46 [1] : vector<8x8xf32> to vector<8xf32>
    %181 = vector.shape_cast %180 : vector<8xf32> to vector<8x1xf32>
    %182 = vector.broadcast %181 : vector<8x1xf32> to vector<8x8xf32>
    %183 = arith.subf %179, %182 : vector<8x8xf32>
    %184 = math.exp %183 : vector<8x8xf32>
    %cst_47 = arith.constant dense<0.000000e+00> : vector<8xf32>
    %185 = vector.multi_reduction <add>, %184, %cst_47 [1] : vector<8x8xf32> to vector<8xf32>
    %186 = vector.shape_cast %185 : vector<8xf32> to vector<8x1xf32>
    %187 = arith.truncf %184 : vector<8x8xf32> to vector<8x8xbf16>
    "tpu.trace_start"() <{level = 10 : i32, message = "qk,kd->qd"}> : () -> ()
    %cst_48 = arith.constant dense<0.000000e+00> : vector<8x8xf32>
    %188 = tpu.matmul %187, %176, %cst_48 {dimension_numbers = #tpu.dot_dimension_numbers<[1], [0], [0], [1], [0, 0, 1, 1], [], []>} : vector<8x8xbf16>, vector<8x8xbf16>, vector<8x8xf32> -> vector<8x8xf32>
    "tpu.trace_stop"() : () -> ()
    %189 = tpu.reciprocal %186 {approx = true} : vector<8x1xf32> -> vector<8x1xf32>
    %190 = vector.broadcast %189 : vector<8x1xf32> to vector<8x8xf32>
    %191 = arith.mulf %188, %190 : vector<8x8xf32>
    %192 = arith.truncf %191 : vector<8x8xf32> to vector<8x8xbf16>
    %193 = vector.extract_strided_slice %1 {offsets = [0, 72], sizes = [8, 8], strides = [1, 1]} : vector<8x288xbf16> to vector<8x8xbf16>
    %cst_49 = arith.constant 3.535160e-01 : bf16
    %194 = vector.broadcast %cst_49 : bf16 to vector<8x8xbf16>
    %195 = arith.mulf %193, %194 : vector<8x8xbf16>
    %196 = vector.extract_strided_slice %1 {offsets = [0, 168], sizes = [8, 8], strides = [1, 1]} : vector<8x288xbf16> to vector<8x8xbf16>
    %197 = vector.extract_strided_slice %1 {offsets = [0, 264], sizes = [8, 8], strides = [1, 1]} : vector<8x288xbf16> to vector<8x8xbf16>
    "tpu.trace_start"() <{level = 10 : i32, message = "qd,kd->qk"}> : () -> ()
    %cst_50 = arith.constant dense<0.000000e+00> : vector<8x8xf32>
    %198 = tpu.matmul %195, %196, %cst_50 {dimension_numbers = #tpu.dot_dimension_numbers<[1], [1], [0], [0], [0, 0, 1, 0], [], []>} : vector<8x8xbf16>, vector<8x8xbf16>, vector<8x8xf32> -> vector<8x8xf32>
    "tpu.trace_stop"() : () -> ()
    %199 = vector.broadcast %3 : vector<1x8xf32> to vector<8x8xf32>
    %200 = arith.addf %198, %199 : vector<8x8xf32>
    %cst_51 = arith.constant dense<0xFF800000> : vector<8xf32>
    %201 = vector.multi_reduction <maximumf>, %200, %cst_51 [1] : vector<8x8xf32> to vector<8xf32>
    %202 = vector.shape_cast %201 : vector<8xf32> to vector<8x1xf32>
    %203 = vector.broadcast %202 : vector<8x1xf32> to vector<8x8xf32>
    %204 = arith.subf %200, %203 : vector<8x8xf32>
    %205 = math.exp %204 : vector<8x8xf32>
    %cst_52 = arith.constant dense<0.000000e+00> : vector<8xf32>
    %206 = vector.multi_reduction <add>, %205, %cst_52 [1] : vector<8x8xf32> to vector<8xf32>
    %207 = vector.shape_cast %206 : vector<8xf32> to vector<8x1xf32>
    %208 = arith.truncf %205 : vector<8x8xf32> to vector<8x8xbf16>
    "tpu.trace_start"() <{level = 10 : i32, message = "qk,kd->qd"}> : () -> ()
    %cst_53 = arith.constant dense<0.000000e+00> : vector<8x8xf32>
    %209 = tpu.matmul %208, %197, %cst_53 {dimension_numbers = #tpu.dot_dimension_numbers<[1], [0], [0], [1], [0, 0, 1, 1], [], []>} : vector<8x8xbf16>, vector<8x8xbf16>, vector<8x8xf32> -> vector<8x8xf32>
    "tpu.trace_stop"() : () -> ()
    %210 = tpu.reciprocal %207 {approx = true} : vector<8x1xf32> -> vector<8x1xf32>
    %211 = vector.broadcast %210 : vector<8x1xf32> to vector<8x8xf32>
    %212 = arith.mulf %209, %211 : vector<8x8xf32>
    %213 = arith.truncf %212 : vector<8x8xf32> to vector<8x8xbf16>
    %214 = vector.extract_strided_slice %1 {offsets = [0, 80], sizes = [8, 8], strides = [1, 1]} : vector<8x288xbf16> to vector<8x8xbf16>
    %cst_54 = arith.constant 3.535160e-01 : bf16
    %215 = vector.broadcast %cst_54 : bf16 to vector<8x8xbf16>
    %216 = arith.mulf %214, %215 : vector<8x8xbf16>
    %217 = vector.extract_strided_slice %1 {offsets = [0, 176], sizes = [8, 8], strides = [1, 1]} : vector<8x288xbf16> to vector<8x8xbf16>
    %218 = vector.extract_strided_slice %1 {offsets = [0, 272], sizes = [8, 8], strides = [1, 1]} : vector<8x288xbf16> to vector<8x8xbf16>
    "tpu.trace_start"() <{level = 10 : i32, message = "qd,kd->qk"}> : () -> ()
    %cst_55 = arith.constant dense<0.000000e+00> : vector<8x8xf32>
    %219 = tpu.matmul %216, %217, %cst_55 {dimension_numbers = #tpu.dot_dimension_numbers<[1], [1], [0], [0], [0, 0, 1, 0], [], []>} : vector<8x8xbf16>, vector<8x8xbf16>, vector<8x8xf32> -> vector<8x8xf32>
    "tpu.trace_stop"() : () -> ()
    %220 = vector.broadcast %3 : vector<1x8xf32> to vector<8x8xf32>
    %221 = arith.addf %219, %220 : vector<8x8xf32>
    %cst_56 = arith.constant dense<0xFF800000> : vector<8xf32>
    %222 = vector.multi_reduction <maximumf>, %221, %cst_56 [1] : vector<8x8xf32> to vector<8xf32>
    %223 = vector.shape_cast %222 : vector<8xf32> to vector<8x1xf32>
    %224 = vector.broadcast %223 : vector<8x1xf32> to vector<8x8xf32>
    %225 = arith.subf %221, %224 : vector<8x8xf32>
    %226 = math.exp %225 : vector<8x8xf32>
    %cst_57 = arith.constant dense<0.000000e+00> : vector<8xf32>
    %227 = vector.multi_reduction <add>, %226, %cst_57 [1] : vector<8x8xf32> to vector<8xf32>
    %228 = vector.shape_cast %227 : vector<8xf32> to vector<8x1xf32>
    %229 = arith.truncf %226 : vector<8x8xf32> to vector<8x8xbf16>
    "tpu.trace_start"() <{level = 10 : i32, message = "qk,kd->qd"}> : () -> ()
    %cst_58 = arith.constant dense<0.000000e+00> : vector<8x8xf32>
    %230 = tpu.matmul %229, %218, %cst_58 {dimension_numbers = #tpu.dot_dimension_numbers<[1], [0], [0], [1], [0, 0, 1, 1], [], []>} : vector<8x8xbf16>, vector<8x8xbf16>, vector<8x8xf32> -> vector<8x8xf32>
    "tpu.trace_stop"() : () -> ()
    %231 = tpu.reciprocal %228 {approx = true} : vector<8x1xf32> -> vector<8x1xf32>
    %232 = vector.broadcast %231 : vector<8x1xf32> to vector<8x8xf32>
    %233 = arith.mulf %230, %232 : vector<8x8xf32>
    %234 = arith.truncf %233 : vector<8x8xf32> to vector<8x8xbf16>
    %235 = vector.extract_strided_slice %1 {offsets = [0, 88], sizes = [8, 8], strides = [1, 1]} : vector<8x288xbf16> to vector<8x8xbf16>
    %cst_59 = arith.constant 3.535160e-01 : bf16
    %236 = vector.broadcast %cst_59 : bf16 to vector<8x8xbf16>
    %237 = arith.mulf %235, %236 : vector<8x8xbf16>
    %238 = vector.extract_strided_slice %1 {offsets = [0, 184], sizes = [8, 8], strides = [1, 1]} : vector<8x288xbf16> to vector<8x8xbf16>
    %239 = vector.extract_strided_slice %1 {offsets = [0, 280], sizes = [8, 8], strides = [1, 1]} : vector<8x288xbf16> to vector<8x8xbf16>
    "tpu.trace_start"() <{level = 10 : i32, message = "qd,kd->qk"}> : () -> ()
    %cst_60 = arith.constant dense<0.000000e+00> : vector<8x8xf32>
    %240 = tpu.matmul %237, %238, %cst_60 {dimension_numbers = #tpu.dot_dimension_numbers<[1], [1], [0], [0], [0, 0, 1, 0], [], []>} : vector<8x8xbf16>, vector<8x8xbf16>, vector<8x8xf32> -> vector<8x8xf32>
    "tpu.trace_stop"() : () -> ()
    %241 = vector.broadcast %3 : vector<1x8xf32> to vector<8x8xf32>
    %242 = arith.addf %240, %241 : vector<8x8xf32>
    %cst_61 = arith.constant dense<0xFF800000> : vector<8xf32>
    %243 = vector.multi_reduction <maximumf>, %242, %cst_61 [1] : vector<8x8xf32> to vector<8xf32>
    %244 = vector.shape_cast %243 : vector<8xf32> to vector<8x1xf32>
    %245 = vector.broadcast %244 : vector<8x1xf32> to vector<8x8xf32>
    %246 = arith.subf %242, %245 : vector<8x8xf32>
    %247 = math.exp %246 : vector<8x8xf32>
    %cst_62 = arith.constant dense<0.000000e+00> : vector<8xf32>
    %248 = vector.multi_reduction <add>, %247, %cst_62 [1] : vector<8x8xf32> to vector<8xf32>
    %249 = vector.shape_cast %248 : vector<8xf32> to vector<8x1xf32>
    %250 = arith.truncf %247 : vector<8x8xf32> to vector<8x8xbf16>
    "tpu.trace_start"() <{level = 10 : i32, message = "qk,kd->qd"}> : () -> ()
    %cst_63 = arith.constant dense<0.000000e+00> : vector<8x8xf32>
    %251 = tpu.matmul %250, %239, %cst_63 {dimension_numbers = #tpu.dot_dimension_numbers<[1], [0], [0], [1], [0, 0, 1, 1], [], []>} : vector<8x8xbf16>, vector<8x8xbf16>, vector<8x8xf32> -> vector<8x8xf32>
    "tpu.trace_stop"() : () -> ()
    %252 = tpu.reciprocal %249 {approx = true} : vector<8x1xf32> -> vector<8x1xf32>
    %253 = vector.broadcast %252 : vector<8x1xf32> to vector<8x8xf32>
    %254 = arith.mulf %251, %253 : vector<8x8xf32>
    %255 = arith.truncf %254 : vector<8x8xf32> to vector<8x8xbf16>
    %256 = tpu.concatenate %24, %45, %66, %87, %108, %129, %150, %171, %192, %213, %234, %255 in 1 : vector<8x8xbf16>, vector<8x8xbf16>, vector<8x8xbf16>, vector<8x8xbf16>, vector<8x8xbf16>, vector<8x8xbf16>, vector<8x8xbf16>, vector<8x8xbf16>, vector<8x8xbf16>, vector<8x8xbf16>, vector<8x8xbf16>, vector<8x8xbf16> -> vector<8x96xbf16>
    %c0_64 = arith.constant 0 : index
    %c0_65 = arith.constant 0 : index
    %c0_66 = arith.constant 0 : index
    %257 = vector.load %arg3[%c0_64, %c0_65, %c0_66] : memref<1x8x96xbf16, #tpu.memory_space<vmem>>, vector<1x8x96xbf16>
    %258 = vector.shape_cast %257 : vector<1x8x96xbf16> to vector<8x96xbf16>
    %259 = vector.shape_cast %256 : vector<8x96xbf16> to vector<1x8x96xbf16>
    tpu.vector_store %arg3[%c0_64, %c0_65, %c0_66], %259 {strides = array<i32>} : memref<1x8x96xbf16, #tpu.memory_space<vmem>>, vector<1x8x96xbf16>,
    return
  }
  func.func @transform_0(%arg0: i32) -> (i32, i32, i32) {
    %c0_i32 = arith.constant 0 : i32
    %c0_i32_0 = arith.constant 0 : i32
    %c0_i32_1 = arith.constant 0 : i32
    return %arg0, %c0_i32, %c0_i32_0 : i32, i32, i32
  }
  func.func @transform_1(%arg0: i32) -> (i32, i32, i32) {
    %c0_i32 = arith.constant 0 : i32
    %c0_i32_0 = arith.constant 0 : i32
    %c0_i32_1 = arith.constant 0 : i32
    return %arg0, %c0_i32, %c0_i32_0 : i32, i32, i32
  }
  func.func @transform_2(%arg0: i32) -> (i32, i32, i32) {
    %c0_i32 = arith.constant 0 : i32
    %c0_i32_0 = arith.constant 0 : i32
    %c0_i32_1 = arith.constant 0 : i32
    return %arg0, %c0_i32, %c0_i32_0 : i32, i32, i32
  }
}

module attributes {stable_mosaic.version = 11 : i64} {
  func.func @_dense_kernel(%arg0: i32, %arg1: i32, %arg2: i32, %arg3: memref<16x96xbf16, #tpu.memory_space<vmem>>, %arg4: memref<96x384xbf16, #tpu.memory_space<vmem>>, %arg5: memref<1x384xf32, #tpu.memory_space<vmem>>, %arg6: memref<16x384xbf16, #tpu.memory_space<vmem>>, %arg7: memref<16x384xf32, #tpu.memory_space<vmem>>) attributes {dimension_semantics = [#tpu.dimension_semantics<parallel>, #tpu.dimension_semantics<parallel>, #tpu.dimension_semantics<arbitrary>], iteration_bounds = array<i64: 1, 1, 1>, scalar_prefetch = 0 : i64, scratch_operands = 1 : i64, tpu.core_type = #tpu.core_type<tc>, window_params = [{transform_indices = @transform_0, window_bounds = array<i64: 16, 96>}, {transform_indices = @transform_1, window_bounds = array<i64: 96, 384>}, {transform_indices = @transform_2, window_bounds = array<i64: 1, 384>}, {transform_indices = @transform_3, window_bounds = array<i64: 16, 384>}]} {
    %c0_i32 = arith.constant 0 : i32
    %0 = arith.cmpi eq, %arg2, %c0_i32 : i32
    %1 = arith.extui %0 : i1 to i32
    %c0_i32_0 = arith.constant 0 : i32
    %2 = arith.cmpi ne, %1, %c0_i32_0 : i32
    scf.if %2 {
      %cst_10 = arith.constant 0.000000e+00 : f32
      %12 = vector.broadcast %cst_10 : f32 to vector<16x384xf32>
      %c0_11 = arith.constant 0 : index
      %c0_12 = arith.constant 0 : index
      %13 = vector.load %arg7[%c0_11, %c0_12] : memref<16x384xf32, #tpu.memory_space<vmem>>, vector<16x384xf32>
      tpu.vector_store %arg7[%c0_11, %c0_12], %12 {strides = array<i32>} : memref<16x384xf32, #tpu.memory_space<vmem>>, vector<16x384xf32>,
    } else {
    }
    %c0 = arith.constant 0 : index
    %c0_1 = arith.constant 0 : index
    %3 = vector.load %arg7[%c0, %c0_1] : memref<16x384xf32, #tpu.memory_space<vmem>>, vector<16x384xf32>
    %c0_2 = arith.constant 0 : index
    %c0_3 = arith.constant 0 : index
    %4 = vector.load %arg3[%c0_2, %c0_3] : memref<16x96xbf16, #tpu.memory_space<vmem>>, vector<16x96xbf16>
    %c0_4 = arith.constant 0 : index
    %c0_5 = arith.constant 0 : index
    %5 = vector.load %arg4[%c0_4, %c0_5] : memref<96x384xbf16, #tpu.memory_space<vmem>>, vector<96x384xbf16>
    %cst = arith.constant dense<0.000000e+00> : vector<16x384xf32>
    %6 = tpu.matmul %4, %5, %cst {dimension_numbers = #tpu.dot_dimension_numbers<[1], [0], [0], [1], [0, 0, 1, 1], [], []>} : vector<16x96xbf16>, vector<96x384xbf16>, vector<16x384xf32> -> vector<16x384xf32>
    %7 = arith.addf %3, %6 : vector<16x384xf32>
    %c0_6 = arith.constant 0 : index
    %c0_7 = arith.constant 0 : index
    %8 = vector.load %arg7[%c0_6, %c0_7] : memref<16x384xf32, #tpu.memory_space<vmem>>, vector<16x384xf32>
    tpu.vector_store %arg7[%c0_6, %c0_7], %7 {strides = array<i32>} : memref<16x384xf32, #tpu.memory_space<vmem>>, vector<16x384xf32>,
    %c0_i32_8 = arith.constant 0 : i32
    %9 = arith.cmpi eq, %arg2, %c0_i32_8 : i32
    %10 = arith.extui %9 : i1 to i32
    %c0_i32_9 = arith.constant 0 : i32
    %11 = arith.cmpi ne, %10, %c0_i32_9 : i32
    scf.if %11 {
      %c0_10 = arith.constant 0 : index
      %c0_11 = arith.constant 0 : index
      %12 = vector.load %arg7[%c0_10, %c0_11] : memref<16x384xf32, #tpu.memory_space<vmem>>, vector<16x384xf32>
      %c0_12 = arith.constant 0 : index
      %c0_13 = arith.constant 0 : index
      %13 = vector.load %arg5[%c0_12, %c0_13] : memref<1x384xf32, #tpu.memory_space<vmem>>, vector<1x384xf32>
      %14 = vector.broadcast %13 : vector<1x384xf32> to vector<16x384xf32>
      %15 = arith.addf %12, %14 : vector<16x384xf32>
      %16 = arith.mulf %15, %15 : vector<16x384xf32>
      %17 = arith.mulf %15, %16 : vector<16x384xf32>
      %cst_14 = arith.constant 4.471500e-02 : f32
      %18 = vector.broadcast %cst_14 : f32 to vector<16x384xf32>
      %19 = arith.mulf %18, %17 : vector<16x384xf32>
      %20 = arith.addf %15, %19 : vector<16x384xf32>
      %cst_15 = arith.constant 0.797884583 : f32
      %21 = vector.broadcast %cst_15 : f32 to vector<16x384xf32>
      %22 = arith.mulf %21, %20 : vector<16x384xf32>
      %23 = math.tanh %22 : vector<16x384xf32>
      %cst_16 = arith.constant 1.000000e+00 : f32
      %24 = vector.broadcast %cst_16 : f32 to vector<16x384xf32>
      %25 = arith.addf %24, %23 : vector<16x384xf32>
      %cst_17 = arith.constant 5.000000e-01 : f32
      %26 = vector.broadcast %cst_17 : f32 to vector<16x384xf32>
      %27 = arith.mulf %26, %25 : vector<16x384xf32>
      %28 = arith.mulf %15, %27 : vector<16x384xf32>
      %29 = arith.truncf %28 : vector<16x384xf32> to vector<16x384xbf16>
      %c0_18 = arith.constant 0 : index
      %c0_19 = arith.constant 0 : index
      %30 = vector.load %arg6[%c0_18, %c0_19] : memref<16x384xbf16, #tpu.memory_space<vmem>>, vector<16x384xbf16>
      tpu.vector_store %arg6[%c0_18, %c0_19], %29 {strides = array<i32>} : memref<16x384xbf16, #tpu.memory_space<vmem>>, vector<16x384xbf16>,
    } else {
    }
    return
  }
  func.func @transform_0(%arg0: i32, %arg1: i32, %arg2: i32) -> (i32, i32) {
    %c0_i32 = arith.constant 0 : i32
    return %arg0, %arg2 : i32, i32
  }
  func.func @transform_1(%arg0: i32, %arg1: i32, %arg2: i32) -> (i32, i32) {
    %c0_i32 = arith.constant 0 : i32
    return %arg2, %arg1 : i32, i32
  }
  func.func @transform_2(%arg0: i32, %arg1: i32, %arg2: i32) -> (i32, i32) {
    %c0_i32 = arith.constant 0 : i32
    %c0_i32_0 = arith.constant 0 : i32
    return %c0_i32, %arg1 : i32, i32
  }
  func.func @transform_3(%arg0: i32, %arg1: i32, %arg2: i32) -> (i32, i32) {
    %c0_i32 = arith.constant 0 : i32
    return %arg0, %arg1 : i32, i32
  }
}

module attributes {stable_mosaic.version = 11 : i64} {
  func.func @_dense_add_ln_kernel(%arg0: i32, %arg1: i32, %arg2: memref<16x384xbf16, #tpu.memory_space<vmem>>, %arg3: memref<384x96xbf16, #tpu.memory_space<vmem>>, %arg4: memref<1x96xf32, #tpu.memory_space<vmem>>, %arg5: memref<16x96xbf16, #tpu.memory_space<vmem>>, %arg6: memref<1x96xf32, #tpu.memory_space<vmem>>, %arg7: memref<1x96xf32, #tpu.memory_space<vmem>>, %arg8: memref<16x96xbf16, #tpu.memory_space<vmem>>, %arg9: memref<16x96xf32, #tpu.memory_space<vmem>>) attributes {dimension_semantics = [#tpu.dimension_semantics<parallel>, #tpu.dimension_semantics<arbitrary>], iteration_bounds = array<i64: 1, 1>, scalar_prefetch = 0 : i64, scratch_operands = 1 : i64, tpu.core_type = #tpu.core_type<tc>, window_params = [{transform_indices = @transform_0, window_bounds = array<i64: 16, 384>}, {transform_indices = @transform_1, window_bounds = array<i64: 384, 96>}, {pipeline_mode = #tpu.pipeline_mode<synchronous>, transform_indices = @transform_2, window_bounds = array<i64: 1, 96>}, {transform_indices = @transform_3, window_bounds = array<i64: 16, 96>}, {pipeline_mode = #tpu.pipeline_mode<synchronous>, transform_indices = @transform_4, window_bounds = array<i64: 1, 96>}, {pipeline_mode = #tpu.pipeline_mode<synchronous>, transform_indices = @transform_5, window_bounds = array<i64: 1, 96>}, {transform_indices = @transform_6, window_bounds = array<i64: 16, 96>}]} {
    %c0_i32 = arith.constant 0 : i32
    %0 = arith.cmpi eq, %arg1, %c0_i32 : i32
    %1 = arith.extui %0 : i1 to i32
    %c0_i32_0 = arith.constant 0 : i32
    %2 = arith.cmpi ne, %1, %c0_i32_0 : i32
    scf.if %2 {
      %cst_10 = arith.constant 0.000000e+00 : f32
      %12 = vector.broadcast %cst_10 : f32 to vector<16x96xf32>
      %c0_11 = arith.constant 0 : index
      %c0_12 = arith.constant 0 : index
      %13 = vector.load %arg9[%c0_11, %c0_12] : memref<16x96xf32, #tpu.memory_space<vmem>>, vector<16x96xf32>
      tpu.vector_store %arg9[%c0_11, %c0_12], %12 {strides = array<i32>} : memref<16x96xf32, #tpu.memory_space<vmem>>, vector<16x96xf32>,
    } else {
    }
    %c0 = arith.constant 0 : index
    %c0_1 = arith.constant 0 : index
    %3 = vector.load %arg9[%c0, %c0_1] : memref<16x96xf32, #tpu.memory_space<vmem>>, vector<16x96xf32>
    %c0_2 = arith.constant 0 : index
    %c0_3 = arith.constant 0 : index
    %4 = vector.load %arg2[%c0_2, %c0_3] : memref<16x384xbf16, #tpu.memory_space<vmem>>, vector<16x384xbf16>
    %c0_4 = arith.constant 0 : index
    %c0_5 = arith.constant 0 : index
    %5 = vector.load %arg3[%c0_4, %c0_5] : memref<384x96xbf16, #tpu.memory_space<vmem>>, vector<384x96xbf16>
    %cst = arith.constant dense<0.000000e+00> : vector<16x96xf32>
    %6 = tpu.matmul %4, %5, %cst {dimension_numbers = #tpu.dot_dimension_numbers<[1], [0], [0], [1], [0, 0, 1, 1], [], []>} : vector<16x384xbf16>, vector<384x96xbf16>, vector<16x96xf32> -> vector<16x96xf32>
    %7 = arith.addf %3, %6 : vector<16x96xf32>
    %c0_6 = arith.constant 0 : index
    %c0_7 = arith.constant 0 : index
    %8 = vector.load %arg9[%c0_6, %c0_7] : memref<16x96xf32, #tpu.memory_space<vmem>>, vector<16x96xf32>
    tpu.vector_store %arg9[%c0_6, %c0_7], %7 {strides = array<i32>} : memref<16x96xf32, #tpu.memory_space<vmem>>, vector<16x96xf32>,
    %c0_i32_8 = arith.constant 0 : i32
    %9 = arith.cmpi eq, %arg1, %c0_i32_8 : i32
    %10 = arith.extui %9 : i1 to i32
    %c0_i32_9 = arith.constant 0 : i32
    %11 = arith.cmpi ne, %10, %c0_i32_9 : i32
    scf.if %11 {
      %c0_10 = arith.constant 0 : index
      %c0_11 = arith.constant 0 : index
      %12 = vector.load %arg9[%c0_10, %c0_11] : memref<16x96xf32, #tpu.memory_space<vmem>>, vector<16x96xf32>
      %c0_12 = arith.constant 0 : index
      %c0_13 = arith.constant 0 : index
      %13 = vector.load %arg4[%c0_12, %c0_13] : memref<1x96xf32, #tpu.memory_space<vmem>>, vector<1x96xf32>
      %14 = vector.broadcast %13 : vector<1x96xf32> to vector<16x96xf32>
      %15 = arith.addf %12, %14 : vector<16x96xf32>
      %c0_14 = arith.constant 0 : index
      %c0_15 = arith.constant 0 : index
      %16 = vector.load %arg5[%c0_14, %c0_15] : memref<16x96xbf16, #tpu.memory_space<vmem>>, vector<16x96xbf16>
      %17 = arith.extf %16 : vector<16x96xbf16> to vector<16x96xf32>
      %18 = arith.addf %15, %17 : vector<16x96xf32>
      %cst_16 = arith.constant dense<0.000000e+00> : vector<16xf32>
      %19 = vector.multi_reduction <add>, %18, %cst_16 [1] : vector<16x96xf32> to vector<16xf32>
      %20 = vector.shape_cast %19 : vector<16xf32> to vector<16x1xf32>
      %cst_17 = arith.constant 9.600000e+01 : f32
      %21 = vector.broadcast %cst_17 : f32 to vector<16x1xf32>
      %22 = arith.divf %20, %21 : vector<16x1xf32>
      %23 = vector.broadcast %22 : vector<16x1xf32> to vector<16x96xf32>
      %24 = arith.subf %18, %23 : vector<16x96xf32>
      %25 = arith.mulf %24, %24 : vector<16x96xf32>
      %cst_18 = arith.constant dense<0.000000e+00> : vector<16xf32>
      %26 = vector.multi_reduction <add>, %25, %cst_18 [1] : vector<16x96xf32> to vector<16xf32>
      %27 = vector.shape_cast %26 : vector<16xf32> to vector<16x1xf32>
      %cst_19 = arith.constant 9.600000e+01 : f32
      %28 = vector.broadcast %cst_19 : f32 to vector<16x1xf32>
      %29 = arith.divf %27, %28 : vector<16x1xf32>
      %30 = vector.broadcast %22 : vector<16x1xf32> to vector<16x96xf32>
      %31 = arith.subf %18, %30 : vector<16x96xf32>
      %cst_20 = arith.constant 9.99999996E-13 : f32
      %32 = vector.broadcast %cst_20 : f32 to vector<16x1xf32>
      %33 = arith.addf %29, %32 : vector<16x1xf32>
      %34 = math.rsqrt %33 : vector<16x1xf32>
      %35 = vector.broadcast %34 : vector<16x1xf32> to vector<16x96xf32>
      %36 = arith.mulf %31, %35 : vector<16x96xf32>
      %c0_21 = arith.constant 0 : index
      %c0_22 = arith.constant 0 : index
      %37 = vector.load %arg6[%c0_21, %c0_22] : memref<1x96xf32, #tpu.memory_space<vmem>>, vector<1x96xf32>
      %38 = vector.broadcast %37 : vector<1x96xf32> to vector<16x96xf32>
      %39 = arith.mulf %36, %38 : vector<16x96xf32>
      %c0_23 = arith.constant 0 : index
      %c0_24 = arith.constant 0 : index
      %40 = vector.load %arg7[%c0_23, %c0_24] : memref<1x96xf32, #tpu.memory_space<vmem>>, vector<1x96xf32>
      %41 = vector.broadcast %40 : vector<1x96xf32> to vector<16x96xf32>
      %42 = arith.addf %39, %41 : vector<16x96xf32>
      %43 = arith.truncf %42 : vector<16x96xf32> to vector<16x96xbf16>
      %c0_25 = arith.constant 0 : index
      %c0_26 = arith.constant 0 : index
      %44 = vector.load %arg8[%c0_25, %c0_26] : memref<16x96xbf16, #tpu.memory_space<vmem>>, vector<16x96xbf16>
      tpu.vector_store %arg8[%c0_25, %c0_26], %43 {strides = array<i32>} : memref<16x96xbf16, #tpu.memory_space<vmem>>, vector<16x96xbf16>,
    } else {
    }
    return
  }
  func.func @transform_0(%arg0: i32, %arg1: i32) -> (i32, i32) {
    %c0_i32 = arith.constant 0 : i32
    return %arg0, %arg1 : i32, i32
  }
  func.func @transform_1(%arg0: i32, %arg1: i32) -> (i32, i32) {
    %c0_i32 = arith.constant 0 : i32
    %c0_i32_0 = arith.constant 0 : i32
    return %arg1, %c0_i32 : i32, i32
  }
  func.func @transform_2(%arg0: i32, %arg1: i32) -> (i32, i32) {
    %c0_i32 = arith.constant 0 : i32
    %c0_i32_0 = arith.constant 0 : i32
    %c0_i32_1 = arith.constant 0 : i32
    return %c0_i32, %c0_i32_0 : i32, i32
  }
  func.func @transform_3(%arg0: i32, %arg1: i32) -> (i32, i32) {
    %c0_i32 = arith.constant 0 : i32
    %c0_i32_0 = arith.constant 0 : i32
    return %arg0, %c0_i32 : i32, i32
  }
  func.func @transform_4(%arg0: i32, %arg1: i32) -> (i32, i32) {
    %c0_i32 = arith.constant 0 : i32
    %c0_i32_0 = arith.constant 0 : i32
    %c0_i32_1 = arith.constant 0 : i32
    return %c0_i32, %c0_i32_0 : i32, i32
  }
  func.func @transform_5(%arg0: i32, %arg1: i32) -> (i32, i32) {
    %c0_i32 = arith.constant 0 : i32
    %c0_i32_0 = arith.constant 0 : i32
    %c0_i32_1 = arith.constant 0 : i32
    return %c0_i32, %c0_i32_0 : i32, i32
  }
  func.func @transform_6(%arg0: i32, %arg1: i32) -> (i32, i32) {
    %c0_i32 = arith.constant 0 : i32
    %c0_i32_0 = arith.constant 0 : i32
    return %arg0, %c0_i32 : i32, i32
  }
}

module attributes {stable_mosaic.version = 11 : i64} {
  func.func @_pooler_cls_kernel(%arg0: i32, %arg1: memref<2x96xbf16, #tpu.memory_space<vmem>>, %arg2: memref<96x96xbf16, #tpu.memory_space<vmem>>, %arg3: memref<1x96xf32, #tpu.memory_space<vmem>>, %arg4: memref<96x2xbf16, #tpu.memory_space<vmem>>, %arg5: memref<1x2xf32, #tpu.memory_space<vmem>>, %arg6: memref<2x2xf32, #tpu.memory_space<vmem>>) attributes {dimension_semantics = [#tpu.dimension_semantics<arbitrary>], iteration_bounds = array<i64: 1>, scalar_prefetch = 0 : i64, scratch_operands = 0 : i64, tpu.core_type = #tpu.core_type<tc>, window_params = [{pipeline_mode = #tpu.pipeline_mode<synchronous>, transform_indices = @transform_0, window_bounds = array<i64: 2, 96>}, {pipeline_mode = #tpu.pipeline_mode<synchronous>, transform_indices = @transform_1, window_bounds = array<i64: 96, 96>}, {pipeline_mode = #tpu.pipeline_mode<synchronous>, transform_indices = @transform_2, window_bounds = array<i64: 1, 96>}, {pipeline_mode = #tpu.pipeline_mode<synchronous>, transform_indices = @transform_3, window_bounds = array<i64: 96, 2>}, {pipeline_mode = #tpu.pipeline_mode<synchronous>, transform_indices = @transform_4, window_bounds = array<i64: 1, 2>}, {pipeline_mode = #tpu.pipeline_mode<synchronous>, transform_indices = @transform_5, window_bounds = array<i64: 2, 2>}]} {
    %c0 = arith.constant 0 : index
    %c0_0 = arith.constant 0 : index
    %0 = vector.load %arg1[%c0, %c0_0] : memref<2x96xbf16, #tpu.memory_space<vmem>>, vector<2x96xbf16>
    %c0_1 = arith.constant 0 : index
    %c0_2 = arith.constant 0 : index
    %1 = vector.load %arg2[%c0_1, %c0_2] : memref<96x96xbf16, #tpu.memory_space<vmem>>, vector<96x96xbf16>
    %cst = arith.constant dense<0.000000e+00> : vector<2x96xf32>
    %2 = tpu.matmul %0, %1, %cst {dimension_numbers = #tpu.dot_dimension_numbers<[1], [0], [0], [1], [0, 0, 1, 1], [], []>} : vector<2x96xbf16>, vector<96x96xbf16>, vector<2x96xf32> -> vector<2x96xf32>
    %c0_3 = arith.constant 0 : index
    %c0_4 = arith.constant 0 : index
    %3 = vector.load %arg3[%c0_3, %c0_4] : memref<1x96xf32, #tpu.memory_space<vmem>>, vector<1x96xf32>
    %4 = vector.broadcast %3 : vector<1x96xf32> to vector<2x96xf32>
    %5 = arith.addf %2, %4 : vector<2x96xf32>
    %6 = math.tanh %5 : vector<2x96xf32>
    %7 = arith.truncf %6 : vector<2x96xf32> to vector<2x96xbf16>
    %c0_5 = arith.constant 0 : index
    %c0_6 = arith.constant 0 : index
    %8 = vector.load %arg4[%c0_5, %c0_6] : memref<96x2xbf16, #tpu.memory_space<vmem>>, vector<96x2xbf16>
    %cst_7 = arith.constant dense<0.000000e+00> : vector<2x2xf32>
    %9 = tpu.matmul %7, %8, %cst_7 {dimension_numbers = #tpu.dot_dimension_numbers<[1], [0], [0], [1], [0, 0, 1, 1], [], []>} : vector<2x96xbf16>, vector<96x2xbf16>, vector<2x2xf32> -> vector<2x2xf32>
    %c0_8 = arith.constant 0 : index
    %c0_9 = arith.constant 0 : index
    %10 = vector.load %arg5[%c0_8, %c0_9] : memref<1x2xf32, #tpu.memory_space<vmem>>, vector<1x2xf32>
    %11 = vector.broadcast %10 : vector<1x2xf32> to vector<2x2xf32>
    %12 = arith.addf %9, %11 : vector<2x2xf32>
    %c0_10 = arith.constant 0 : index
    %c0_11 = arith.constant 0 : index
    %13 = vector.load %arg6[%c0_10, %c0_11] : memref<2x2xf32, #tpu.memory_space<vmem>>, vector<2x2xf32>
    tpu.vector_store %arg6[%c0_10, %c0_11], %12 {strides = array<i32>} : memref<2x2xf32, #tpu.memory_space<vmem>>, vector<2x2xf32>,
    return
  }
  func.func @transform_0(%arg0: i32) -> (i32, i32) {
    %c0_i32 = arith.constant 0 : i32
    %c0_i32_0 = arith.constant 0 : i32
    %c0_i32_1 = arith.constant 0 : i32
    return %c0_i32, %c0_i32_0 : i32, i32
  }
  func.func @transform_1(%arg0: i32) -> (i32, i32) {
    %c0_i32 = arith.constant 0 : i32
    %c0_i32_0 = arith.constant 0 : i32
    %c0_i32_1 = arith.constant 0 : i32
    return %c0_i32, %c0_i32_0 : i32, i32
  }
  func.func @transform_2(%arg0: i32) -> (i32, i32) {
    %c0_i32 = arith.constant 0 : i32
    %c0_i32_0 = arith.constant 0 : i32
    %c0_i32_1 = arith.constant 0 : i32
    return %c0_i32, %c0_i32_0 : i32, i32
  }
  func.func @transform_3(%arg0: i32) -> (i32, i32) {
    %c0_i32 = arith.constant 0 : i32
    %c0_i32_0 = arith.constant 0 : i32
    %c0_i32_1 = arith.constant 0 : i32
    return %c0_i32, %c0_i32_0 : i32, i32
  }
  func.func @transform_4(%arg0: i32) -> (i32, i32) {
    %c0_i32 = arith.constant 0 : i32
    %c0_i32_0 = arith.constant 0 : i32
    %c0_i32_1 = arith.constant 0 : i32
    return %c0_i32, %c0_i32_0 : i32, i32
  }
  func.func @transform_5(%arg0: i32) -> (i32, i32) {
    %c0_i32 = arith.constant 0 : i32
    %c0_i32_0 = arith.constant 0 : i32
    %c0_i32_1 = arith.constant 0 : i32
    return %c0_i32, %c0_i32_0 : i32, i32
  }
}

</mosaic_0001>

<llo_original>
// kernel: kmer_bert_forward.12
$region0: #{kmer_bert_forward.12}
  #allocation0 [shape = 'u32[]', space=smem, size = 0x4, offset = 0x4, fixed_abs, tag = 'smem constant byte address 0x4 - core index']
  #allocation1 [shape = 'u32[72,128]{1,0:T(1,128)}', space=vmem, size = 0x9000, scoped, tag = 'internal scratch']
  %s0 = inlined_call_operand.vmem [shape: f32[16,96], index: 0, kind: input, shape index: {}]
  %s1 = inlined_call_operand.vmem [shape: f32[1,96], index: 1, kind: input, shape index: {}]
  %s2 = inlined_call_operand.vmem [shape: f32[1,96], index: 2, kind: input, shape index: {}]
  %s3 = inlined_call_operand.vmem [shape: bf16[16,96], index: 3, kind: output, shape index: {}]
  %s4 = sld [smem:[#allocation0]]
  $region22: #{kmer_bert_forward.12} parent=0
    _
  %s6 = ssub.s32 1, %s4
  %s7 = scalar_select 0, %s6, %s4
  // Predicated region
  $region2: #{kmer_bert_forward.12} parent=0 // pred_check
    _
  $region3: #{kmer_bert_forward.12} parent=0 // pred_check_branch
    %9 = sbr.rel (0) target = $region5
  $region4: #{kmer_bert_forward.12} parent=0 // pred_region
    _
  $region5: #{kmer_bert_forward.12} parent=0 // pred_fallthru
    _
  // Predicated region
  $region6: #{kmer_bert_forward.12} parent=0 // pred_check
    _
  $region7: #{kmer_bert_forward.12} parent=0 // pred_check_branch
    %11 = sbr.rel (0) target = $region9
  $region8: #{kmer_bert_forward.12} parent=0 // pred_region
    _
  $region9: #{kmer_bert_forward.12} parent=0 // pred_fallthru
    _
  // Predicated region
  $region10: #{kmer_bert_forward.12} parent=0 // pred_check
    _
  $region11: #{kmer_bert_forward.12} parent=0 // pred_check_branch
    %13 = sbr.rel (0) target = $region13
  $region12: #{kmer_bert_forward.12} parent=0 // pred_region
    _
  $region13: #{kmer_bert_forward.12} parent=0 // pred_fallthru
    _
  %v14 = vld [vmem:[%s0] sm:$0xff]
  %v15 = vld [vmem:[%s0 + $0x8] sm:$0xff]
  %vm16 = vcmask 785408
  %v17 = vsel %vm16, %v14, 0.0
  %18 = vadd.xlane.f32.xlu0 %v17
  %v19 = vpop.xlane.xlu0 %18
  %v20 = vsel %vm16, %v15, 0.0
  %21 = vadd.xlane.f32.xlu0 %v20
  %v22 = vpop.xlane.xlu0 %21
  %v23 = vrcp.pop 96.0
  %v24 = vmul.f32 96.0, %v23
  %v25 = vsub.f32 1.0, %v24
  %v26 = vmul.f32 %v23, %v25
  %v27 = vadd.f32 %v23, %v26
  %vm28 = vweird.f32 %v23
  %v29 = vsel %vm28, %v23, %v27
  %v30 = vmul.f32 %v19, %v29
  %v31 = vmul.f32 %v22, %v29
  %v32 = vsub.f32 %v14, %v30
  %v33 = vsub.f32 %v15, %v31
  %v34 = vmul.f32 %v32, %v32
  %v35 = vmul.f32 %v33, %v33
  %v36 = vsel %vm16, %v34, 0.0
  %37 = vadd.xlane.f32.xlu0 %v36
  %v38 = vpop.xlane.xlu0 %37
  %v39 = vsel %vm16, %v35, 0.0
  %40 = vadd.xlane.f32.xlu0 %v39
  %v41 = vpop.xlane.xlu0 %40
  %v42 = vmul.f32 %v38, %v29
  %v43 = vmul.f32 %v41, %v29
  %v44 = vadd.f32 %v42, 1e-12
  %v45 = vadd.f32 %v43, 1e-12
  %v46 = vrsqrt.pop %v44
  %v47 = vmul.f32 %v46, %v44
  %v48 = vmul.f32 %v47, %v46
  %v49 = vmul.f32 0.5, %v48
  %v50 = vsub.f32 1.5, %v49
  %v51 = vmul.f32 %v46, %v50
  %vm52 = vweird.f32 %v44
  %vm53 = vweird.f32 %v46
  %vm54 = vmor %vm52, %vm53
  %v55 = vsel %vm54, %v46, %v51
  %v56 = vrsqrt.pop %v45
  %v57 = vmul.f32 %v56, %v45
  %v58 = vmul.f32 %v57, %v56
  %v59 = vmul.f32 0.5, %v58
  %v60 = vsub.f32 1.5, %v59
  %v61 = vmul.f32 %v56, %v60
  %vm62 = vweird.f32 %v45
  %vm63 = vweird.f32 %v56
  %vm64 = vmor %vm62, %vm63
  %v65 = vsel %vm64, %v56, %v61
  %v66 = vmul.f32 %v32, %v55
  %v67 = vmul.f32 %v33, %v65
  %v68 = vld [vmem:[%s1] sm:$0x1]
  %v70 = vperm.slane %v68, 0
  %v72 = vmul.f32 %v66, %v70
  %v73 = vmul.f32 %v67, %v70
  %v74 = vld [vmem:[%s2] sm:$0x1]
  %v76 = vperm.slane %v74, 0
  %v78 = vadd.f32 %v72, %v76
  %v79 = vadd.f32 %v73, %v76
  %v80 = vpack.c.bf16 %v78, %v78
  %v81 = vpack.c.bf16 %v79, %v79
  %vm82 = vcmask 781312
  %83 = vst.msk [vmem:[%s3] sm:$0xf] %vm82, %v80
  %84 = vst.msk [vmem:[%s3 + $0x4] sm:$0xf] %vm82, %v81
  // Predicated region
  $region14: #{kmer_bert_forward.12} parent=0 // pred_check
    _
  $region15: #{kmer_bert_forward.12} parent=0 // pred_check_branch
    %86 = sbr.rel (0) target = $region17
  $region16: #{kmer_bert_forward.12} parent=0 // pred_region
    _
  $region17: #{kmer_bert_forward.12} parent=0 // pred_fallthru
    _
  // Predicated region
  $region18: #{kmer_bert_forward.12} parent=0 // pred_check
    _
  $region19: #{kmer_bert_forward.12} parent=0 // pred_check_branch
    %88 = sbr.rel (0) target = $region21
  $region20: #{kmer_bert_forward.12} parent=0 // pred_region
    _
  $region21: #{kmer_bert_forward.12} parent=0 // pred_fallthru
    _

// kernel: kmer_bert_forward.15
$region0: #{kmer_bert_forward.15}
  #allocation0 [shape = 'u32[]', space=smem, size = 0x4, offset = 0x4, fixed_abs, tag = 'smem constant byte address 0x4 - core index']
  #allocation1 [shape = 'u32[72,128]{1,0:T(1,128)}', space=vmem, size = 0x9000, scoped, tag = 'internal scratch']
  #allocation2 [shape = 'f32[16,96]{1,0:T(8,128)}', space=vmem, size = 0x2000, scoped, tag = 'scratch operand']
  %s0 = inlined_call_operand.vmem [shape: bf16[16,96], index: 0, kind: input, shape index: {}]
  %s1 = inlined_call_operand.vmem [shape: bf16[96,96], index: 1, kind: input, shape index: {}]
  %s2 = inlined_call_operand.vmem [shape: f32[1,96], index: 2, kind: input, shape index: {}]
  %s3 = inlined_call_operand.vmem [shape: bf16[16,96], index: 3, kind: input, shape index: {}]
  %s4 = inlined_call_operand.vmem [shape: f32[1,96], index: 4, kind: input, shape index: {}]
  %s5 = inlined_call_operand.vmem [shape: f32[1,96], index: 5, kind: input, shape index: {}]
  %s6 = inlined_call_operand.vmem [shape: bf16[16,96], index: 6, kind: output, shape index: {}]
  %s7 = sld [smem:[#allocation0]]
  $region42: #{kmer_bert_forward.15} parent=0
    _
  %s9 = ssub.s32 1, %s7
  %s10 = scalar_select 0, %s9, %s7
  // Predicated region
  $region2: #{kmer_bert_forward.15} parent=0 // pred_check
    _
  $region3: #{kmer_bert_forward.15} parent=0 // pred_check_branch
    %12 = sbr.rel (0) target = $region5
  $region4: #{kmer_bert_forward.15} parent=0 // pred_region
    _
  $region5: #{kmer_bert_forward.15} parent=0 // pred_fallthru
    _
  // Predicated region
  $region6: #{kmer_bert_forward.15} parent=0 // pred_check
    _
  $region7: #{kmer_bert_forward.15} parent=0 // pred_check_branch
    %14 = sbr.rel (0) target = $region9
  $region8: #{kmer_bert_forward.15} parent=0 // pred_region
    _
  $region9: #{kmer_bert_forward.15} parent=0 // pred_fallthru
    _
  // Predicated region
  $region10: #{kmer_bert_forward.15} parent=0 // pred_check
    _
  $region11: #{kmer_bert_forward.15} parent=0 // pred_check_branch
    %16 = sbr.rel (0) target = $region13
  $region12: #{kmer_bert_forward.15} parent=0 // pred_region
    _
  $region13: #{kmer_bert_forward.15} parent=0 // pred_fallthru
    _
  // Predicated region
  $region14: #{kmer_bert_forward.15} parent=0 // pred_check
    _
  $region15: #{kmer_bert_forward.15} parent=0 // pred_check_branch
    %18 = sbr.rel (0) target = $region17
  $region16: #{kmer_bert_forward.15} parent=0 // pred_region
    _
  $region17: #{kmer_bert_forward.15} parent=0 // pred_fallthru
    _
  // Predicated region
  $region18: #{kmer_bert_forward.15} parent=0 // pred_check
    _
  $region19: #{kmer_bert_forward.15} parent=0 // pred_check_branch
    %20 = sbr.rel (0) target = $region21
  $region20: #{kmer_bert_forward.15} parent=0 // pred_region
    _
  $region21: #{kmer_bert_forward.15} parent=0 // pred_fallthru
    _
  // Predicated region
  $region22: #{kmer_bert_forward.15} parent=0 // pred_check
    _
  $region23: #{kmer_bert_forward.15} parent=0 // pred_check_branch
    %22 = sbr.rel (0) target = $region25
  $region24: #{kmer_bert_forward.15} parent=0 // pred_region
    _
  $region25: #{kmer_bert_forward.15} parent=0 // pred_fallthru
    _
  %p24 = scmp.eq.s32.totalorder 0, 0
  // Predicated region
  $region26: #{kmer_bert_forward.15} parent=0 // pred_check
    %p25 = pneg %p24
  $region27: #{kmer_bert_forward.15} parent=0 // pred_check_branch
    %27 = sbr.rel (%p25) target = $region29
  $region28: #{kmer_bert_forward.15} parent=0 // pred_region
    %vm28 = vcmask 785408
    %29 = vst.msk [vmem:[#allocation2] sm:$0xff] %vm28, 0.0
    %30 = vst.msk [vmem:[#allocation2 + $0x8] sm:$0xff] %vm28, 0.0
  $region29: #{kmer_bert_forward.15} parent=0 // pred_fallthru
    _
  %v31 = vld [vmem:[#allocation2] sm:$0xff]
  %v32 = vld [vmem:[#allocation2 + $0x8] sm:$0xff]
  %v33 = vld [vmem:[%s0] sm:$0xf]
  %v34 = vld [vmem:[%s0 + $0x4] sm:$0xf]
  %v35 = vld [vmem:[%s1] sm:$0xf]
  %v36 = vld [vmem:[%s1 + $0x4] sm:$0xf]
  %v37 = vld [vmem:[%s1 + $0x8] sm:$0xf]
  %v38 = vld [vmem:[%s1 + $0xc] sm:$0xf]
  %v39 = vld [vmem:[%s1 + $0x10] sm:$0xf]
  %v40 = vld [vmem:[%s1 + $0x14] sm:$0xf]
  %v41 = vld [vmem:[%s1 + $0x18] sm:$0xf]
  %v42 = vld [vmem:[%s1 + $0x1c] sm:$0xf]
  %v43 = vld [vmem:[%s1 + $0x20] sm:$0xf]
  %v44 = vld [vmem:[%s1 + $0x24] sm:$0xf]
  %v45 = vld [vmem:[%s1 + $0x28] sm:$0xf]
  %v46 = vld [vmem:[%s1 + $0x2c] sm:$0xf]
  %v49 = vunpack.c.l.b16 %v33
  %v50 = vunpack.c.l.b16 %v34
  %v51 = vpack.c.b16 %v50, %v49
  %v64 = vunpack.c.l.b16 %v35
  %v65 = vunpack.c.l.b16 %v36
  %v66 = vunpack.c.l.b16 %v37
  %v67 = vunpack.c.l.b16 %v38
  %v68 = vunpack.c.l.b16 %v39
  %v69 = vunpack.c.l.b16 %v40
  %v70 = vunpack.c.l.b16 %v41
  %v71 = vunpack.c.l.b16 %v42
  %v72 = vunpack.c.l.b16 %v43
  %v73 = vunpack.c.l.b16 %v44
  %v74 = vunpack.c.l.b16 %v45
  %v75 = vunpack.c.l.b16 %v46
  %v76 = vpack.c.b16 %v65, %v64
  %v77 = vpack.c.b16 %v67, %v66
  %v78 = vpack.c.b16 %v69, %v68
  %v79 = vpack.c.b16 %v71, %v70
  %v80 = vpack.c.b16 %v73, %v72
  %v81 = vpack.c.b16 %v75, %v74
  %vm88 = vcmask 785408
  %v90 = vsel %vm88, %v51, 0
  %92 = vmatpush.bf16.msra.mxu0 0
  %93 = vmatpush.bf16.msra.mxu0 0
  %94 = vmatpush.bf16.msra.mxu0 %v81
  %95 = vmatpush.bf16.msra.mxu0 %v80
  %96 = vmatpush.bf16.msra.mxu0 %v79
  %97 = vmatpush.bf16.msra.mxu0 %v78
  %98 = vmatpush.bf16.msra.mxu0 %v77
  %99 = vmatpush.bf16.msra.mxu0 %v76
  %100 = vmatmul.bf16.gmra.mxu0 %v90
  %v101 = vpop.f32.mrf.mxu0
  %v102 = vadd.f32 0.0, %v101
  %v103 = vpop.f32.mrf.mxu0
  %v104 = vadd.f32 0.0, %v103
  %105 = vdwg.mxu0
  %v106 = vadd.f32 %v31, %v102
  %v107 = vadd.f32 %v32, %v104
  %108 = vst.msk [vmem:[#allocation2] sm:$0xff] %vm88, %v106
  %109 = vst.msk [vmem:[#allocation2 + $0x8] sm:$0xff] %vm88, %v107
  // Predicated region
  $region30: #{kmer_bert_forward.15} parent=0 // pred_check
    %p110 = pneg %p24
  $region31: #{kmer_bert_forward.15} parent=0 // pred_check_branch
    %112 = sbr.rel (%p110) target = $region33
  $region32: #{kmer_bert_forward.15} parent=0 // pred_region
    %v113 = vld [vmem:[#allocation2] sm:$0xff]
    %v114 = vld [vmem:[#allocation2 + $0x8] sm:$0xff]
    %v115 = vld [vmem:[%s2] sm:$0x1]
    %v117 = vperm.slane %v115, 0
    %v119 = vadd.f32 %v113, %v117
    %v120 = vadd.f32 %v114, %v117
    %v121 = vld [vmem:[%s3] sm:$0xf]
    %v122 = vld [vmem:[%s3 + $0x4] sm:$0xf]
    %v123 = vunpack.c.l.bf16 %v121
    %v124 = vunpack.c.l.bf16 %v122
    %v125 = vadd.f32 %v119, %v123
    %v126 = vadd.f32 %v120, %v124
    %v127 = vsel %vm88, %v125, 0.0
    %128 = vadd.xlane.f32.xlu0 %v127
    %v129 = vpop.xlane.xlu0 %128
    %v130 = vsel %vm88, %v126, 0.0
    %131 = vadd.xlane.f32.xlu0 %v130
    %v132 = vpop.xlane.xlu0 %131
    %v133 = vrcp.pop 96.0
    %v134 = vmul.f32 96.0, %v133
    %v135 = vsub.f32 1.0, %v134
    %v136 = vmul.f32 %v133, %v135
    %v137 = vadd.f32 %v133, %v136
    %vm138 = vweird.f32 %v133
    %v139 = vsel %vm138, %v133, %v137
    %v140 = vmul.f32 %v129, %v139
    %v141 = vmul.f32 %v132, %v139
    %v142 = vsub.f32 %v125, %v140
    %v143 = vsub.f32 %v126, %v141
    %v144 = vmul.f32 %v142, %v142
    %v145 = vmul.f32 %v143, %v143
    %v146 = vsel %vm88, %v144, 0.0
    %147 = vadd.xlane.f32.xlu0 %v146
    %v148 = vpop.xlane.xlu0 %147
    %v149 = vsel %vm88, %v145, 0.0
    %150 = vadd.xlane.f32.xlu0 %v149
    %v151 = vpop.xlane.xlu0 %150
    %v152 = vmul.f32 %v148, %v139
    %v153 = vmul.f32 %v151, %v139
    %v154 = vadd.f32 %v152, 1e-12
    %v155 = vadd.f32 %v153, 1e-12
    %v156 = vrsqrt.pop %v154
    %v157 = vmul.f32 %v156, %v154
    %v158 = vmul.f32 %v157, %v156
    %v159 = vmul.f32 0.5, %v158
    %v160 = vsub.f32 1.5, %v159
    %v161 = vmul.f32 %v156, %v160
    %vm162 = vweird.f32 %v154
    %vm163 = vweird.f32 %v156
    %vm164 = vmor %vm162, %vm163
    %v165 = vsel %vm164, %v156, %v161
    %v166 = vrsqrt.pop %v155
    %v167 = vmul.f32 %v166, %v155
    %v168 = vmul.f32 %v167, %v166
    %v169 = vmul.f32 0.5, %v168
    %v170 = vsub.f32 1.5, %v169
    %v171 = vmul.f32 %v166, %v170
    %vm172 = vweird.f32 %v155
    %vm173 = vweird.f32 %v166
    %vm174 = vmor %vm172, %vm173
    %v175 = vsel %vm174, %v166, %v171
    %v176 = vmul.f32 %v142, %v165
    %v177 = vmul.f32 %v143, %v175
    %v178 = vld [vmem:[%s4] sm:$0x1]
    %v180 = vperm.slane %v178, 0
    %v182 = vmul.f32 %v176, %v180
    %v183 = vmul.f32 %v177, %v180
    %v184 = vld [vmem:[%s5] sm:$0x1]
    %v186 = vperm.slane %v184, 0
    %v188 = vadd.f32 %v182, %v186
    %v189 = vadd.f32 %v183, %v186
    %v190 = vpack.c.bf16 %v188, %v188
    %v191 = vpack.c.bf16 %v189, %v189
    %vm192 = vcmask 781312
    %193 = vst.msk [vmem:[%s6] sm:$0xf] %vm192, %v190
    %194 = vst.msk [vmem:[%s6 + $0x4] sm:$0xf] %vm192, %v191
  $region33: #{kmer_bert_forward.15} parent=0 // pred_fallthru
    _
  // Predicated region
  $region34: #{kmer_bert_forward.15} parent=0 // pred_check
    _
  $region35: #{kmer_bert_forward.15} parent=0 // pred_check_branch
    %196 = sbr.rel (0) target = $region37
  $region36: #{kmer_bert_forward.15} parent=0 // pred_region
    _
  $region37: #{kmer_bert_forward.15} parent=0 // pred_fallthru
    _
  // Predicated region
  $region38: #{kmer_bert_forward.15} parent=0 // pred_check
    _
  $region39: #{kmer_bert_forward.15} parent=0 // pred_check_branch
    %198 = sbr.rel (0) target = $region41
  $region40: #{kmer_bert_forward.15} parent=0 // pred_region
    _
  $region41: #{kmer_bert_forward.15} parent=0 // pred_fallthru
    _

// kernel: kmer_bert_forward.13
$region0: #{kmer_bert_forward.13}
  #allocation0 [shape = 'u32[]', space=smem, size = 0x4, offset = 0x4, fixed_abs, tag = 'smem constant byte address 0x4 - core index']
  #allocation1 [shape = 'u32[72,128]{1,0:T(1,128)}', space=vmem, size = 0x9000, scoped, tag = 'internal scratch']
  #allocation2 [shape = 'f32[16,288]{1,0:T(8,128)}', space=vmem, size = 0x6000, scoped, tag = 'scratch operand']
  %s0 = inlined_call_operand.vmem [shape: bf16[16,96], index: 0, kind: input, shape index: {}]
  %s1 = inlined_call_operand.vmem [shape: bf16[96,288], index: 1, kind: input, shape index: {}]
  %s2 = inlined_call_operand.vmem [shape: f32[1,288], index: 2, kind: input, shape index: {}]
  %s3 = inlined_call_operand.vmem [shape: bf16[16,288], index: 3, kind: output, shape index: {}]
  %s4 = sld [smem:[#allocation0]]
  $region30: #{kmer_bert_forward.13} parent=0
    _
  %s6 = ssub.s32 1, %s4
  %s7 = scalar_select 0, %s6, %s4
  // Predicated region
  $region2: #{kmer_bert_forward.13} parent=0 // pred_check
    _
  $region3: #{kmer_bert_forward.13} parent=0 // pred_check_branch
    %9 = sbr.rel (0) target = $region5
  $region4: #{kmer_bert_forward.13} parent=0 // pred_region
    _
  $region5: #{kmer_bert_forward.13} parent=0 // pred_fallthru
    _
  // Predicated region
  $region6: #{kmer_bert_forward.13} parent=0 // pred_check
    _
  $region7: #{kmer_bert_forward.13} parent=0 // pred_check_branch
    %11 = sbr.rel (0) target = $region9
  $region8: #{kmer_bert_forward.13} parent=0 // pred_region
    _
  $region9: #{kmer_bert_forward.13} parent=0 // pred_fallthru
    _
  // Predicated region
  $region10: #{kmer_bert_forward.13} parent=0 // pred_check
    _
  $region11: #{kmer_bert_forward.13} parent=0 // pred_check_branch
    %13 = sbr.rel (0) target = $region13
  $region12: #{kmer_bert_forward.13} parent=0 // pred_region
    _
  $region13: #{kmer_bert_forward.13} parent=0 // pred_fallthru
    _
  %p15 = scmp.eq.s32.totalorder 0, 0
  // Predicated region
  $region14: #{kmer_bert_forward.13} parent=0 // pred_check
    %p16 = pneg %p15
  $region15: #{kmer_bert_forward.13} parent=0 // pred_check_branch
    %18 = sbr.rel (%p16) target = $region17
  $region16: #{kmer_bert_forward.13} parent=0 // pred_region
    %19 = vst [vmem:[#allocation2] sm:$0xff] 0.0
    %20 = vst [vmem:[#allocation2 + $0x8] sm:$0xff] 0.0
    %vm21 = vcmask 261120
    %22 = vst.msk [vmem:[#allocation2 + $0x10] sm:$0xff] %vm21, 0.0
    %23 = vst [vmem:[#allocation2 + $0x18] sm:$0xff] 0.0
    %24 = vst [vmem:[#allocation2 + $0x20] sm:$0xff] 0.0
    %25 = vst.msk [vmem:[#allocation2 + $0x28] sm:$0xff] %vm21, 0.0
  $region17: #{kmer_bert_forward.13} parent=0 // pred_fallthru
    _
  %v26 = vld [vmem:[#allocation2] sm:$0xff]
  %v27 = vld [vmem:[#allocation2 + $0x8] sm:$0xff]
  %v28 = vld [vmem:[#allocation2 + $0x10] sm:$0xff]
  %v29 = vld [vmem:[#allocation2 + $0x18] sm:$0xff]
  %v30 = vld [vmem:[#allocation2 + $0x20] sm:$0xff]
  %v31 = vld [vmem:[#allocation2 + $0x28] sm:$0xff]
  %v32 = vld [vmem:[%s0] sm:$0xf]
  %v33 = vld [vmem:[%s0 + $0x4] sm:$0xf]
  %v34 = vld [vmem:[%s1] sm:$0xff]
  %v35 = vld [vmem:[%s1 + $0x8] sm:$0xf]
  %v36 = vld [vmem:[%s1 + $0xc] sm:$0xff]
  %v37 = vld [vmem:[%s1 + $0x14] sm:$0xf]
  %v38 = vld [vmem:[%s1 + $0x18] sm:$0xff]
  %v39 = vld [vmem:[%s1 + $0x20] sm:$0xf]
  %v40 = vld [vmem:[%s1 + $0x24] sm:$0xff]
  %v41 = vld [vmem:[%s1 + $0x2c] sm:$0xf]
  %v42 = vld [vmem:[%s1 + $0x30] sm:$0xff]
  %v43 = vld [vmem:[%s1 + $0x38] sm:$0xf]
  %v44 = vld [vmem:[%s1 + $0x3c] sm:$0xff]
  %v45 = vld [vmem:[%s1 + $0x44] sm:$0xf]
  %v46 = vld [vmem:[%s1 + $0x48] sm:$0xff]
  %v47 = vld [vmem:[%s1 + $0x50] sm:$0xf]
  %v48 = vld [vmem:[%s1 + $0x54] sm:$0xff]
  %v49 = vld [vmem:[%s1 + $0x5c] sm:$0xf]
  %v50 = vld [vmem:[%s1 + $0x60] sm:$0xff]
  %v51 = vld [vmem:[%s1 + $0x68] sm:$0xf]
  %v52 = vld [vmem:[%s1 + $0x6c] sm:$0xff]
  %v53 = vld [vmem:[%s1 + $0x74] sm:$0xf]
  %v54 = vld [vmem:[%s1 + $0x78] sm:$0xff]
  %v55 = vld [vmem:[%s1 + $0x80] sm:$0xf]
  %v56 = vld [vmem:[%s1 + $0x84] sm:$0xff]
  %v57 = vld [vmem:[%s1 + $0x8c] sm:$0xf]
  %v60 = vunpack.c.l.b16 %v32
  %v61 = vunpack.c.l.b16 %v33
  %v62 = vpack.c.b16 %v61, %v60
  %v87 = vunpack.c.l.b16 %v34
  %v88 = vunpack.c.h.b16 %v34
  %v89 = vunpack.c.l.b16 %v35
  %v90 = vunpack.c.l.b16 %v36
  %v91 = vunpack.c.h.b16 %v36
  %v92 = vunpack.c.l.b16 %v37
  %v93 = vunpack.c.l.b16 %v38
  %v94 = vunpack.c.h.b16 %v38
  %v95 = vunpack.c.l.b16 %v39
  %v96 = vunpack.c.l.b16 %v40
  %v97 = vunpack.c.h.b16 %v40
  %v98 = vunpack.c.l.b16 %v41
  %v99 = vunpack.c.l.b16 %v42
  %v100 = vunpack.c.h.b16 %v42
  %v101 = vunpack.c.l.b16 %v43
  %v102 = vunpack.c.l.b16 %v44
  %v103 = vunpack.c.h.b16 %v44
  %v104 = vunpack.c.l.b16 %v45
  %v105 = vunpack.c.l.b16 %v46
  %v106 = vunpack.c.h.b16 %v46
  %v107 = vunpack.c.l.b16 %v47
  %v108 = vunpack.c.l.b16 %v48
  %v109 = vunpack.c.h.b16 %v48
  %v110 = vunpack.c.l.b16 %v49
  %v111 = vunpack.c.l.b16 %v50
  %v112 = vunpack.c.h.b16 %v50
  %v113 = vunpack.c.l.b16 %v51
  %v114 = vunpack.c.l.b16 %v52
  %v115 = vunpack.c.h.b16 %v52
  %v116 = vunpack.c.l.b16 %v53
  %v117 = vunpack.c.l.b16 %v54
  %v118 = vunpack.c.h.b16 %v54
  %v119 = vunpack.c.l.b16 %v55
  %v120 = vunpack.c.l.b16 %v56
  %v121 = vunpack.c.h.b16 %v56
  %v122 = vunpack.c.l.b16 %v57
  %v123 = vpack.c.b16 %v90, %v87
  %v124 = vpack.c.b16 %v91, %v88
  %v125 = vpack.c.b16 %v92, %v89
  %v126 = vpack.c.b16 %v96, %v93
  %v127 = vpack.c.b16 %v97, %v94
  %v128 = vpack.c.b16 %v98, %v95
  %v129 = vpack.c.b16 %v102, %v99
  %v130 = vpack.c.b16 %v103, %v100
  %v131 = vpack.c.b16 %v104, %v101
  %v132 = vpack.c.b16 %v108, %v105
  %v133 = vpack.c.b16 %v109, %v106
  %v134 = vpack.c.b16 %v110, %v107
  %v135 = vpack.c.b16 %v114, %v111
  %v136 = vpack.c.b16 %v115, %v112
  %v137 = vpack.c.b16 %v116, %v113
  %v138 = vpack.c.b16 %v120, %v117
  %v139 = vpack.c.b16 %v121, %v118
  %v140 = vpack.c.b16 %v122, %v119
  %vm159 = vcmask 785408
  %v161 = vsel %vm159, %v62, 0
  %163 = vmatpush.bf16.msra.mxu0 0
  %164 = vmatpush.bf16.msra.mxu0 0
  %165 = vmatpush.bf16.msra.mxu0 %v138
  %166 = vmatpush.bf16.msra.mxu0 %v135
  %167 = vmatpush.bf16.msra.mxu0 %v132
  %168 = vmatpush.bf16.msra.mxu0 %v129
  %169 = vmatpush.bf16.msra.mxu0 %v126
  %170 = vmatpush.bf16.msra.mxu0 %v123
  %171 = vmatmul.bf16.gmra.mxu0 %v161
  %v172 = vpop.f32.mrf.mxu0
  %v173 = vadd.f32 0.0, %v172
  %v174 = vpop.f32.mrf.mxu0
  %v175 = vadd.f32 0.0, %v174
  %176 = vdwg.mxu0
  %177 = vmatpush.bf16.msra.mxu0 0
  %178 = vmatpush.bf16.msra.mxu0 0
  %179 = vmatpush.bf16.msra.mxu0 %v139
  %180 = vmatpush.bf16.msra.mxu0 %v136
  %181 = vmatpush.bf16.msra.mxu0 %v133
  %182 = vmatpush.bf16.msra.mxu0 %v130
  %183 = vmatpush.bf16.msra.mxu0 %v127
  %184 = vmatpush.bf16.msra.mxu0 %v124
  %185 = vmatmul.bf16.gmra.mxu0 %v161
  %v186 = vpop.f32.mrf.mxu0
  %v187 = vadd.f32 0.0, %v186
  %v188 = vpop.f32.mrf.mxu0
  %v189 = vadd.f32 0.0, %v188
  %190 = vdwg.mxu0
  %191 = vmatpush.bf16.msra.mxu0 0
  %192 = vmatpush.bf16.msra.mxu0 0
  %193 = vmatpush.bf16.msra.mxu0 %v140
  %194 = vmatpush.bf16.msra.mxu0 %v137
  %195 = vmatpush.bf16.msra.mxu0 %v134
  %196 = vmatpush.bf16.msra.mxu0 %v131
  %197 = vmatpush.bf16.msra.mxu0 %v128
  %198 = vmatpush.bf16.msra.mxu0 %v125
  %199 = vmatmul.bf16.gmra.mxu0 %v161
  %v200 = vpop.f32.mrf.mxu0
  %v201 = vadd.f32 0.0, %v200
  %v202 = vpop.f32.mrf.mxu0
  %v203 = vadd.f32 0.0, %v202
  %204 = vdwg.mxu0
  %v205 = vadd.f32 %v26, %v173
  %v206 = vadd.f32 %v27, %v187
  %v207 = vadd.f32 %v28, %v201
  %v208 = vadd.f32 %v29, %v175
  %v209 = vadd.f32 %v30, %v189
  %v210 = vadd.f32 %v31, %v203
  %211 = vst [vmem:[#allocation2] sm:$0xff] %v205
  %212 = vst [vmem:[#allocation2 + $0x8] sm:$0xff] %v206
  %vm213 = vcmask 261120
  %214 = vst.msk [vmem:[#allocation2 + $0x10] sm:$0xff] %vm213, %v207
  %215 = vst [vmem:[#allocation2 + $0x18] sm:$0xff] %v208
  %216 = vst [vmem:[#allocation2 + $0x20] sm:$0xff] %v209
  %217 = vst.msk [vmem:[#allocation2 + $0x28] sm:$0xff] %vm213, %v210
  // Predicated region
  $region18: #{kmer_bert_forward.13} parent=0 // pred_check
    %p218 = pneg %p15
  $region19: #{kmer_bert_forward.13} parent=0 // pred_check_branch
    %220 = sbr.rel (%p218) target = $region21
  $region20: #{kmer_bert_forward.13} parent=0 // pred_region
    %v221 = vld [vmem:[#allocation2] sm:$0xff]
    %v222 = vld [vmem:[#allocation2 + $0x8] sm:$0xff]
    %v223 = vld [vmem:[#allocation2 + $0x10] sm:$0xff]
    %v224 = vld [vmem:[#allocation2 + $0x18] sm:$0xff]
    %v225 = vld [vmem:[#allocation2 + $0x20] sm:$0xff]
    %v226 = vld [vmem:[#allocation2 + $0x28] sm:$0xff]
    %v227 = vld [vmem:[%s2] sm:$0x7]
    %v229 = vperm.slane %v227, 0
    %v230 = vperm.slane %v227, 1
    %v231 = vperm.slane %v227, 2
    %v235 = vadd.f32 %v221, %v229
    %v236 = vadd.f32 %v222, %v230
    %v237 = vadd.f32 %v223, %v231
    %v238 = vadd.f32 %v224, %v229
    %v239 = vadd.f32 %v225, %v230
    %v240 = vadd.f32 %v226, %v231
    %v241 = vpack.c.bf16 %v236, %v235
    %v242 = vpack.c.bf16 %v237, %v237
    %v243 = vpack.c.bf16 %v239, %v238
    %v244 = vpack.c.bf16 %v240, %v240
    %245 = vst [vmem:[%s3] sm:$0xff] %v241
    %vm246 = vcmask 257024
    %247 = vst.msk [vmem:[%s3 + $0x8] sm:$0xf] %vm246, %v242
    %248 = vst [vmem:[%s3 + $0xc] sm:$0xff] %v243
    %249 = vst.msk [vmem:[%s3 + $0x14] sm:$0xf] %vm246, %v244
  $region21: #{kmer_bert_forward.13} parent=0 // pred_fallthru
    _
  // Predicated region
  $region22: #{kmer_bert_forward.13} parent=0 // pred_check
    _
  $region23: #{kmer_bert_forward.13} parent=0 // pred_check_branch
    %251 = sbr.rel (0) target = $region25
  $region24: #{kmer_bert_forward.13} parent=0 // pred_region
    _
  $region25: #{kmer_bert_forward.13} parent=0 // pred_fallthru
    _
  // Predicated region
  $region26: #{kmer_bert_forward.13} parent=0 // pred_check
    _
  $region27: #{kmer_bert_forward.13} parent=0 // pred_check_branch
    %253 = sbr.rel (0) target = $region29
  $region28: #{kmer_bert_forward.13} parent=0 // pred_region
    _
  $region29: #{kmer_bert_forward.13} parent=0 // pred_fallthru
    _

// kernel: kmer_bert_forward.14
$region0: #{kmer_bert_forward.14}
  #allocation0 [shape = 'u32[]', space=smem, size = 0x4, offset = 0x4, fixed_abs, tag = 'smem constant byte address 0x4 - core index']
  #allocation1 [shape = 'u32[72,128]{1,0:T(1,128)}', space=vmem, size = 0x9000, scoped, tag = 'internal scratch']
  %s0 = inlined_call_operand.vmem [shape: bf16[2,8,288], index: 0, kind: input, shape index: {}]
  %s1 = inlined_call_operand.vmem [shape: f32[2,1,8], index: 1, kind: input, shape index: {}]
  %s2 = inlined_call_operand.vmem [shape: bf16[2,8,96], index: 2, kind: output, shape index: {}]
  %s3 = sld [smem:[#allocation0]]
  $region41: #{kmer_bert_forward.14} parent=0
    _
  %s5 = ssub.s32 1, %s3
  %s6 = scalar_select 0, %s5, %s3
  loop: start=0, step=1, limit=4
  $region2: #{kmer_bert_forward.14} parent=0 // loop_pre_header
    _
  $region3: #{kmer_bert_forward.14} parent=0 // loop_header
    %s8 = sphi 0, %s12
    %p9 = scmp.ge.s32.totalorder %s8, 4
    %s18 = sphi 0, %s20
    %s21 = sphi 0, %s18
    %s22 = sphi 0, %s21
    %s38 = sphi 0, %s22
    %s44 = sphi 0, %s46
    %s47 = sphi 0, %s44
    %s48 = sphi 0, %s47
    %s64 = sphi 0, %s48
    %s70 = sphi 0, %s72
    %s73 = sphi 0, %s70
    %s74 = sphi 0, %s73
    %s90 = sphi 0, %s74
  $region4: #{kmer_bert_forward.14} parent=0 // loop_header_branch
    %11 = sbr.rel (%p9) target = $region8
  $region5: #{kmer_bert_forward.14} parent=0 // loop_body
    %s13 = ssub.s32 %s8, 1
    %s14 = ssub.s32 %s8, 2
    %s15 = sadd.s32 %s8, 1
    %s16 = ssub.s32 %s8, %s15
    %p17 = scmp.eq.s32.totalorder %s16, 0
    %s19 = sadd.s32 %s18, 1
    %s20 = scalar_select %p17, %s18, %s19
    %p23 = pneg %p17
    %p24 = scmp.eq.s32.totalorder %s8, 1
    %p25 = por %p23, %p24
    %p26 = scmp.ne.s32.totalorder %s18, %s21
    %p27 = scmp.eq.s32.totalorder %s8, 0
    %p28 = por %p26, %p27
    %p29 = scmp.ne.s32.totalorder %s18, %s21
    %p30 = scmp.eq.s32.totalorder %s13, 1
    %p31 = por %p29, %p30
    %p32 = scmp.ne.s32.totalorder %s21, %s22
    %p33 = scmp.eq.s32.totalorder %s13, 0
    %p34 = por %p32, %p33
    %p35 = scmp.ne.s32.totalorder %s21, %s22
    %p36 = scmp.eq.s32.totalorder %s14, 1
    %p37 = por %p35, %p36
    %p39 = scmp.ne.s32.totalorder %s22, %s38
    %p40 = scmp.eq.s32.totalorder %s14, 0
    %p41 = por %p39, %p40
    %s42 = ssub.s32 %s8, %s15
    %p43 = scmp.eq.s32.totalorder %s42, 0
    %s45 = sadd.s32 %s44, 1
    %s46 = scalar_select %p43, %s44, %s45
    %p49 = pneg %p43
    %p50 = scmp.eq.s32.totalorder %s8, 1
    %p51 = por %p49, %p50
    %p52 = scmp.ne.s32.totalorder %s44, %s47
    %p53 = scmp.eq.s32.totalorder %s8, 0
    %p54 = por %p52, %p53
    %p55 = scmp.ne.s32.totalorder %s44, %s47
    %p56 = scmp.eq.s32.totalorder %s13, 1
    %p57 = por %p55, %p56
    %p58 = scmp.ne.s32.totalorder %s47, %s48
    %p59 = scmp.eq.s32.totalorder %s13, 0
    %p60 = por %p58, %p59
    %p61 = scmp.ne.s32.totalorder %s47, %s48
    %p62 = scmp.eq.s32.totalorder %s14, 1
    %p63 = por %p61, %p62
    %p65 = scmp.ne.s32.totalorder %s48, %s64
    %p66 = scmp.eq.s32.totalorder %s14, 0
    %p67 = por %p65, %p66
    %s68 = ssub.s32 %s8, %s15
    %p69 = scmp.eq.s32.totalorder %s68, 0
    %s71 = sadd.s32 %s70, 1
    %s72 = scalar_select %p69, %s70, %s71
    %p75 = pneg %p69
    %p76 = scmp.eq.s32.totalorder %s8, 1
    %p77 = por %p75, %p76
    %p78 = scmp.ne.s32.totalorder %s70, %s73
    %p79 = scmp.eq.s32.totalorder %s8, 0
    %p80 = por %p78, %p79
    %p81 = scmp.ne.s32.totalorder %s70, %s73
    %p82 = scmp.eq.s32.totalorder %s13, 1
    %p83 = por %p81, %p82
    %p84 = scmp.ne.s32.totalorder %s73, %s74
    %p85 = scmp.eq.s32.totalorder %s13, 0
    %p86 = por %p84, %p85
    %p87 = scmp.ne.s32.totalorder %s73, %s74
    %p88 = scmp.eq.s32.totalorder %s14, 1
    %p89 = por %p87, %p88
    %p91 = scmp.ne.s32.totalorder %s74, %s90
    %p92 = scmp.eq.s32.totalorder %s14, 0
    %p93 = por %p91, %p92
    %p94 = scmp.le.s32.totalorder 1, %s8
    %p95 = scmp.lt.s32.totalorder %s8, 3
    %p96 = pnand %p94, %p95
    %p97 = pneg %p96
    // Predicated region
    $region9: #{kmer_bert_forward.14} parent=5 // pred_check
      _
    $region10: #{kmer_bert_forward.14} parent=5 // pred_check_branch
      %99 = sbr.rel (%p96) target = $region12
    $region11: #{kmer_bert_forward.14} parent=5 // pred_region
      %s100 = ssub.s32 %s8, 1
    $region12: #{kmer_bert_forward.14} parent=5 // pred_fallthru
      _
    %p101 = scmp.lt.s32.totalorder %s8, 2
    // Predicated region
    $region13: #{kmer_bert_forward.14} parent=5 // pred_check
      %p102 = pneg %p101
    $region14: #{kmer_bert_forward.14} parent=5 // pred_check_branch
      %104 = sbr.rel (%p102) target = $region16
    $region15: #{kmer_bert_forward.14} parent=5 // pred_region
      // Predicated region
      $region17: #{kmer_bert_forward.14} parent=15 // pred_check
        %p105 = pneg %p28
      $region18: #{kmer_bert_forward.14} parent=15 // pred_check_branch
        %107 = sbr.rel (%p105) target = $region20
      $region19: #{kmer_bert_forward.14} parent=15 // pred_region
        %p108 = scmp.lt.s32.totalorder %s8, 1
        %s109 = scalar_select %p108, %s8, 1
        %s110 = smul.addr %s109, 3
        %s111 = smul.addr %s110, 4
        %s112 = scalar_lea.vmem %s0, %s111
      $region20: #{kmer_bert_forward.14} parent=15 // pred_fallthru
        _
      // Predicated region
      $region21: #{kmer_bert_forward.14} parent=15 // pred_check
        %p113 = pneg %p54
      $region22: #{kmer_bert_forward.14} parent=15 // pred_check_branch
        %115 = sbr.rel (%p113) target = $region24
      $region23: #{kmer_bert_forward.14} parent=15 // pred_region
        %p116 = scmp.lt.s32.totalorder %s8, 1
        %s117 = scalar_select %p116, %s8, 1
        %s118 = scalar_lea.vmem %s1, %s117
      $region24: #{kmer_bert_forward.14} parent=15 // pred_fallthru
        _
    $region16: #{kmer_bert_forward.14} parent=5 // pred_fallthru
      _
    %p119 = scmp.le.s32.totalorder 1, %s8
    %p120 = scmp.lt.s32.totalorder %s8, 3
    %p121 = pnand %p119, %p120
    %p122 = pneg %p121
    // Predicated region
    $region25: #{kmer_bert_forward.14} parent=5 // pred_check
      _
    $region26: #{kmer_bert_forward.14} parent=5 // pred_check_branch
      %124 = sbr.rel (%p121) target = $region28
    $region27: #{kmer_bert_forward.14} parent=5 // pred_region
      %s125 = ssub.s32 %s8, 1
      %p126 = scmp.lt.s32.totalorder %s13, 1
      %s127 = scalar_select %p126, %s13, 1
      %s128 = smul.addr %s127, 3
      %s129 = smul.addr %s128, 4
      %s130 = scalar_lea.vmem %s0, %s129
      %p131 = pneg %p34
      %p132 = pneg %p31
      %p133 = scmp.lt.s32.totalorder %s13, 1
      %s134 = scalar_select %p133, %s13, 1
      %s135 = scalar_lea.vmem %s1, %s134
      %p136 = pneg %p60
      %p137 = pneg %p57
      %p138 = pneg %p86
      %p139 = pneg %p83
      %p140 = scmp.lt.s32.totalorder %s13, 1
      %s141 = scalar_select %p140, %s13, 1
      %s142 = smul.addr %s141, 4
      %s143 = scalar_lea.vmem %s2, %s142
      %p144 = scmp.lt.s32.totalorder %s13, 1
      %s145 = scalar_select %p144, %s13, 1
      %s146 = smul.addr %s145, 3
      %s147 = smul.addr %s146, 4
      %s148 = scalar_lea.vmem %s0, %s147
      %p149 = scmp.lt.s32.totalorder %s13, 1
      %s150 = scalar_select %p149, %s13, 1
      %s151 = scalar_lea.vmem %s1, %s150
      %p152 = scmp.lt.s32.totalorder %s13, 1
      %s153 = scalar_select %p152, %s13, 1
      %s154 = smul.addr %s153, 4
      %s155 = scalar_lea.vmem %s2, %s154
      %v157 = vld [vmem:[%s148] sm:$0xff]
      %v158 = vld [vmem:[%s148 + $0x8] sm:$0xf]
      %v159 = vld [vmem:[%s151] sm:$0x1]
      %v160 = vunpack.c.l.bf16 %v157
      %v161 = vmul.f32 %v160, 0.35351563
      %v162 = vpack.c.bf16 %v161, %v161
      %v164 = vperm.slane %v159, 0
      %v167 = vunpack.c.l.b16 %v157
      %v168 = vpack.c.b16 %v167, %v167
      %169 = vrot.lane.b32.xlu0 %v168, 32
      %v170 = vpop.permute.xlu0 %169
      %vm171 = vcmask 64512
      %v173 = vsel %vm171, %v162, 0
      %v176 = vsel %vm171, %v170, 0
      %178 = vmatpush.bf16.xpose.msra.mxu0 0
      %179 = vmatpush.bf16.xpose.msra.mxu0 0
      %180 = vmatpush.bf16.xpose.msra.mxu0 0
      %181 = vmatpush.bf16.xpose.msra.mxu0 0
      %182 = vmatpush.bf16.xpose.msra.mxu0 0
      %183 = vmatpush.bf16.xpose.msra.mxu0 0
      %184 = vmatpush.bf16.xpose.msra.mxu0 0
      %185 = vmatpush.bf16.xpose.msra.mxu0 %v176
      %186 = vmatmul.bf16.gmra.mxu0 %v173
      %v187 = vpop.f32.mrf.mxu0
      %v188 = vadd.f32 %v164, %v187
      %v189 = vpop.f32.mrf.mxu0
      %190 = vdwg.mxu0
      %v191 = vsel %vm171, %v188, -inf
      %192 = vmax.xlane.f32.xlu0 %v191
      %v193 = vpop.xlane.xlu0 %192
      %v194 = vsub.f32 %v188, %v193
      %v195 = vmul.f32 %v194, 1.442695
      %v196 = vpow.pop %v195
      %v197 = vsel %vm171, %v196, 0.0
      %198 = vadd.xlane.f32.xlu0 %v197
      %v199 = vpop.xlane.xlu0 %198
      %v200 = vpack.c.bf16 %v196, %v196
      %v201 = vunpack.c.h.b16 %v157
      %v202 = vpack.c.b16 %v201, %v201
      %203 = vrot.lane.b32.xlu0 %v202, 64
      %v204 = vpop.permute.xlu0 %203
      %v206 = vsel %vm171, %v200, 0
      %vm208 = vcmask 1043456
      %v210 = vsel %vm208, %v204, 0
      %212 = vmatpush.bf16.msra.mxu0 0
      %213 = vmatpush.bf16.msra.mxu0 0
      %214 = vmatpush.bf16.msra.mxu0 0
      %215 = vmatpush.bf16.msra.mxu0 0
      %216 = vmatpush.bf16.msra.mxu0 0
      %217 = vmatpush.bf16.msra.mxu0 0
      %218 = vmatpush.bf16.msra.mxu0 0
      %219 = vmatpush.bf16.msra.mxu0 %v210
      %220 = vmatmul.bf16.gmra.mxu0 %v206
      %v221 = vpop.f32.mrf.mxu0
      %v222 = vadd.f32 0.0, %v221
      %v223 = vpop.f32.mrf.mxu0
      %224 = vdwg.mxu0
      %v225 = vrcp.pop %v199
      %v226 = vmul.f32 %v222, %v225
      %v227 = vpack.c.bf16 %v226, %v226
      %229 = vrot.lane.b32.xlu0 %v162, 120
      %v230 = vpop.permute.xlu0 %229
      %231 = vrot.lane.b32.xlu0 %v168, 24
      %v232 = vpop.permute.xlu0 %231
      %v234 = vsel %vm171, %v230, 0
      %v237 = vsel %vm171, %v232, 0
      %239 = vmatpush.bf16.xpose.msra.mxu0 0
      %240 = vmatpush.bf16.xpose.msra.mxu0 0
      %241 = vmatpush.bf16.xpose.msra.mxu0 0
      %242 = vmatpush.bf16.xpose.msra.mxu0 0
      %243 = vmatpush.bf16.xpose.msra.mxu0 0
      %244 = vmatpush.bf16.xpose.msra.mxu0 0
      %245 = vmatpush.bf16.xpose.msra.mxu0 0
      %246 = vmatpush.bf16.xpose.msra.mxu0 %v237
      %247 = vmatmul.bf16.gmra.mxu0 %v234
      %v248 = vpop.f32.mrf.mxu0
      %v249 = vadd.f32 %v164, %v248
      %v250 = vpop.f32.mrf.mxu0
      %251 = vdwg.mxu0
      %v252 = vsel %vm171, %v249, -inf
      %253 = vmax.xlane.f32.xlu0 %v252
      %v254 = vpop.xlane.xlu0 %253
      %v255 = vsub.f32 %v249, %v254
      %v256 = vmul.f32 %v255, 1.442695
      %v257 = vpow.pop %v256
      %v258 = vsel %vm171, %v257, 0.0
      %259 = vadd.xlane.f32.xlu0 %v258
      %v260 = vpop.xlane.xlu0 %259
      %v261 = vpack.c.bf16 %v257, %v257
      %262 = vrot.lane.b32.xlu0 %v202, 56
      %v263 = vpop.permute.xlu0 %262
      %v265 = vsel %vm171, %v261, 0
      %v268 = vsel %vm208, %v263, 0
      %270 = vmatpush.bf16.msra.mxu0 0
      %271 = vmatpush.bf16.msra.mxu0 0
      %272 = vmatpush.bf16.msra.mxu0 0
      %273 = vmatpush.bf16.msra.mxu0 0
      %274 = vmatpush.bf16.msra.mxu0 0
      %275 = vmatpush.bf16.msra.mxu0 0
      %276 = vmatpush.bf16.msra.mxu0 0
      %277 = vmatpush.bf16.msra.mxu0 %v268
      %278 = vmatmul.bf16.gmra.mxu0 %v265
      %v279 = vpop.f32.mrf.mxu0
      %v280 = vadd.f32 0.0, %v279
      %v281 = vpop.f32.mrf.mxu0
      %282 = vdwg.mxu0
      %v283 = vrcp.pop %v260
      %v284 = vmul.f32 %v280, %v283
      %v285 = vpack.c.bf16 %v284, %v284
      %286 = vrot.lane.b32.xlu0 %v162, 112
      %v287 = vpop.permute.xlu0 %286
      %288 = vrot.lane.b32.xlu0 %v168, 16
      %v289 = vpop.permute.xlu0 %288
      %v291 = vsel %vm171, %v287, 0
      %v294 = vsel %vm171, %v289, 0
      %296 = vmatpush.bf16.xpose.msra.mxu0 0
      %297 = vmatpush.bf16.xpose.msra.mxu0 0
      %298 = vmatpush.bf16.xpose.msra.mxu0 0
      %299 = vmatpush.bf16.xpose.msra.mxu0 0
      %300 = vmatpush.bf16.xpose.msra.mxu0 0
      %301 = vmatpush.bf16.xpose.msra.mxu0 0
      %302 = vmatpush.bf16.xpose.msra.mxu0 0
      %303 = vmatpush.bf16.xpose.msra.mxu0 %v294
      %304 = vmatmul.bf16.gmra.mxu0 %v291
      %v305 = vpop.f32.mrf.mxu0
      %v306 = vadd.f32 %v164, %v305
      %v307 = vpop.f32.mrf.mxu0
      %308 = vdwg.mxu0
      %v309 = vsel %vm171, %v306, -inf
      %310 = vmax.xlane.f32.xlu0 %v309
      %v311 = vpop.xlane.xlu0 %310
      %v312 = vsub.f32 %v306, %v311
      %v313 = vmul.f32 %v312, 1.442695
      %v314 = vpow.pop %v313
      %v315 = vsel %vm171, %v314, 0.0
      %316 = vadd.xlane.f32.xlu0 %v315
      %v317 = vpop.xlane.xlu0 %316
      %v318 = vpack.c.bf16 %v314, %v314
      %319 = vrot.lane.b32.xlu0 %v202, 48
      %v320 = vpop.permute.xlu0 %319
      %v322 = vsel %vm171, %v318, 0
      %v325 = vsel %vm208, %v320, 0
      %327 = vmatpush.bf16.msra.mxu0 0
      %328 = vmatpush.bf16.msra.mxu0 0
      %329 = vmatpush.bf16.msra.mxu0 0
      %330 = vmatpush.bf16.msra.mxu0 0
      %331 = vmatpush.bf16.msra.mxu0 0
      %332 = vmatpush.bf16.msra.mxu0 0
      %333 = vmatpush.bf16.msra.mxu0 0
      %334 = vmatpush.bf16.msra.mxu0 %v325
      %335 = vmatmul.bf16.gmra.mxu0 %v322
      %v336 = vpop.f32.mrf.mxu0
      %v337 = vadd.f32 0.0, %v336
      %v338 = vpop.f32.mrf.mxu0
      %339 = vdwg.mxu0
      %v340 = vrcp.pop %v317
      %v341 = vmul.f32 %v337, %v340
      %v342 = vpack.c.bf16 %v341, %v341
      %343 = vrot.lane.b32.xlu0 %v162, 104
      %v344 = vpop.permute.xlu0 %343
      %345 = vrot.lane.b32.xlu0 %v168, 8
      %v346 = vpop.permute.xlu0 %345
      %v348 = vsel %vm171, %v344, 0
      %v351 = vsel %vm171, %v346, 0
      %353 = vmatpush.bf16.xpose.msra.mxu0 0
      %354 = vmatpush.bf16.xpose.msra.mxu0 0
      %355 = vmatpush.bf16.xpose.msra.mxu0 0
      %356 = vmatpush.bf16.xpose.msra.mxu0 0
      %357 = vmatpush.bf16.xpose.msra.mxu0 0
      %358 = vmatpush.bf16.xpose.msra.mxu0 0
      %359 = vmatpush.bf16.xpose.msra.mxu0 0
      %360 = vmatpush.bf16.xpose.msra.mxu0 %v351
      %361 = vmatmul.bf16.gmra.mxu0 %v348
      %v362 = vpop.f32.mrf.mxu0
      %v363 = vadd.f32 %v164, %v362
      %v364 = vpop.f32.mrf.mxu0
      %365 = vdwg.mxu0
      %v366 = vsel %vm171, %v363, -inf
      %367 = vmax.xlane.f32.xlu0 %v366
      %v368 = vpop.xlane.xlu0 %367
      %v369 = vsub.f32 %v363, %v368
      %v370 = vmul.f32 %v369, 1.442695
      %v371 = vpow.pop %v370
      %v372 = vsel %vm171, %v371, 0.0
      %373 = vadd.xlane.f32.xlu0 %v372
      %v374 = vpop.xlane.xlu0 %373
      %v375 = vpack.c.bf16 %v371, %v371
      %376 = vrot.lane.b32.xlu0 %v202, 40
      %v377 = vpop.permute.xlu0 %376
      %v379 = vsel %vm171, %v375, 0
      %v382 = vsel %vm208, %v377, 0
      %384 = vmatpush.bf16.msra.mxu0 0
      %385 = vmatpush.bf16.msra.mxu0 0
      %386 = vmatpush.bf16.msra.mxu0 0
      %387 = vmatpush.bf16.msra.mxu0 0
      %388 = vmatpush.bf16.msra.mxu0 0
      %389 = vmatpush.bf16.msra.mxu0 0
      %390 = vmatpush.bf16.msra.mxu0 0
      %391 = vmatpush.bf16.msra.mxu0 %v382
      %392 = vmatmul.bf16.gmra.mxu0 %v379
      %v393 = vpop.f32.mrf.mxu0
      %v394 = vadd.f32 0.0, %v393
      %v395 = vpop.f32.mrf.mxu0
      %396 = vdwg.mxu0
      %v397 = vrcp.pop %v374
      %v398 = vmul.f32 %v394, %v397
      %v399 = vpack.c.bf16 %v398, %v398
      %400 = vrot.lane.b32.xlu0 %v162, 96
      %v401 = vpop.permute.xlu0 %400
      %v403 = vsel %vm171, %v401, 0
      %v406 = vsel %vm171, %v202, 0
      %408 = vmatpush.bf16.xpose.msra.mxu0 0
      %409 = vmatpush.bf16.xpose.msra.mxu0 0
      %410 = vmatpush.bf16.xpose.msra.mxu0 0
      %411 = vmatpush.bf16.xpose.msra.mxu0 0
      %412 = vmatpush.bf16.xpose.msra.mxu0 0
      %413 = vmatpush.bf16.xpose.msra.mxu0 0
      %414 = vmatpush.bf16.xpose.msra.mxu0 0
      %415 = vmatpush.bf16.xpose.msra.mxu0 %v406
      %416 = vmatmul.bf16.gmra.mxu0 %v403
      %v417 = vpop.f32.mrf.mxu0
      %v418 = vadd.f32 %v164, %v417
      %v419 = vpop.f32.mrf.mxu0
      %420 = vdwg.mxu0
      %v421 = vsel %vm171, %v418, -inf
      %422 = vmax.xlane.f32.xlu0 %v421
      %v423 = vpop.xlane.xlu0 %422
      %v424 = vsub.f32 %v418, %v423
      %v425 = vmul.f32 %v424, 1.442695
      %v426 = vpow.pop %v425
      %v427 = vsel %vm171, %v426, 0.0
      %428 = vadd.xlane.f32.xlu0 %v427
      %v429 = vpop.xlane.xlu0 %428
      %v430 = vpack.c.bf16 %v426, %v426
      %431 = vrot.lane.b32.xlu0 %v202, 32
      %v432 = vpop.permute.xlu0 %431
      %v434 = vsel %vm171, %v430, 0
      %v437 = vsel %vm208, %v432, 0
      %439 = vmatpush.bf16.msra.mxu0 0
      %440 = vmatpush.bf16.msra.mxu0 0
      %441 = vmatpush.bf16.msra.mxu0 0
      %442 = vmatpush.bf16.msra.mxu0 0
      %443 = vmatpush.bf16.msra.mxu0 0
      %444 = vmatpush.bf16.msra.mxu0 0
      %445 = vmatpush.bf16.msra.mxu0 0
      %446 = vmatpush.bf16.msra.mxu0 %v437
      %447 = vmatmul.bf16.gmra.mxu0 %v434
      %v448 = vpop.f32.mrf.mxu0
      %v449 = vadd.f32 0.0, %v448
      %v450 = vpop.f32.mrf.mxu0
      %451 = vdwg.mxu0
      %v452 = vrcp.pop %v429
      %v453 = vmul.f32 %v449, %v452
      %v454 = vpack.c.bf16 %v453, %v453
      %455 = vrot.lane.b32.xlu0 %v162, 88
      %v456 = vpop.permute.xlu0 %455
      %457 = vrot.lane.b32.xlu0 %v202, 120
      %v458 = vpop.permute.xlu0 %457
      %v460 = vsel %vm171, %v456, 0
      %v463 = vsel %vm171, %v458, 0
      %465 = vmatpush.bf16.xpose.msra.mxu0 0
      %466 = vmatpush.bf16.xpose.msra.mxu0 0
      %467 = vmatpush.bf16.xpose.msra.mxu0 0
      %468 = vmatpush.bf16.xpose.msra.mxu0 0
      %469 = vmatpush.bf16.xpose.msra.mxu0 0
      %470 = vmatpush.bf16.xpose.msra.mxu0 0
      %471 = vmatpush.bf16.xpose.msra.mxu0 0
      %472 = vmatpush.bf16.xpose.msra.mxu0 %v463
      %473 = vmatmul.bf16.gmra.mxu0 %v460
      %v474 = vpop.f32.mrf.mxu0
      %v475 = vadd.f32 %v164, %v474
      %v476 = vpop.f32.mrf.mxu0
      %477 = vdwg.mxu0
      %v478 = vsel %vm171, %v475, -inf
      %479 = vmax.xlane.f32.xlu0 %v478
      %v480 = vpop.xlane.xlu0 %479
      %v481 = vsub.f32 %v475, %v480
      %v482 = vmul.f32 %v481, 1.442695
      %v483 = vpow.pop %v482
      %v484 = vsel %vm171, %v483, 0.0
      %485 = vadd.xlane.f32.xlu0 %v484
      %v486 = vpop.xlane.xlu0 %485
      %v487 = vpack.c.bf16 %v483, %v483
      %488 = vrot.lane.b32.xlu0 %v202, 24
      %v489 = vpop.permute.xlu0 %488
      %v491 = vsel %vm171, %v487, 0
      %v494 = vsel %vm208, %v489, 0
      %496 = vmatpush.bf16.msra.mxu0 0
      %497 = vmatpush.bf16.msra.mxu0 0
      %498 = vmatpush.bf16.msra.mxu0 0
      %499 = vmatpush.bf16.msra.mxu0 0
      %500 = vmatpush.bf16.msra.mxu0 0
      %501 = vmatpush.bf16.msra.mxu0 0
      %502 = vmatpush.bf16.msra.mxu0 0
      %503 = vmatpush.bf16.msra.mxu0 %v494
      %504 = vmatmul.bf16.gmra.mxu0 %v491
      %v505 = vpop.f32.mrf.mxu0
      %v506 = vadd.f32 0.0, %v505
      %v507 = vpop.f32.mrf.mxu0
      %508 = vdwg.mxu0
      %v509 = vrcp.pop %v486
      %v510 = vmul.f32 %v506, %v509
      %v511 = vpack.c.bf16 %v510, %v510
      %512 = vrot.lane.b32.xlu0 %v162, 80
      %v513 = vpop.permute.xlu0 %512
      %514 = vrot.lane.b32.xlu0 %v202, 112
      %v515 = vpop.permute.xlu0 %514
      %v517 = vsel %vm171, %v513, 0
      %v520 = vsel %vm171, %v515, 0
      %522 = vmatpush.bf16.xpose.msra.mxu0 0
      %523 = vmatpush.bf16.xpose.msra.mxu0 0
      %524 = vmatpush.bf16.xpose.msra.mxu0 0
      %525 = vmatpush.bf16.xpose.msra.mxu0 0
      %526 = vmatpush.bf16.xpose.msra.mxu0 0
      %527 = vmatpush.bf16.xpose.msra.mxu0 0
      %528 = vmatpush.bf16.xpose.msra.mxu0 0
      %529 = vmatpush.bf16.xpose.msra.mxu0 %v520
      %530 = vmatmul.bf16.gmra.mxu0 %v517
      %v531 = vpop.f32.mrf.mxu0
      %v532 = vadd.f32 %v164, %v531
      %v533 = vpop.f32.mrf.mxu0
      %534 = vdwg.mxu0
      %v535 = vsel %vm171, %v532, -inf
      %536 = vmax.xlane.f32.xlu0 %v535
      %v537 = vpop.xlane.xlu0 %536
      %v538 = vsub.f32 %v532, %v537
      %v539 = vmul.f32 %v538, 1.442695
      %v540 = vpow.pop %v539
      %v541 = vsel %vm171, %v540, 0.0
      %542 = vadd.xlane.f32.xlu0 %v541
      %v543 = vpop.xlane.xlu0 %542
      %v544 = vpack.c.bf16 %v540, %v540
      %545 = vrot.lane.b32.xlu0 %v202, 16
      %v546 = vpop.permute.xlu0 %545
      %v548 = vsel %vm171, %v544, 0
      %v551 = vsel %vm208, %v546, 0
      %553 = vmatpush.bf16.msra.mxu0 0
      %554 = vmatpush.bf16.msra.mxu0 0
      %555 = vmatpush.bf16.msra.mxu0 0
      %556 = vmatpush.bf16.msra.mxu0 0
      %557 = vmatpush.bf16.msra.mxu0 0
      %558 = vmatpush.bf16.msra.mxu0 0
      %559 = vmatpush.bf16.msra.mxu0 0
      %560 = vmatpush.bf16.msra.mxu0 %v551
      %561 = vmatmul.bf16.gmra.mxu0 %v548
      %v562 = vpop.f32.mrf.mxu0
      %v563 = vadd.f32 0.0, %v562
      %v564 = vpop.f32.mrf.mxu0
      %565 = vdwg.mxu0
      %v566 = vrcp.pop %v543
      %v567 = vmul.f32 %v563, %v566
      %v568 = vpack.c.bf16 %v567, %v567
      %569 = vrot.lane.b32.xlu0 %v162, 72
      %v570 = vpop.permute.xlu0 %569
      %571 = vrot.lane.b32.xlu0 %v202, 104
      %v572 = vpop.permute.xlu0 %571
      %v574 = vsel %vm171, %v570, 0
      %v577 = vsel %vm171, %v572, 0
      %579 = vmatpush.bf16.xpose.msra.mxu0 0
      %580 = vmatpush.bf16.xpose.msra.mxu0 0
      %581 = vmatpush.bf16.xpose.msra.mxu0 0
      %582 = vmatpush.bf16.xpose.msra.mxu0 0
      %583 = vmatpush.bf16.xpose.msra.mxu0 0
      %584 = vmatpush.bf16.xpose.msra.mxu0 0
      %585 = vmatpush.bf16.xpose.msra.mxu0 0
      %586 = vmatpush.bf16.xpose.msra.mxu0 %v577
      %587 = vmatmul.bf16.gmra.mxu0 %v574
      %v588 = vpop.f32.mrf.mxu0
      %v589 = vadd.f32 %v164, %v588
      %v590 = vpop.f32.mrf.mxu0
      %591 = vdwg.mxu0
      %v592 = vsel %vm171, %v589, -inf
      %593 = vmax.xlane.f32.xlu0 %v592
      %v594 = vpop.xlane.xlu0 %593
      %v595 = vsub.f32 %v589, %v594
      %v596 = vmul.f32 %v595, 1.442695
      %v597 = vpow.pop %v596
      %v598 = vsel %vm171, %v597, 0.0
      %599 = vadd.xlane.f32.xlu0 %v598
      %v600 = vpop.xlane.xlu0 %599
      %v601 = vpack.c.bf16 %v597, %v597
      %602 = vrot.lane.b32.xlu0 %v202, 8
      %v603 = vpop.permute.xlu0 %602
      %v605 = vsel %vm171, %v601, 0
      %v608 = vsel %vm208, %v603, 0
      %610 = vmatpush.bf16.msra.mxu0 0
      %611 = vmatpush.bf16.msra.mxu0 0
      %612 = vmatpush.bf16.msra.mxu0 0
      %613 = vmatpush.bf16.msra.mxu0 0
      %614 = vmatpush.bf16.msra.mxu0 0
      %615 = vmatpush.bf16.msra.mxu0 0
      %616 = vmatpush.bf16.msra.mxu0 0
      %617 = vmatpush.bf16.msra.mxu0 %v608
      %618 = vmatmul.bf16.gmra.mxu0 %v605
      %v619 = vpop.f32.mrf.mxu0
      %v620 = vadd.f32 0.0, %v619
      %v621 = vpop.f32.mrf.mxu0
      %622 = vdwg.mxu0
      %v623 = vrcp.pop %v600
      %v624 = vmul.f32 %v620, %v623
      %v625 = vpack.c.bf16 %v624, %v624
      %626 = vrot.lane.b32.xlu0 %v162, 64
      %v627 = vpop.permute.xlu0 %626
      %628 = vrot.lane.b32.xlu0 %v202, 96
      %v629 = vpop.permute.xlu0 %628
      %v631 = vsel %vm171, %v627, 0
      %v634 = vsel %vm171, %v629, 0
      %636 = vmatpush.bf16.xpose.msra.mxu0 0
      %637 = vmatpush.bf16.xpose.msra.mxu0 0
      %638 = vmatpush.bf16.xpose.msra.mxu0 0
      %639 = vmatpush.bf16.xpose.msra.mxu0 0
      %640 = vmatpush.bf16.xpose.msra.mxu0 0
      %641 = vmatpush.bf16.xpose.msra.mxu0 0
      %642 = vmatpush.bf16.xpose.msra.mxu0 0
      %643 = vmatpush.bf16.xpose.msra.mxu0 %v634
      %644 = vmatmul.bf16.gmra.mxu0 %v631
      %v645 = vpop.f32.mrf.mxu0
      %v646 = vadd.f32 %v164, %v645
      %v647 = vpop.f32.mrf.mxu0
      %648 = vdwg.mxu0
      %v649 = vsel %vm171, %v646, -inf
      %650 = vmax.xlane.f32.xlu0 %v649
      %v651 = vpop.xlane.xlu0 %650
      %v652 = vsub.f32 %v646, %v651
      %v653 = vmul.f32 %v652, 1.442695
      %v654 = vpow.pop %v653
      %v655 = vsel %vm171, %v654, 0.0
      %656 = vadd.xlane.f32.xlu0 %v655
      %v657 = vpop.xlane.xlu0 %656
      %v658 = vpack.c.bf16 %v654, %v654
      %v660 = vsel %vm171, %v658, 0
      %v663 = vsel %vm208, %v158, 0
      %665 = vmatpush.bf16.msra.mxu0 0
      %666 = vmatpush.bf16.msra.mxu0 0
      %667 = vmatpush.bf16.msra.mxu0 0
      %668 = vmatpush.bf16.msra.mxu0 0
      %669 = vmatpush.bf16.msra.mxu0 0
      %670 = vmatpush.bf16.msra.mxu0 0
      %671 = vmatpush.bf16.msra.mxu0 0
      %672 = vmatpush.bf16.msra.mxu0 %v663
      %673 = vmatmul.bf16.gmra.mxu0 %v660
      %v674 = vpop.f32.mrf.mxu0
      %v675 = vadd.f32 0.0, %v674
      %v676 = vpop.f32.mrf.mxu0
      %677 = vdwg.mxu0
      %v678 = vrcp.pop %v657
      %v679 = vmul.f32 %v675, %v678
      %v680 = vpack.c.bf16 %v679, %v679
      %681 = vrot.lane.b32.xlu0 %v162, 56
      %v682 = vpop.permute.xlu0 %681
      %683 = vrot.lane.b32.xlu0 %v202, 88
      %v684 = vpop.permute.xlu0 %683
      %v686 = vsel %vm171, %v682, 0
      %v689 = vsel %vm171, %v684, 0
      %691 = vmatpush.bf16.xpose.msra.mxu0 0
      %692 = vmatpush.bf16.xpose.msra.mxu0 0
      %693 = vmatpush.bf16.xpose.msra.mxu0 0
      %694 = vmatpush.bf16.xpose.msra.mxu0 0
      %695 = vmatpush.bf16.xpose.msra.mxu0 0
      %696 = vmatpush.bf16.xpose.msra.mxu0 0
      %697 = vmatpush.bf16.xpose.msra.mxu0 0
      %698 = vmatpush.bf16.xpose.msra.mxu0 %v689
      %699 = vmatmul.bf16.gmra.mxu0 %v686
      %v700 = vpop.f32.mrf.mxu0
      %v701 = vadd.f32 %v164, %v700
      %v702 = vpop.f32.mrf.mxu0
      %703 = vdwg.mxu0
      %v704 = vsel %vm171, %v701, -inf
      %705 = vmax.xlane.f32.xlu0 %v704
      %v706 = vpop.xlane.xlu0 %705
      %v707 = vsub.f32 %v701, %v706
      %v708 = vmul.f32 %v707, 1.442695
      %v709 = vpow.pop %v708
      %v710 = vsel %vm171, %v709, 0.0
      %711 = vadd.xlane.f32.xlu0 %v710
      %v712 = vpop.xlane.xlu0 %711
      %v713 = vpack.c.bf16 %v709, %v709
      %v715 = vunpack.c.l.b16 %v158
      %v716 = vpack.c.b16 %v715, %v715
      %717 = vrot.lane.b32.xlu0 %v716, 120
      %v718 = vpop.permute.xlu0 %717
      %v720 = vsel %vm171, %v713, 0
      %v723 = vsel %vm208, %v718, 0
      %725 = vmatpush.bf16.msra.mxu0 0
      %726 = vmatpush.bf16.msra.mxu0 0
      %727 = vmatpush.bf16.msra.mxu0 0
      %728 = vmatpush.bf16.msra.mxu0 0
      %729 = vmatpush.bf16.msra.mxu0 0
      %730 = vmatpush.bf16.msra.mxu0 0
      %731 = vmatpush.bf16.msra.mxu0 0
      %732 = vmatpush.bf16.msra.mxu0 %v723
      %733 = vmatmul.bf16.gmra.mxu0 %v720
      %v734 = vpop.f32.mrf.mxu0
      %v735 = vadd.f32 0.0, %v734
      %v736 = vpop.f32.mrf.mxu0
      %737 = vdwg.mxu0
      %v738 = vrcp.pop %v712
      %v739 = vmul.f32 %v735, %v738
      %v740 = vpack.c.bf16 %v739, %v739
      %741 = vrot.lane.b32.xlu0 %v162, 48
      %v742 = vpop.permute.xlu0 %741
      %743 = vrot.lane.b32.xlu0 %v202, 80
      %v744 = vpop.permute.xlu0 %743
      %v746 = vsel %vm171, %v742, 0
      %v749 = vsel %vm171, %v744, 0
      %751 = vmatpush.bf16.xpose.msra.mxu0 0
      %752 = vmatpush.bf16.xpose.msra.mxu0 0
      %753 = vmatpush.bf16.xpose.msra.mxu0 0
      %754 = vmatpush.bf16.xpose.msra.mxu0 0
      %755 = vmatpush.bf16.xpose.msra.mxu0 0
      %756 = vmatpush.bf16.xpose.msra.mxu0 0
      %757 = vmatpush.bf16.xpose.msra.mxu0 0
      %758 = vmatpush.bf16.xpose.msra.mxu0 %v749
      %759 = vmatmul.bf16.gmra.mxu0 %v746
      %v760 = vpop.f32.mrf.mxu0
      %v761 = vadd.f32 %v164, %v760
      %v762 = vpop.f32.mrf.mxu0
      %763 = vdwg.mxu0
      %v764 = vsel %vm171, %v761, -inf
      %765 = vmax.xlane.f32.xlu0 %v764
      %v766 = vpop.xlane.xlu0 %765
      %v767 = vsub.f32 %v761, %v766
      %v768 = vmul.f32 %v767, 1.442695
      %v769 = vpow.pop %v768
      %v770 = vsel %vm171, %v769, 0.0
      %771 = vadd.xlane.f32.xlu0 %v770
      %v772 = vpop.xlane.xlu0 %771
      %v773 = vpack.c.bf16 %v769, %v769
      %774 = vrot.lane.b32.xlu0 %v716, 112
      %v775 = vpop.permute.xlu0 %774
      %v777 = vsel %vm171, %v773, 0
      %v780 = vsel %vm208, %v775, 0
      %782 = vmatpush.bf16.msra.mxu0 0
      %783 = vmatpush.bf16.msra.mxu0 0
      %784 = vmatpush.bf16.msra.mxu0 0
      %785 = vmatpush.bf16.msra.mxu0 0
      %786 = vmatpush.bf16.msra.mxu0 0
      %787 = vmatpush.bf16.msra.mxu0 0
      %788 = vmatpush.bf16.msra.mxu0 0
      %789 = vmatpush.bf16.msra.mxu0 %v780
      %790 = vmatmul.bf16.gmra.mxu0 %v777
      %v791 = vpop.f32.mrf.mxu0
      %v792 = vadd.f32 0.0, %v791
      %v793 = vpop.f32.mrf.mxu0
      %794 = vdwg.mxu0
      %v795 = vrcp.pop %v772
      %v796 = vmul.f32 %v792, %v795
      %v797 = vpack.c.bf16 %v796, %v796
      %798 = vrot.lane.b32.xlu0 %v162, 40
      %v799 = vpop.permute.xlu0 %798
      %800 = vrot.lane.b32.xlu0 %v202, 72
      %v801 = vpop.permute.xlu0 %800
      %v803 = vsel %vm171, %v799, 0
      %v806 = vsel %vm171, %v801, 0
      %808 = vmatpush.bf16.xpose.msra.mxu0 0
      %809 = vmatpush.bf16.xpose.msra.mxu0 0
      %810 = vmatpush.bf16.xpose.msra.mxu0 0
      %811 = vmatpush.bf16.xpose.msra.mxu0 0
      %812 = vmatpush.bf16.xpose.msra.mxu0 0
      %813 = vmatpush.bf16.xpose.msra.mxu0 0
      %814 = vmatpush.bf16.xpose.msra.mxu0 0
      %815 = vmatpush.bf16.xpose.msra.mxu0 %v806
      %816 = vmatmul.bf16.gmra.mxu0 %v803
      %v817 = vpop.f32.mrf.mxu0
      %v818 = vadd.f32 %v164, %v817
      %v819 = vpop.f32.mrf.mxu0
      %820 = vdwg.mxu0
      %v821 = vsel %vm171, %v818, -inf
      %822 = vmax.xlane.f32.xlu0 %v821
      %v823 = vpop.xlane.xlu0 %822
      %v824 = vsub.f32 %v818, %v823
      %v825 = vmul.f32 %v824, 1.442695
      %v826 = vpow.pop %v825
      %v827 = vsel %vm171, %v826, 0.0
      %828 = vadd.xlane.f32.xlu0 %v827
      %v829 = vpop.xlane.xlu0 %828
      %v830 = vpack.c.bf16 %v826, %v826
      %831 = vrot.lane.b32.xlu0 %v716, 104
      %v832 = vpop.permute.xlu0 %831
      %v834 = vsel %vm171, %v830, 0
      %v837 = vsel %vm208, %v832, 0
      %839 = vmatpush.bf16.msra.mxu0 0
      %840 = vmatpush.bf16.msra.mxu0 0
      %841 = vmatpush.bf16.msra.mxu0 0
      %842 = vmatpush.bf16.msra.mxu0 0
      %843 = vmatpush.bf16.msra.mxu0 0
      %844 = vmatpush.bf16.msra.mxu0 0
      %845 = vmatpush.bf16.msra.mxu0 0
      %846 = vmatpush.bf16.msra.mxu0 %v837
      %847 = vmatmul.bf16.gmra.mxu0 %v834
      %v848 = vpop.f32.mrf.mxu0
      %v849 = vadd.f32 0.0, %v848
      %v850 = vpop.f32.mrf.mxu0
      %851 = vdwg.mxu0
      %v852 = vrcp.pop %v829
      %v853 = vmul.f32 %v849, %v852
      %v854 = vpack.c.bf16 %v853, %v853
      %v856 = vunpack.c.l.b16 %v285
      %v857 = vpack.c.b16 %v856, %v856
      %858 = vrot.lane.b32.xlu0 %v857, 8
      %v859 = vpop.permute.xlu0 %858
      %v861 = vunpack.c.l.b16 %v342
      %v862 = vpack.c.b16 %v861, %v861
      %863 = vrot.lane.b32.xlu0 %v862, 16
      %v864 = vpop.permute.xlu0 %863
      %v866 = vunpack.c.l.b16 %v399
      %v867 = vpack.c.b16 %v866, %v866
      %868 = vrot.lane.b32.xlu0 %v867, 24
      %v869 = vpop.permute.xlu0 %868
      %v871 = vunpack.c.l.b16 %v454
      %v872 = vpack.c.b16 %v871, %v871
      %873 = vrot.lane.b32.xlu0 %v872, 32
      %v874 = vpop.permute.xlu0 %873
      %v876 = vunpack.c.l.b16 %v511
      %v877 = vpack.c.b16 %v876, %v876
      %878 = vrot.lane.b32.xlu0 %v877, 40
      %v879 = vpop.permute.xlu0 %878
      %v881 = vunpack.c.l.b16 %v568
      %v882 = vpack.c.b16 %v881, %v881
      %883 = vrot.lane.b32.xlu0 %v882, 48
      %v884 = vpop.permute.xlu0 %883
      %v886 = vunpack.c.l.b16 %v625
      %v887 = vpack.c.b16 %v886, %v886
      %888 = vrot.lane.b32.xlu0 %v887, 56
      %v889 = vpop.permute.xlu0 %888
      %v891 = vunpack.c.l.b16 %v680
      %v892 = vpack.c.b16 %v891, %v891
      %893 = vrot.lane.b32.xlu0 %v892, 64
      %v894 = vpop.permute.xlu0 %893
      %v896 = vunpack.c.l.b16 %v740
      %v897 = vpack.c.b16 %v896, %v896
      %898 = vrot.lane.b32.xlu0 %v897, 72
      %v899 = vpop.permute.xlu0 %898
      %v901 = vunpack.c.l.b16 %v797
      %v902 = vpack.c.b16 %v901, %v901
      %903 = vrot.lane.b32.xlu0 %v902, 80
      %v904 = vpop.permute.xlu0 %903
      %v906 = vunpack.c.l.b16 %v854
      %v907 = vpack.c.b16 %v906, %v906
      %908 = vrot.lane.b32.xlu0 %v907, 88
      %v909 = vpop.permute.xlu0 %908
      %v912 = vsel %vm171, %v227, %v859
      %vm913 = vcmask 130048
      %v915 = vsel %vm913, %v912, %v864
      %vm916 = vcmask 195584
      %v918 = vsel %vm916, %v915, %v869
      %vm919 = vcmask 261120
      %v921 = vsel %vm919, %v918, %v874
      %vm922 = vcmask 326656
      %v924 = vsel %vm922, %v921, %v879
      %vm925 = vcmask 392192
      %v927 = vsel %vm925, %v924, %v884
      %vm928 = vcmask 457728
      %v930 = vsel %vm928, %v927, %v889
      %vm931 = vcmask 523264
      %v933 = vsel %vm931, %v930, %v894
      %vm934 = vcmask 588800
      %v936 = vsel %vm934, %v933, %v899
      %vm937 = vcmask 654336
      %v939 = vsel %vm937, %v936, %v904
      %vm940 = vcmask 719872
      %v942 = vsel %vm940, %v939, %v909
      %vm944 = vcmask 781312
      %945 = vst.msk [vmem:[%s155] sm:$0xf] %vm944, %v942
      %p946 = scmp.lt.s32.totalorder %s13, 1
      %s947 = scalar_select %p946, %s13, 1
      %s948 = smul.addr %s947, 4
      %s949 = scalar_lea.vmem %s2, %s948
      // Predicated region
      $region29: #{kmer_bert_forward.14} parent=27 // pred_check
        %p950 = pneg %p83
      $region30: #{kmer_bert_forward.14} parent=27 // pred_check_branch
        %952 = sbr.rel (%p950) target = $region32
      $region31: #{kmer_bert_forward.14} parent=27 // pred_region
        _
      $region32: #{kmer_bert_forward.14} parent=27 // pred_fallthru
        _
    $region28: #{kmer_bert_forward.14} parent=5 // pred_fallthru
      _
    %p953 = scmp.le.s32.totalorder 2, %s8
    // Predicated region
    $region33: #{kmer_bert_forward.14} parent=5 // pred_check
      %p954 = pneg %p953
    $region34: #{kmer_bert_forward.14} parent=5 // pred_check_branch
      %956 = sbr.rel (%p954) target = $region36
    $region35: #{kmer_bert_forward.14} parent=5 // pred_region
      %s957 = ssub.s32 %s8, 2
      // Predicated region
      $region37: #{kmer_bert_forward.14} parent=35 // pred_check
        %p958 = pneg %p89
      $region38: #{kmer_bert_forward.14} parent=35 // pred_check_branch
        %960 = sbr.rel (%p958) target = $region40
      $region39: #{kmer_bert_forward.14} parent=35 // pred_region
        %p961 = scmp.lt.s32.totalorder %s14, 1
        %s962 = scalar_select %p961, %s14, 1
        %s963 = smul.addr %s962, 4
        %s964 = scalar_lea.vmem %s2, %s963
      $region40: #{kmer_bert_forward.14} parent=35 // pred_fallthru
        _
    $region36: #{kmer_bert_forward.14} parent=5 // pred_fallthru
      _
  $region6: #{kmer_bert_forward.14} parent=0 // loop_footer
    %s12 = sadd.s32 1, %s8
  $region7: #{kmer_bert_forward.14} parent=0 // loop_footer_branch
    %7 = sbr.rel target = $region3
  $region8: #{kmer_bert_forward.14} parent=0 // loop_exit
    _

// kernel: kmer_bert_forward.16
$region0: #{kmer_bert_forward.16}
  #allocation0 [shape = 'u32[]', space=smem, size = 0x4, offset = 0x4, fixed_abs, tag = 'smem constant byte address 0x4 - core index']
  #allocation1 [shape = 'u32[72,128]{1,0:T(1,128)}', space=vmem, size = 0x9000, scoped, tag = 'internal scratch']
  #allocation2 [shape = 'f32[16,384]{1,0:T(8,128)}', space=vmem, size = 0x6000, scoped, tag = 'scratch operand']
  %s0 = inlined_call_operand.vmem [shape: bf16[16,96], index: 0, kind: input, shape index: {}]
  %s1 = inlined_call_operand.hbm [shape: bf16[96,384], index: 1, kind: input, shape index: {}]
  %s2 = inlined_call_operand.vmem [shape: f32[1,384], index: 2, kind: input, shape index: {}]
  %s3 = inlined_call_operand.vmem [shape: bf16[16,384], index: 3, kind: output, shape index: {}]
  %s4 = sld [smem:[#allocation0]]
  $region34: #{kmer_bert_forward.16} parent=0
    _
  %s6 = ssub.s32 1, %s4
  %s7 = scalar_select 0, %s6, %s4
  $region1: #{kmer_bert_forward.16} parent=0
    #allocation3 [shape = 'u8[73728]{0}', space=vmem, size = 0x12000, scoped, tag = 'input window, operand 1, single buffered']
    #allocation4 [shape = 's32[1]{0}', space=sflag, size = 0x4, scoped, tag = 'scoped memory for kmer_bert_forward.16']
    %8 = vsyncpa [#allocation4], 0
    // Predicated region
    $region2: #{kmer_bert_forward.16} parent=1 // pred_check
      _
    $region3: #{kmer_bert_forward.16} parent=1 // pred_check_branch
      %10 = sbr.rel (0) target = $region5
    $region4: #{kmer_bert_forward.16} parent=1 // pred_region
      _
    $region5: #{kmer_bert_forward.16} parent=1 // pred_fallthru
      _
    // Predicated region
    $region6: #{kmer_bert_forward.16} parent=1 // pred_check
      _
    $region7: #{kmer_bert_forward.16} parent=1 // pred_check_branch
      %12 = sbr.rel (0) target = $region9
    $region8: #{kmer_bert_forward.16} parent=1 // pred_region
      %14 = vsyncadd [#allocation4], 0
      %s15 = sshll.u32 %s1, 4
      %s16 = int_to_ptr.hbm [resolvable:$true] %s15
      %s17 = sshll.u32 [#allocation3], 4
      %s18 = int_to_ptr.vmem [resolvable:$true] %s17
      %23 = dma.hbm_to_vmem [thread:$0]  %s16, 2304, %s18, [#allocation4], 192, 192, 12
    $region9: #{kmer_bert_forward.16} parent=1 // pred_fallthru
      _
    // Predicated region
    $region10: #{kmer_bert_forward.16} parent=1 // pred_check
      _
    $region11: #{kmer_bert_forward.16} parent=1 // pred_check_branch
      %25 = sbr.rel (0) target = $region13
    $region12: #{kmer_bert_forward.16} parent=1 // pred_region
      _
    $region13: #{kmer_bert_forward.16} parent=1 // pred_fallthru
      _
    // Predicated region
    $region14: #{kmer_bert_forward.16} parent=1 // pred_check
      _
    $region15: #{kmer_bert_forward.16} parent=1 // pred_check_branch
      %27 = sbr.rel (0) target = $region17
    $region16: #{kmer_bert_forward.16} parent=1 // pred_region
      %29 = dma.done [#allocation4], 2304
    $region17: #{kmer_bert_forward.16} parent=1 // pred_fallthru
      _
    %p31 = scmp.eq.s32.totalorder 0, 0
    // Predicated region
    $region18: #{kmer_bert_forward.16} parent=1 // pred_check
      %p32 = pneg %p31
    $region19: #{kmer_bert_forward.16} parent=1 // pred_check_branch
      %34 = sbr.rel (%p32) target = $region21
    $region20: #{kmer_bert_forward.16} parent=1 // pred_region
      %35 = vst [vmem:[#allocation2] sm:$0xff] 0.0
      %36 = vst [vmem:[#allocation2 + $0x8] sm:$0xff] 0.0
      %37 = vst [vmem:[#allocation2 + $0x10] sm:$0xff] 0.0
      %38 = vst [vmem:[#allocation2 + $0x18] sm:$0xff] 0.0
      %39 = vst [vmem:[#allocation2 + $0x20] sm:$0xff] 0.0
      %40 = vst [vmem:[#allocation2 + $0x28] sm:$0xff] 0.0
    $region21: #{kmer_bert_forward.16} parent=1 // pred_fallthru
      _
    %v41 = vld [vmem:[#allocation2] sm:$0xff]
    %v42 = vld [vmem:[#allocation2 + $0x8] sm:$0xff]
    %v43 = vld [vmem:[#allocation2 + $0x10] sm:$0xff]
    %v44 = vld [vmem:[#allocation2 + $0x18] sm:$0xff]
    %v45 = vld [vmem:[#allocation2 + $0x20] sm:$0xff]
    %v46 = vld [vmem:[#allocation2 + $0x28] sm:$0xff]
    %v47 = vld [vmem:[%s0] sm:$0xf]
    %v48 = vld [vmem:[%s0 + $0x4] sm:$0xf]
    %v49 = vld [vmem:[#allocation3] sm:$0xff]
    %v50 = vld [vmem:[#allocation3 + $0x8] sm:$0xf]
    %v51 = vld [vmem:[#allocation3 + $0xc] sm:$0xff]
    %v52 = vld [vmem:[#allocation3 + $0x14] sm:$0xf]
    %v53 = vld [vmem:[#allocation3 + $0x18] sm:$0xff]
    %v54 = vld [vmem:[#allocation3 + $0x20] sm:$0xf]
    %v55 = vld [vmem:[#allocation3 + $0x24] sm:$0xff]
    %v56 = vld [vmem:[#allocation3 + $0x2c] sm:$0xf]
    %v57 = vld [vmem:[#allocation3 + $0x30] sm:$0xff]
    %v58 = vld [vmem:[#allocation3 + $0x38] sm:$0xf]
    %v59 = vld [vmem:[#allocation3 + $0x3c] sm:$0xff]
    %v60 = vld [vmem:[#allocation3 + $0x44] sm:$0xf]
    %v61 = vld [vmem:[#allocation3 + $0x48] sm:$0xff]
    %v62 = vld [vmem:[#allocation3 + $0x50] sm:$0xf]
    %v63 = vld [vmem:[#allocation3 + $0x54] sm:$0xff]
    %v64 = vld [vmem:[#allocation3 + $0x5c] sm:$0xf]
    %v65 = vld [vmem:[#allocation3 + $0x60] sm:$0xff]
    %v66 = vld [vmem:[#allocation3 + $0x68] sm:$0xf]
    %v67 = vld [vmem:[#allocation3 + $0x6c] sm:$0xff]
    %v68 = vld [vmem:[#allocation3 + $0x74] sm:$0xf]
    %v69 = vld [vmem:[#allocation3 + $0x78] sm:$0xff]
    %v70 = vld [vmem:[#allocation3 + $0x80] sm:$0xf]
    %v71 = vld [vmem:[#allocation3 + $0x84] sm:$0xff]
    %v72 = vld [vmem:[#allocation3 + $0x8c] sm:$0xf]
    %v75 = vunpack.c.l.b16 %v47
    %v76 = vunpack.c.l.b16 %v48
    %v77 = vpack.c.b16 %v76, %v75
    %v102 = vunpack.c.l.b16 %v49
    %v103 = vunpack.c.h.b16 %v49
    %v104 = vunpack.c.l.b16 %v50
    %v105 = vunpack.c.l.b16 %v51
    %v106 = vunpack.c.h.b16 %v51
    %v107 = vunpack.c.l.b16 %v52
    %v108 = vunpack.c.l.b16 %v53
    %v109 = vunpack.c.h.b16 %v53
    %v110 = vunpack.c.l.b16 %v54
    %v111 = vunpack.c.l.b16 %v55
    %v112 = vunpack.c.h.b16 %v55
    %v113 = vunpack.c.l.b16 %v56
    %v114 = vunpack.c.l.b16 %v57
    %v115 = vunpack.c.h.b16 %v57
    %v116 = vunpack.c.l.b16 %v58
    %v117 = vunpack.c.l.b16 %v59
    %v118 = vunpack.c.h.b16 %v59
    %v119 = vunpack.c.l.b16 %v60
    %v120 = vunpack.c.l.b16 %v61
    %v121 = vunpack.c.h.b16 %v61
    %v122 = vunpack.c.l.b16 %v62
    %v123 = vunpack.c.l.b16 %v63
    %v124 = vunpack.c.h.b16 %v63
    %v125 = vunpack.c.l.b16 %v64
    %v126 = vunpack.c.l.b16 %v65
    %v127 = vunpack.c.h.b16 %v65
    %v128 = vunpack.c.l.b16 %v66
    %v129 = vunpack.c.l.b16 %v67
    %v130 = vunpack.c.h.b16 %v67
    %v131 = vunpack.c.l.b16 %v68
    %v132 = vunpack.c.l.b16 %v69
    %v133 = vunpack.c.h.b16 %v69
    %v134 = vunpack.c.l.b16 %v70
    %v135 = vunpack.c.l.b16 %v71
    %v136 = vunpack.c.h.b16 %v71
    %v137 = vunpack.c.l.b16 %v72
    %v138 = vpack.c.b16 %v105, %v102
    %v139 = vpack.c.b16 %v106, %v103
    %v140 = vpack.c.b16 %v107, %v104
    %v141 = vpack.c.b16 %v111, %v108
    %v142 = vpack.c.b16 %v112, %v109
    %v143 = vpack.c.b16 %v113, %v110
    %v144 = vpack.c.b16 %v117, %v114
    %v145 = vpack.c.b16 %v118, %v115
    %v146 = vpack.c.b16 %v119, %v116
    %v147 = vpack.c.b16 %v123, %v120
    %v148 = vpack.c.b16 %v124, %v121
    %v149 = vpack.c.b16 %v125, %v122
    %v150 = vpack.c.b16 %v129, %v126
    %v151 = vpack.c.b16 %v130, %v127
    %v152 = vpack.c.b16 %v131, %v128
    %v153 = vpack.c.b16 %v135, %v132
    %v154 = vpack.c.b16 %v136, %v133
    %v155 = vpack.c.b16 %v137, %v134
    %vm174 = vcmask 785408
    %v176 = vsel %vm174, %v77, 0
    %178 = vmatpush.bf16.msra.mxu0 0
    %179 = vmatpush.bf16.msra.mxu0 0
    %180 = vmatpush.bf16.msra.mxu0 %v153
    %181 = vmatpush.bf16.msra.mxu0 %v150
    %182 = vmatpush.bf16.msra.mxu0 %v147
    %183 = vmatpush.bf16.msra.mxu0 %v144
    %184 = vmatpush.bf16.msra.mxu0 %v141
    %185 = vmatpush.bf16.msra.mxu0 %v138
    %186 = vmatmul.bf16.gmra.mxu0 %v176
    %v187 = vpop.f32.mrf.mxu0
    %v188 = vadd.f32 0.0, %v187
    %v189 = vpop.f32.mrf.mxu0
    %v190 = vadd.f32 0.0, %v189
    %191 = vdwg.mxu0
    %192 = vmatpush.bf16.msra.mxu0 0
    %193 = vmatpush.bf16.msra.mxu0 0
    %194 = vmatpush.bf16.msra.mxu0 %v154
    %195 = vmatpush.bf16.msra.mxu0 %v151
    %196 = vmatpush.bf16.msra.mxu0 %v148
    %197 = vmatpush.bf16.msra.mxu0 %v145
    %198 = vmatpush.bf16.msra.mxu0 %v142
    %199 = vmatpush.bf16.msra.mxu0 %v139
    %200 = vmatmul.bf16.gmra.mxu0 %v176
    %v201 = vpop.f32.mrf.mxu0
    %v202 = vadd.f32 0.0, %v201
    %v203 = vpop.f32.mrf.mxu0
    %v204 = vadd.f32 0.0, %v203
    %205 = vdwg.mxu0
    %206 = vmatpush.bf16.msra.mxu0 0
    %207 = vmatpush.bf16.msra.mxu0 0
    %208 = vmatpush.bf16.msra.mxu0 %v155
    %209 = vmatpush.bf16.msra.mxu0 %v152
    %210 = vmatpush.bf16.msra.mxu0 %v149
    %211 = vmatpush.bf16.msra.mxu0 %v146
    %212 = vmatpush.bf16.msra.mxu0 %v143
    %213 = vmatpush.bf16.msra.mxu0 %v140
    %214 = vmatmul.bf16.gmra.mxu0 %v176
    %v215 = vpop.f32.mrf.mxu0
    %v216 = vadd.f32 0.0, %v215
    %v217 = vpop.f32.mrf.mxu0
    %v218 = vadd.f32 0.0, %v217
    %219 = vdwg.mxu0
    %v220 = vadd.f32 %v41, %v188
    %v221 = vadd.f32 %v42, %v202
    %v222 = vadd.f32 %v43, %v216
    %v223 = vadd.f32 %v44, %v190
    %v224 = vadd.f32 %v45, %v204
    %v225 = vadd.f32 %v46, %v218
    %226 = vst [vmem:[#allocation2] sm:$0xff] %v220
    %227 = vst [vmem:[#allocation2 + $0x8] sm:$0xff] %v221
    %228 = vst [vmem:[#allocation2 + $0x10] sm:$0xff] %v222
    %229 = vst [vmem:[#allocation2 + $0x18] sm:$0xff] %v223
    %230 = vst [vmem:[#allocation2 + $0x20] sm:$0xff] %v224
    %231 = vst [vmem:[#allocation2 + $0x28] sm:$0xff] %v225
    // Predicated region
    $region22: #{kmer_bert_forward.16} parent=1 // pred_check
      %p232 = pneg %p31
    $region23: #{kmer_bert_forward.16} parent=1 // pred_check_branch
      %234 = sbr.rel (%p232) target = $region25
    $region24: #{kmer_bert_forward.16} parent=1 // pred_region
      %v235 = vld [vmem:[#allocation2] sm:$0xff]
      %v236 = vld [vmem:[#allocation2 + $0x8] sm:$0xff]
      %v237 = vld [vmem:[#allocation2 + $0x10] sm:$0xff]
      %v238 = vld [vmem:[#allocation2 + $0x18] sm:$0xff]
      %v239 = vld [vmem:[#allocation2 + $0x20] sm:$0xff]
      %v240 = vld [vmem:[#allocation2 + $0x28] sm:$0xff]
      %v241 = vld [vmem:[%s2] sm:$0x7]
      %v243 = vperm.slane %v241, 0
      %v244 = vperm.slane %v241, 1
      %v245 = vperm.slane %v241, 2
      %v249 = vadd.f32 %v235, %v243
      %v250 = vadd.f32 %v236, %v244
      %v251 = vadd.f32 %v237, %v245
      %v252 = vadd.f32 %v238, %v243
      %v253 = vadd.f32 %v239, %v244
      %v254 = vadd.f32 %v240, %v245
      %v255 = vmul.f32 %v249, %v249
      %v256 = vmul.f32 %v250, %v250
      %v257 = vmul.f32 %v251, %v251
      %v258 = vmul.f32 %v252, %v252
      %v259 = vmul.f32 %v253, %v253
      %v260 = vmul.f32 %v254, %v254
      %v261 = vmul.f32 %v249, %v255
      %v262 = vmul.f32 %v250, %v256
      %v263 = vmul.f32 %v251, %v257
      %v264 = vmul.f32 %v252, %v258
      %v265 = vmul.f32 %v253, %v259
      %v266 = vmul.f32 %v254, %v260
      %v267 = vmul.f32 %v261, 0.044715
      %v268 = vmul.f32 %v262, 0.044715
      %v269 = vmul.f32 %v263, 0.044715
      %v270 = vmul.f32 %v264, 0.044715
      %v271 = vmul.f32 %v265, 0.044715
      %v272 = vmul.f32 %v266, 0.044715
      %v273 = vadd.f32 %v249, %v267
      %v274 = vadd.f32 %v250, %v268
      %v275 = vadd.f32 %v251, %v269
      %v276 = vadd.f32 %v252, %v270
      %v277 = vadd.f32 %v253, %v271
      %v278 = vadd.f32 %v254, %v272
      %v279 = vmul.f32 %v273, 0.7978846
      %v280 = vmul.f32 %v274, 0.7978846
      %v281 = vmul.f32 %v275, 0.7978846
      %v282 = vmul.f32 %v276, 0.7978846
      %v283 = vmul.f32 %v277, 0.7978846
      %v284 = vmul.f32 %v278, 0.7978846
      %v285 = vtanh.pop %v279
      %v286 = vtanh.pop %v280
      %v287 = vtanh.pop %v281
      %v288 = vtanh.pop %v282
      %v289 = vtanh.pop %v283
      %v290 = vtanh.pop %v284
      %v291 = vadd.f32 %v285, 1.0
      %v292 = vadd.f32 %v286, 1.0
      %v293 = vadd.f32 %v287, 1.0
      %v294 = vadd.f32 %v288, 1.0
      %v295 = vadd.f32 %v289, 1.0
      %v296 = vadd.f32 %v290, 1.0
      %v297 = vmul.f32 %v291, 0.5
      %v298 = vmul.f32 %v292, 0.5
      %v299 = vmul.f32 %v293, 0.5
      %v300 = vmul.f32 %v294, 0.5
      %v301 = vmul.f32 %v295, 0.5
      %v302 = vmul.f32 %v296, 0.5
      %v303 = vmul.f32 %v249, %v297
      %v304 = vmul.f32 %v250, %v298
      %v305 = vmul.f32 %v251, %v299
      %v306 = vmul.f32 %v252, %v300
      %v307 = vmul.f32 %v253, %v301
      %v308 = vmul.f32 %v254, %v302
      %v309 = vpack.c.bf16 %v304, %v303
      %v310 = vpack.c.bf16 %v305, %v305
      %v311 = vpack.c.bf16 %v307, %v306
      %v312 = vpack.c.bf16 %v308, %v308
      %313 = vst [vmem:[%s3] sm:$0xff] %v309
      %314 = vst [vmem:[%s3 + $0x8] sm:$0xf] %v310
      %315 = vst [vmem:[%s3 + $0xc] sm:$0xff] %v311
      %316 = vst [vmem:[%s3 + $0x14] sm:$0xf] %v312
    $region25: #{kmer_bert_forward.16} parent=1 // pred_fallthru
      _
    // Predicated region
    $region26: #{kmer_bert_forward.16} parent=1 // pred_check
      _
    $region27: #{kmer_bert_forward.16} parent=1 // pred_check_branch
      %318 = sbr.rel (0) target = $region29
    $region28: #{kmer_bert_forward.16} parent=1 // pred_region
      _
    $region29: #{kmer_bert_forward.16} parent=1 // pred_fallthru
      _
    // Predicated region
    $region30: #{kmer_bert_forward.16} parent=1 // pred_check
      _
    $region31: #{kmer_bert_forward.16} parent=1 // pred_check_branch
      %320 = sbr.rel (0) target = $region33
    $region32: #{kmer_bert_forward.16} parent=1 // pred_region
      _
    $region33: #{kmer_bert_forward.16} parent=1 // pred_fallthru
      _
    %321 = vsyncpa [#allocation4], 1

// kernel: kmer_bert_forward.17
$region0: #{kmer_bert_forward.17}
  #allocation0 [shape = 'u32[]', space=smem, size = 0x4, offset = 0x4, fixed_abs, tag = 'smem constant byte address 0x4 - core index']
  #allocation1 [shape = 'u32[72,128]{1,0:T(1,128)}', space=vmem, size = 0x9000, scoped, tag = 'internal scratch']
  #allocation2 [shape = 'f32[16,96]{1,0:T(8,128)}', space=vmem, size = 0x2000, scoped, tag = 'scratch operand']
  %s0 = inlined_call_operand.vmem [shape: bf16[16,384], index: 0, kind: input, shape index: {}]
  %s1 = inlined_call_operand.vmem [shape: bf16[384,96], index: 1, kind: input, shape index: {}]
  %s2 = inlined_call_operand.vmem [shape: f32[1,96], index: 2, kind: input, shape index: {}]
  %s3 = inlined_call_operand.vmem [shape: bf16[16,96], index: 3, kind: input, shape index: {}]
  %s4 = inlined_call_operand.vmem [shape: f32[1,96], index: 4, kind: input, shape index: {}]
  %s5 = inlined_call_operand.vmem [shape: f32[1,96], index: 5, kind: input, shape index: {}]
  %s6 = inlined_call_operand.vmem [shape: bf16[16,96], index: 6, kind: output, shape index: {}]
  %s7 = sld [smem:[#allocation0]]
  $region42: #{kmer_bert_forward.17} parent=0
    _
  %s9 = ssub.s32 1, %s7
  %s10 = scalar_select 0, %s9, %s7
  // Predicated region
  $region2: #{kmer_bert_forward.17} parent=0 // pred_check
    _
  $region3: #{kmer_bert_forward.17} parent=0 // pred_check_branch
    %12 = sbr.rel (0) target = $region5
  $region4: #{kmer_bert_forward.17} parent=0 // pred_region
    _
  $region5: #{kmer_bert_forward.17} parent=0 // pred_fallthru
    _
  // Predicated region
  $region6: #{kmer_bert_forward.17} parent=0 // pred_check
    _
  $region7: #{kmer_bert_forward.17} parent=0 // pred_check_branch
    %14 = sbr.rel (0) target = $region9
  $region8: #{kmer_bert_forward.17} parent=0 // pred_region
    _
  $region9: #{kmer_bert_forward.17} parent=0 // pred_fallthru
    _
  // Predicated region
  $region10: #{kmer_bert_forward.17} parent=0 // pred_check
    _
  $region11: #{kmer_bert_forward.17} parent=0 // pred_check_branch
    %16 = sbr.rel (0) target = $region13
  $region12: #{kmer_bert_forward.17} parent=0 // pred_region
    _
  $region13: #{kmer_bert_forward.17} parent=0 // pred_fallthru
    _
  // Predicated region
  $region14: #{kmer_bert_forward.17} parent=0 // pred_check
    _
  $region15: #{kmer_bert_forward.17} parent=0 // pred_check_branch
    %18 = sbr.rel (0) target = $region17
  $region16: #{kmer_bert_forward.17} parent=0 // pred_region
    _
  $region17: #{kmer_bert_forward.17} parent=0 // pred_fallthru
    _
  // Predicated region
  $region18: #{kmer_bert_forward.17} parent=0 // pred_check
    _
  $region19: #{kmer_bert_forward.17} parent=0 // pred_check_branch
    %20 = sbr.rel (0) target = $region21
  $region20: #{kmer_bert_forward.17} parent=0 // pred_region
    _
  $region21: #{kmer_bert_forward.17} parent=0 // pred_fallthru
    _
  // Predicated region
  $region22: #{kmer_bert_forward.17} parent=0 // pred_check
    _
  $region23: #{kmer_bert_forward.17} parent=0 // pred_check_branch
    %22 = sbr.rel (0) target = $region25
  $region24: #{kmer_bert_forward.17} parent=0 // pred_region
    _
  $region25: #{kmer_bert_forward.17} parent=0 // pred_fallthru
    _
  %p23 = scmp.eq.s32.totalorder 0, 0
  // Predicated region
  $region26: #{kmer_bert_forward.17} parent=0 // pred_check
    %p24 = pneg %p23
  $region27: #{kmer_bert_forward.17} parent=0 // pred_check_branch
    %26 = sbr.rel (%p24) target = $region29
  $region28: #{kmer_bert_forward.17} parent=0 // pred_region
    %vm27 = vcmask 785408
    %28 = vst.msk [vmem:[#allocation2] sm:$0xff] %vm27, 0.0
    %29 = vst.msk [vmem:[#allocation2 + $0x8] sm:$0xff] %vm27, 0.0
  $region29: #{kmer_bert_forward.17} parent=0 // pred_fallthru
    _
  %v30 = vld [vmem:[#allocation2] sm:$0xff]
  %v31 = vld [vmem:[#allocation2 + $0x8] sm:$0xff]
  %v32 = vld [vmem:[%s0] sm:$0xff]
  %v33 = vld [vmem:[%s0 + $0x8] sm:$0xf]
  %v34 = vld [vmem:[%s0 + $0xc] sm:$0xff]
  %v35 = vld [vmem:[%s0 + $0x14] sm:$0xf]
  %v36 = vld [vmem:[%s1] sm:$0xf]
  %v37 = vld [vmem:[%s1 + $0x4] sm:$0xf]
  %v38 = vld [vmem:[%s1 + $0x8] sm:$0xf]
  %v39 = vld [vmem:[%s1 + $0xc] sm:$0xf]
  %v40 = vld [vmem:[%s1 + $0x10] sm:$0xf]
  %v41 = vld [vmem:[%s1 + $0x14] sm:$0xf]
  %v42 = vld [vmem:[%s1 + $0x18] sm:$0xf]
  %v43 = vld [vmem:[%s1 + $0x1c] sm:$0xf]
  %v44 = vld [vmem:[%s1 + $0x20] sm:$0xf]
  %v45 = vld [vmem:[%s1 + $0x24] sm:$0xf]
  %v46 = vld [vmem:[%s1 + $0x28] sm:$0xf]
  %v47 = vld [vmem:[%s1 + $0x2c] sm:$0xf]
  %v48 = vld [vmem:[%s1 + $0x30] sm:$0xf]
  %v49 = vld [vmem:[%s1 + $0x34] sm:$0xf]
  %v50 = vld [vmem:[%s1 + $0x38] sm:$0xf]
  %v51 = vld [vmem:[%s1 + $0x3c] sm:$0xf]
  %v52 = vld [vmem:[%s1 + $0x40] sm:$0xf]
  %v53 = vld [vmem:[%s1 + $0x44] sm:$0xf]
  %v54 = vld [vmem:[%s1 + $0x48] sm:$0xf]
  %v55 = vld [vmem:[%s1 + $0x4c] sm:$0xf]
  %v56 = vld [vmem:[%s1 + $0x50] sm:$0xf]
  %v57 = vld [vmem:[%s1 + $0x54] sm:$0xf]
  %v58 = vld [vmem:[%s1 + $0x58] sm:$0xf]
  %v59 = vld [vmem:[%s1 + $0x5c] sm:$0xf]
  %v60 = vld [vmem:[%s1 + $0x60] sm:$0xf]
  %v61 = vld [vmem:[%s1 + $0x64] sm:$0xf]
  %v62 = vld [vmem:[%s1 + $0x68] sm:$0xf]
  %v63 = vld [vmem:[%s1 + $0x6c] sm:$0xf]
  %v64 = vld [vmem:[%s1 + $0x70] sm:$0xf]
  %v65 = vld [vmem:[%s1 + $0x74] sm:$0xf]
  %v66 = vld [vmem:[%s1 + $0x78] sm:$0xf]
  %v67 = vld [vmem:[%s1 + $0x7c] sm:$0xf]
  %v68 = vld [vmem:[%s1 + $0x80] sm:$0xf]
  %v69 = vld [vmem:[%s1 + $0x84] sm:$0xf]
  %v70 = vld [vmem:[%s1 + $0x88] sm:$0xf]
  %v71 = vld [vmem:[%s1 + $0x8c] sm:$0xf]
  %v72 = vld [vmem:[%s1 + $0x90] sm:$0xf]
  %v73 = vld [vmem:[%s1 + $0x94] sm:$0xf]
  %v74 = vld [vmem:[%s1 + $0x98] sm:$0xf]
  %v75 = vld [vmem:[%s1 + $0x9c] sm:$0xf]
  %v76 = vld [vmem:[%s1 + $0xa0] sm:$0xf]
  %v77 = vld [vmem:[%s1 + $0xa4] sm:$0xf]
  %v78 = vld [vmem:[%s1 + $0xa8] sm:$0xf]
  %v79 = vld [vmem:[%s1 + $0xac] sm:$0xf]
  %v80 = vld [vmem:[%s1 + $0xb0] sm:$0xf]
  %v81 = vld [vmem:[%s1 + $0xb4] sm:$0xf]
  %v82 = vld [vmem:[%s1 + $0xb8] sm:$0xf]
  %v83 = vld [vmem:[%s1 + $0xbc] sm:$0xf]
  %v88 = vunpack.c.l.b16 %v32
  %v89 = vunpack.c.h.b16 %v32
  %v90 = vunpack.c.l.b16 %v33
  %v91 = vunpack.c.l.b16 %v34
  %v92 = vunpack.c.h.b16 %v34
  %v93 = vunpack.c.l.b16 %v35
  %v94 = vpack.c.b16 %v91, %v88
  %v95 = vpack.c.b16 %v92, %v89
  %v96 = vpack.c.b16 %v93, %v90
  %v148 = vunpack.c.l.b16 %v36
  %v149 = vunpack.c.l.b16 %v37
  %v150 = vunpack.c.l.b16 %v38
  %v151 = vunpack.c.l.b16 %v39
  %v152 = vunpack.c.l.b16 %v40
  %v153 = vunpack.c.l.b16 %v41
  %v154 = vunpack.c.l.b16 %v42
  %v155 = vunpack.c.l.b16 %v43
  %v156 = vunpack.c.l.b16 %v44
  %v157 = vunpack.c.l.b16 %v45
  %v158 = vunpack.c.l.b16 %v46
  %v159 = vunpack.c.l.b16 %v47
  %v160 = vunpack.c.l.b16 %v48
  %v161 = vunpack.c.l.b16 %v49
  %v162 = vunpack.c.l.b16 %v50
  %v163 = vunpack.c.l.b16 %v51
  %v164 = vunpack.c.l.b16 %v52
  %v165 = vunpack.c.l.b16 %v53
  %v166 = vunpack.c.l.b16 %v54
  %v167 = vunpack.c.l.b16 %v55
  %v168 = vunpack.c.l.b16 %v56
  %v169 = vunpack.c.l.b16 %v57
  %v170 = vunpack.c.l.b16 %v58
  %v171 = vunpack.c.l.b16 %v59
  %v172 = vunpack.c.l.b16 %v60
  %v173 = vunpack.c.l.b16 %v61
  %v174 = vunpack.c.l.b16 %v62
  %v175 = vunpack.c.l.b16 %v63
  %v176 = vunpack.c.l.b16 %v64
  %v177 = vunpack.c.l.b16 %v65
  %v178 = vunpack.c.l.b16 %v66
  %v179 = vunpack.c.l.b16 %v67
  %v180 = vunpack.c.l.b16 %v68
  %v181 = vunpack.c.l.b16 %v69
  %v182 = vunpack.c.l.b16 %v70
  %v183 = vunpack.c.l.b16 %v71
  %v184 = vunpack.c.l.b16 %v72
  %v185 = vunpack.c.l.b16 %v73
  %v186 = vunpack.c.l.b16 %v74
  %v187 = vunpack.c.l.b16 %v75
  %v188 = vunpack.c.l.b16 %v76
  %v189 = vunpack.c.l.b16 %v77
  %v190 = vunpack.c.l.b16 %v78
  %v191 = vunpack.c.l.b16 %v79
  %v192 = vunpack.c.l.b16 %v80
  %v193 = vunpack.c.l.b16 %v81
  %v194 = vunpack.c.l.b16 %v82
  %v195 = vunpack.c.l.b16 %v83
  %v196 = vpack.c.b16 %v149, %v148
  %v197 = vpack.c.b16 %v151, %v150
  %v198 = vpack.c.b16 %v153, %v152
  %v199 = vpack.c.b16 %v155, %v154
  %v200 = vpack.c.b16 %v157, %v156
  %v201 = vpack.c.b16 %v159, %v158
  %v202 = vpack.c.b16 %v161, %v160
  %v203 = vpack.c.b16 %v163, %v162
  %v204 = vpack.c.b16 %v165, %v164
  %v205 = vpack.c.b16 %v167, %v166
  %v206 = vpack.c.b16 %v169, %v168
  %v207 = vpack.c.b16 %v171, %v170
  %v208 = vpack.c.b16 %v173, %v172
  %v209 = vpack.c.b16 %v175, %v174
  %v210 = vpack.c.b16 %v177, %v176
  %v211 = vpack.c.b16 %v179, %v178
  %v212 = vpack.c.b16 %v181, %v180
  %v213 = vpack.c.b16 %v183, %v182
  %v214 = vpack.c.b16 %v185, %v184
  %v215 = vpack.c.b16 %v187, %v186
  %v216 = vpack.c.b16 %v189, %v188
  %v217 = vpack.c.b16 %v191, %v190
  %v218 = vpack.c.b16 %v193, %v192
  %v219 = vpack.c.b16 %v195, %v194
  %244 = vmatpush.bf16.msra.mxu0 %v203
  %245 = vmatpush.bf16.msra.mxu0 %v202
  %246 = vmatpush.bf16.msra.mxu0 %v201
  %247 = vmatpush.bf16.msra.mxu0 %v200
  %248 = vmatpush.bf16.msra.mxu0 %v199
  %249 = vmatpush.bf16.msra.mxu0 %v198
  %250 = vmatpush.bf16.msra.mxu0 %v197
  %251 = vmatpush.bf16.msra.mxu0 %v196
  %252 = vmatmul.bf16.gmra.mxu0 %v94
  %v253 = vpop.f32.mrf.mxu0
  %v254 = vadd.f32 0.0, %v253
  %v255 = vpop.f32.mrf.mxu0
  %v256 = vadd.f32 0.0, %v255
  %257 = vdwg.mxu0
  %258 = vmatpush.bf16.msra.mxu0 %v211
  %259 = vmatpush.bf16.msra.mxu0 %v210
  %260 = vmatpush.bf16.msra.mxu0 %v209
  %261 = vmatpush.bf16.msra.mxu0 %v208
  %262 = vmatpush.bf16.msra.mxu0 %v207
  %263 = vmatpush.bf16.msra.mxu0 %v206
  %264 = vmatpush.bf16.msra.mxu0 %v205
  %265 = vmatpush.bf16.msra.mxu0 %v204
  %266 = vmatmul.bf16.gmra.mxu0 %v95
  %v267 = vpop.f32.mrf.mxu0
  %v268 = vadd.f32 %v254, %v267
  %v269 = vpop.f32.mrf.mxu0
  %v270 = vadd.f32 %v256, %v269
  %271 = vdwg.mxu0
  %272 = vmatpush.bf16.msra.mxu0 %v219
  %273 = vmatpush.bf16.msra.mxu0 %v218
  %274 = vmatpush.bf16.msra.mxu0 %v217
  %275 = vmatpush.bf16.msra.mxu0 %v216
  %276 = vmatpush.bf16.msra.mxu0 %v215
  %277 = vmatpush.bf16.msra.mxu0 %v214
  %278 = vmatpush.bf16.msra.mxu0 %v213
  %279 = vmatpush.bf16.msra.mxu0 %v212
  %280 = vmatmul.bf16.gmra.mxu0 %v96
  %v281 = vpop.f32.mrf.mxu0
  %v282 = vadd.f32 %v268, %v281
  %v283 = vpop.f32.mrf.mxu0
  %v284 = vadd.f32 %v270, %v283
  %285 = vdwg.mxu0
  %v286 = vadd.f32 %v30, %v282
  %v287 = vadd.f32 %v31, %v284
  %vm288 = vcmask 785408
  %289 = vst.msk [vmem:[#allocation2] sm:$0xff] %vm288, %v286
  %290 = vst.msk [vmem:[#allocation2 + $0x8] sm:$0xff] %vm288, %v287
  // Predicated region
  $region30: #{kmer_bert_forward.17} parent=0 // pred_check
    %p291 = pneg %p23
  $region31: #{kmer_bert_forward.17} parent=0 // pred_check_branch
    %293 = sbr.rel (%p291) target = $region33
  $region32: #{kmer_bert_forward.17} parent=0 // pred_region
    %v294 = vld [vmem:[#allocation2] sm:$0xff]
    %v295 = vld [vmem:[#allocation2 + $0x8] sm:$0xff]
    %v296 = vld [vmem:[%s2] sm:$0x1]
    %v298 = vperm.slane %v296, 0
    %v300 = vadd.f32 %v294, %v298
    %v301 = vadd.f32 %v295, %v298
    %v302 = vld [vmem:[%s3] sm:$0xf]
    %v303 = vld [vmem:[%s3 + $0x4] sm:$0xf]
    %v304 = vunpack.c.l.bf16 %v302
    %v305 = vunpack.c.l.bf16 %v303
    %v306 = vadd.f32 %v300, %v304
    %v307 = vadd.f32 %v301, %v305
    %v308 = vsel %vm288, %v306, 0.0
    %309 = vadd.xlane.f32.xlu0 %v308
    %v310 = vpop.xlane.xlu0 %309
    %v311 = vsel %vm288, %v307, 0.0
    %312 = vadd.xlane.f32.xlu0 %v311
    %v313 = vpop.xlane.xlu0 %312
    %v314 = vrcp.pop 96.0
    %v315 = vmul.f32 96.0, %v314
    %v316 = vsub.f32 1.0, %v315
    %v317 = vmul.f32 %v314, %v316
    %v318 = vadd.f32 %v314, %v317
    %vm319 = vweird.f32 %v314
    %v320 = vsel %vm319, %v314, %v318
    %v321 = vmul.f32 %v310, %v320
    %v322 = vmul.f32 %v313, %v320
    %v323 = vsub.f32 %v306, %v321
    %v324 = vsub.f32 %v307, %v322
    %v325 = vmul.f32 %v323, %v323
    %v326 = vmul.f32 %v324, %v324
    %v327 = vsel %vm288, %v325, 0.0
    %328 = vadd.xlane.f32.xlu0 %v327
    %v329 = vpop.xlane.xlu0 %328
    %v330 = vsel %vm288, %v326, 0.0
    %331 = vadd.xlane.f32.xlu0 %v330
    %v332 = vpop.xlane.xlu0 %331
    %v333 = vmul.f32 %v329, %v320
    %v334 = vmul.f32 %v332, %v320
    %v335 = vadd.f32 %v333, 1e-12
    %v336 = vadd.f32 %v334, 1e-12
    %v337 = vrsqrt.pop %v335
    %v338 = vmul.f32 %v337, %v335
    %v339 = vmul.f32 %v338, %v337
    %v340 = vmul.f32 0.5, %v339
    %v341 = vsub.f32 1.5, %v340
    %v342 = vmul.f32 %v337, %v341
    %vm343 = vweird.f32 %v335
    %vm344 = vweird.f32 %v337
    %vm345 = vmor %vm343, %vm344
    %v346 = vsel %vm345, %v337, %v342
    %v347 = vrsqrt.pop %v336
    %v348 = vmul.f32 %v347, %v336
    %v349 = vmul.f32 %v348, %v347
    %v350 = vmul.f32 0.5, %v349
    %v351 = vsub.f32 1.5, %v350
    %v352 = vmul.f32 %v347, %v351
    %vm353 = vweird.f32 %v336
    %vm354 = vweird.f32 %v347
    %vm355 = vmor %vm353, %vm354
    %v356 = vsel %vm355, %v347, %v352
    %v357 = vmul.f32 %v323, %v346
    %v358 = vmul.f32 %v324, %v356
    %v359 = vld [vmem:[%s4] sm:$0x1]
    %v361 = vperm.slane %v359, 0
    %v363 = vmul.f32 %v357, %v361
    %v364 = vmul.f32 %v358, %v361
    %v365 = vld [vmem:[%s5] sm:$0x1]
    %v367 = vperm.slane %v365, 0
    %v369 = vadd.f32 %v363, %v367
    %v370 = vadd.f32 %v364, %v367
    %v371 = vpack.c.bf16 %v369, %v369
    %v372 = vpack.c.bf16 %v370, %v370
    %vm373 = vcmask 781312
    %374 = vst.msk [vmem:[%s6] sm:$0xf] %vm373, %v371
    %375 = vst.msk [vmem:[%s6 + $0x4] sm:$0xf] %vm373, %v372
  $region33: #{kmer_bert_forward.17} parent=0 // pred_fallthru
    _
  // Predicated region
  $region34: #{kmer_bert_forward.17} parent=0 // pred_check
    _
  $region35: #{kmer_bert_forward.17} parent=0 // pred_check_branch
    %377 = sbr.rel (0) target = $region37
  $region36: #{kmer_bert_forward.17} parent=0 // pred_region
    _
  $region37: #{kmer_bert_forward.17} parent=0 // pred_fallthru
    _
  // Predicated region
  $region38: #{kmer_bert_forward.17} parent=0 // pred_check
    _
  $region39: #{kmer_bert_forward.17} parent=0 // pred_check_branch
    %379 = sbr.rel (0) target = $region41
  $region40: #{kmer_bert_forward.17} parent=0 // pred_region
    _
  $region41: #{kmer_bert_forward.17} parent=0 // pred_fallthru
    _

// kernel: kmer_bert_forward.23
$region0: #{kmer_bert_forward.23}
  #allocation0 [shape = 'u32[]', space=smem, size = 0x4, offset = 0x4, fixed_abs, tag = 'smem constant byte address 0x4 - core index']
  #allocation1 [shape = 'u32[72,128]{1,0:T(1,128)}', space=vmem, size = 0x9000, scoped, tag = 'internal scratch']
  %s0 = inlined_call_operand.vmem [shape: bf16[2,96], index: 0, kind: input, shape index: {}]
  %s1 = inlined_call_operand.vmem [shape: bf16[96,96], index: 1, kind: input, shape index: {}]
  %s2 = inlined_call_operand.vmem [shape: f32[1,96], index: 2, kind: input, shape index: {}]
  %s3 = inlined_call_operand.vmem [shape: bf16[96,2], index: 3, kind: input, shape index: {}]
  %s4 = inlined_call_operand.vmem [shape: f32[1,2], index: 4, kind: input, shape index: {}]
  %s5 = inlined_call_operand.hbm [shape: f32[2,2], index: 5, kind: output, shape index: {}]
  %s6 = sld [smem:[#allocation0]]
  $region30: #{kmer_bert_forward.23} parent=0
    _
  %s8 = ssub.s32 1, %s6
  %s9 = scalar_select 0, %s8, %s6
  $region1: #{kmer_bert_forward.23} parent=0
    #allocation2 [shape = 'u8[1024]{0}', space=vmem, size = 0x400, scoped, tag = 'output window, operand 0, single buffered']
    #allocation3 [shape = 's32[1]{0}', space=sflag, size = 0x4, scoped, tag = 'scoped memory for kmer_bert_forward.23']
    %10 = vsyncpa [#allocation3], 0
    // Predicated region
    $region2: #{kmer_bert_forward.23} parent=1 // pred_check
      _
    $region3: #{kmer_bert_forward.23} parent=1 // pred_check_branch
      %12 = sbr.rel (0) target = $region5
    $region4: #{kmer_bert_forward.23} parent=1 // pred_region
      _
    $region5: #{kmer_bert_forward.23} parent=1 // pred_fallthru
      _
    // Predicated region
    $region6: #{kmer_bert_forward.23} parent=1 // pred_check
      _
    $region7: #{kmer_bert_forward.23} parent=1 // pred_check_branch
      %14 = sbr.rel (0) target = $region9
    $region8: #{kmer_bert_forward.23} parent=1 // pred_region
      _
    $region9: #{kmer_bert_forward.23} parent=1 // pred_fallthru
      _
    // Predicated region
    $region10: #{kmer_bert_forward.23} parent=1 // pred_check
      _
    $region11: #{kmer_bert_forward.23} parent=1 // pred_check_branch
      %16 = sbr.rel (0) target = $region13
    $region12: #{kmer_bert_forward.23} parent=1 // pred_region
      _
    $region13: #{kmer_bert_forward.23} parent=1 // pred_fallthru
      _
    // Predicated region
    $region14: #{kmer_bert_forward.23} parent=1 // pred_check
      _
    $region15: #{kmer_bert_forward.23} parent=1 // pred_check_branch
      %18 = sbr.rel (0) target = $region17
    $region16: #{kmer_bert_forward.23} parent=1 // pred_region
      _
    $region17: #{kmer_bert_forward.23} parent=1 // pred_fallthru
      _
    // Predicated region
    $region18: #{kmer_bert_forward.23} parent=1 // pred_check
      _
    $region19: #{kmer_bert_forward.23} parent=1 // pred_check_branch
      %20 = sbr.rel (0) target = $region21
    $region20: #{kmer_bert_forward.23} parent=1 // pred_region
      _
    $region21: #{kmer_bert_forward.23} parent=1 // pred_fallthru
      _
    %v22 = vld [vmem:[%s0] sm:$0x1]
    %v23 = vld [vmem:[%s1] sm:$0xf]
    %v24 = vld [vmem:[%s1 + $0x4] sm:$0xf]
    %v25 = vld [vmem:[%s1 + $0x8] sm:$0xf]
    %v26 = vld [vmem:[%s1 + $0xc] sm:$0xf]
    %v27 = vld [vmem:[%s1 + $0x10] sm:$0xf]
    %v28 = vld [vmem:[%s1 + $0x14] sm:$0xf]
    %v29 = vld [vmem:[%s1 + $0x18] sm:$0xf]
    %v30 = vld [vmem:[%s1 + $0x1c] sm:$0xf]
    %v31 = vld [vmem:[%s1 + $0x20] sm:$0xf]
    %v32 = vld [vmem:[%s1 + $0x24] sm:$0xf]
    %v33 = vld [vmem:[%s1 + $0x28] sm:$0xf]
    %v34 = vld [vmem:[%s1 + $0x2c] sm:$0xf]
    %v35 = vld [vmem:[%s2] sm:$0x1]
    %v37 = vperm.slane %v35, 0
    %v51 = vunpack.c.l.b16 %v23
    %v52 = vunpack.c.l.b16 %v24
    %v53 = vunpack.c.l.b16 %v25
    %v54 = vunpack.c.l.b16 %v26
    %v55 = vunpack.c.l.b16 %v27
    %v56 = vunpack.c.l.b16 %v28
    %v57 = vunpack.c.l.b16 %v29
    %v58 = vunpack.c.l.b16 %v30
    %v59 = vunpack.c.l.b16 %v31
    %v60 = vunpack.c.l.b16 %v32
    %v61 = vunpack.c.l.b16 %v33
    %v62 = vunpack.c.l.b16 %v34
    %v63 = vpack.c.b16 %v52, %v51
    %v64 = vpack.c.b16 %v54, %v53
    %v65 = vpack.c.b16 %v56, %v55
    %v66 = vpack.c.b16 %v58, %v57
    %v67 = vpack.c.b16 %v60, %v59
    %v68 = vpack.c.b16 %v62, %v61
    %vm75 = vcmask 785408
    %v77 = vsel %vm75, %v22, 0
    %79 = vmatpush.bf16.msra.mxu0 0
    %80 = vmatpush.bf16.msra.mxu0 0
    %81 = vmatpush.bf16.msra.mxu0 %v68
    %82 = vmatpush.bf16.msra.mxu0 %v67
    %83 = vmatpush.bf16.msra.mxu0 %v66
    %84 = vmatpush.bf16.msra.mxu0 %v65
    %85 = vmatpush.bf16.msra.mxu0 %v64
    %86 = vmatpush.bf16.msra.mxu0 %v63
    %87 = vmatmul.bf16.gmra.mxu0 %v77
    %v88 = vpop.f32.mrf.mxu0
    %v89 = vadd.f32 %v37, %v88
    %v90 = vpop.f32.mrf.mxu0
    %91 = vdwg.mxu0
    %v92 = vtanh.pop %v89
    %v93 = vpack.c.bf16 %v92, %v92
    %v94 = vld [vmem:[%s3] sm:$0xf]
    %v95 = vld [vmem:[%s3 + $0x4] sm:$0xf]
    %v96 = vld [vmem:[%s3 + $0x8] sm:$0xf]
    %v97 = vld [vmem:[%s3 + $0xc] sm:$0xf]
    %v98 = vld [vmem:[%s3 + $0x10] sm:$0xf]
    %v99 = vld [vmem:[%s3 + $0x14] sm:$0xf]
    %v100 = vld [vmem:[%s3 + $0x18] sm:$0xf]
    %v101 = vld [vmem:[%s3 + $0x1c] sm:$0xf]
    %v102 = vld [vmem:[%s3 + $0x20] sm:$0xf]
    %v103 = vld [vmem:[%s3 + $0x24] sm:$0xf]
    %v104 = vld [vmem:[%s3 + $0x28] sm:$0xf]
    %v105 = vld [vmem:[%s3 + $0x2c] sm:$0xf]
    %v106 = vld [vmem:[%s4] sm:$0x1]
    %v108 = vperm.slane %v106, 0
    %v122 = vunpack.c.l.b16 %v94
    %v123 = vunpack.c.l.b16 %v95
    %v124 = vunpack.c.l.b16 %v96
    %v125 = vunpack.c.l.b16 %v97
    %v126 = vunpack.c.l.b16 %v98
    %v127 = vunpack.c.l.b16 %v99
    %v128 = vunpack.c.l.b16 %v100
    %v129 = vunpack.c.l.b16 %v101
    %v130 = vunpack.c.l.b16 %v102
    %v131 = vunpack.c.l.b16 %v103
    %v132 = vunpack.c.l.b16 %v104
    %v133 = vunpack.c.l.b16 %v105
    %v134 = vpack.c.b16 %v123, %v122
    %v135 = vpack.c.b16 %v125, %v124
    %v136 = vpack.c.b16 %v127, %v126
    %v137 = vpack.c.b16 %v129, %v128
    %v138 = vpack.c.b16 %v131, %v130
    %v139 = vpack.c.b16 %v133, %v132
    %v147 = vsel %vm75, %v93, 0
    %149 = vmatpush.bf16.msra.mxu0 0
    %150 = vmatpush.bf16.msra.mxu0 0
    %151 = vmatpush.bf16.msra.mxu0 %v139
    %152 = vmatpush.bf16.msra.mxu0 %v138
    %153 = vmatpush.bf16.msra.mxu0 %v137
    %154 = vmatpush.bf16.msra.mxu0 %v136
    %155 = vmatpush.bf16.msra.mxu0 %v135
    %156 = vmatpush.bf16.msra.mxu0 %v134
    %157 = vmatmul.bf16.gmra.mxu0 %v147
    %v158 = vpop.f32.mrf.mxu0
    %v159 = vadd.f32 %v108, %v158
    %v160 = vpop.f32.mrf.mxu0
    %161 = vdwg.mxu0
    %vm162 = vcmask 9216
    %163 = vst.msk [vmem:[#allocation2] sm:$0x3] %vm162, %v159
    // Predicated region
    $region22: #{kmer_bert_forward.23} parent=1 // pred_check
      _
    $region23: #{kmer_bert_forward.23} parent=1 // pred_check_branch
      %165 = sbr.rel (0) target = $region25
    $region24: #{kmer_bert_forward.23} parent=1 // pred_region
      %167 = vsyncadd [#allocation3], 0
      %s169 = sshll.u32 [#allocation2], 4
      %s170 = int_to_ptr.vmem [resolvable:$true] %s169
      %s171 = sshll.u32 %s5, 4
      %s172 = int_to_ptr.hbm [resolvable:$true] %s171
      %174 = dma.vmem_to_hbm [thread:$0]  %s170, 32, %s172, [#allocation3]
    $region25: #{kmer_bert_forward.23} parent=1 // pred_fallthru
      _
    // Predicated region
    $region26: #{kmer_bert_forward.23} parent=1 // pred_check
      _
    $region27: #{kmer_bert_forward.23} parent=1 // pred_check_branch
      %176 = sbr.rel (0) target = $region29
    $region28: #{kmer_bert_forward.23} parent=1 // pred_region
      %178 = dma.done [#allocation3], 32
    $region29: #{kmer_bert_forward.23} parent=1 // pred_fallthru
      _
    %179 = vsyncpa [#allocation3], 1

</llo_original>
